<compile_context>
chip_gen: v7x
topology: tpu7x:2x2x1
jax: 0.10.0
libtpu: 0.0.40
codegen_flags: <defaults>
</compile_context>

<pallas_src>
import functools

import jax
import jax.numpy as jnp
from jax.experimental import pallas as pl
from jax.experimental.pallas import tpu as pltpu


# ----------------------------------------------------------------------------
# small helpers
# ----------------------------------------------------------------------------
def _round_up(n, m):
    return ((n + m - 1) // m) * m


def _pick_time_tile(T, b_pad, max_rows=256):
    """Timesteps per kernel-1 tile: rows per tile = tT * b_pad <= max_rows,
    prefer >= 4 grid steps (pipelining / megacore)."""
    divs = [d for d in range(1, T + 1) if T % d == 0 and d * b_pad <= max_rows]
    if not divs:
        return 1
    multi = [d for d in divs if T // d >= 4]
    return max(multi) if multi else max(divs)


def _pick_batch_tile(b_pad):
    """Batch tile for the decoder: multiple of 16 (bf16 sublane pack, wider MXU
    rows); prefer >= 2 tiles so the 'parallel' axis can shard across cores."""
    for cand in (64, 48, 32, 16):
        if b_pad % cand == 0 and b_pad // cand >= 2:
            return cand
    return b_pad


def _pick_time_chunk(T, tB, D, DP, NYP, budget_bytes=20 * 1024 * 1024):
    """Timesteps per decoder chunk: bound VMEM (v7x has only 64 MiB)."""
    per_t = tB * (2 * 2 * D        # adapted block bf16, double-buffered
                  + 2 * 4 * NYP    # out block f32, double-buffered
                  + 4 * 4 * DP     # xp scratch f32 (4*DP gates)
                  + 4 * DP)        # hidden-state scratch f32
    cap = max(1, budget_bytes // max(per_t, 1))
    cap = min(cap, 64, max(T // 2, 1))
    best = 1
    for d in range(1, T + 1):
        if T % d == 0 and d <= cap:
            best = d
    return best


def _pad_gate_blocks(w, d, d_pad):
    """[..., 4*d] (PyTorch gate order i|f|g|o) -> [..., 4*d_pad], zero pad per gate."""
    if d_pad == d:
        return w
    lead = w.shape[:-1]
    wg = w.reshape(lead + (4, d))
    wg = jnp.pad(wg, [(0, 0)] * (len(lead) + 1) + [(0, d_pad - d)])
    return wg.reshape(lead + (4 * d_pad,))


# ----------------------------------------------------------------------------
# Kernel 1: embed + PE + LayerNorm + enc_2_dec + GatedAdapter  -> adapted (bf16)
# ----------------------------------------------------------------------------
def _encode_adapt_kernel(x_ref, pe_ref, wx_ref, bx_ref, lng_ref, lnb_ref,
                         we2d_ref, be2d_ref, wh_ref, out_ref):
    tT, Bp, F = x_ref.shape
    D = we2d_ref.shape[0]
    R = tT * Bp

    xf = x_ref[...].reshape(R, F)                                  # f32 rows (t, b)

    # positional encoding: one (tT, 1, D) block broadcast across the Bp rows of
    # each timestep (no [T*B, D] HBM stream).
    pe2d = jnp.broadcast_to(pe_ref[...], (tT, Bp, D)).reshape(R, D)

    # fused x-LHS matmul: [W_ts_emb | W_gate_x | W_trans_x], bias [b_ts|b_g|b_t]
    xcat = (jnp.dot(xf.astype(jnp.bfloat16), wx_ref[...],
                    preferred_element_type=jnp.float32) + bx_ref[...])

    # time-series embedding + PE (TODO(synk): MFFormer embedding stand-in)
    emb = xcat[:, 0:D] + pe2d

    # encoder: identity stand-in (TODO(synk): MFFormer transformer encoder)
    # encoder_norm: LayerNorm(d_model), eps=1e-5, biased variance (f32 math)
    mu = jnp.mean(emb, axis=-1, keepdims=True)
    var = jnp.mean(jnp.square(emb - mu), axis=-1, keepdims=True)
    hn = (emb - mu) * jax.lax.rsqrt(var + 1e-5) * lng_ref[...] + lnb_ref[...]

    # enc_2_dec_embedding
    h = (jnp.dot(hn.astype(jnp.bfloat16), we2d_ref[...],
                 preferred_element_type=jnp.float32) + be2d_ref[...])

    # GatedAdapter: h + sigmoid([h,x]Wg + bg) * ([h,x]Wt + bt)
    # concat weights pre-split into h-/x- halves and fused: h @ [W_g_h | W_t_h]
    hcat = jnp.dot(h.astype(jnp.bfloat16), wh_ref[...],
                   preferred_element_type=jnp.float32)
    gate = jax.nn.sigmoid(hcat[:, 0:D] + xcat[:, D:2 * D])
    trans = hcat[:, D:2 * D] + xcat[:, 2 * D:3 * D]
    adapted = h + gate * trans                                     # f32

    out_ref[...] = adapted.astype(jnp.bfloat16).reshape(tT, Bp, D)


def encode_adapt(x_tbf, pe_t, wx_cat, bx_cat, lng, lnb, we2d, be2d, wh_cat):
    """x_tbf: [T, B_pad, F] f32 (time-major). Returns adapted [T, B_pad, D] bf16."""
    T, Bp, F = x_tbf.shape
    D = we2d.shape[0]
    tT = _pick_time_tile(T, Bp)
    c2 = lambda i: (0, 0)
    return pl.pallas_call(
        _encode_adapt_kernel,
        out_shape=jax.ShapeDtypeStruct((T, Bp, D), jnp.bfloat16),
        grid=(T // tT,),
        in_specs=[
            pl.BlockSpec((tT, Bp, F), lambda i: (i, 0, 0)),
            pl.BlockSpec((tT, 1, D), lambda i: (i, 0, 0)),
            pl.BlockSpec((F, 3 * D), c2),
            pl.BlockSpec((1, 3 * D), c2),
            pl.BlockSpec((1, D), c2),
            pl.BlockSpec((1, D), c2),
            pl.BlockSpec((D, D), c2),
            pl.BlockSpec((1, D), c2),
            pl.BlockSpec((D, 2 * D), c2),
        ],
        out_specs=pl.BlockSpec((tT, Bp, D), lambda i: (i, 0, 0)),
        compiler_params=pltpu.CompilerParams(
            dimension_semantics=("parallel",),
            vmem_limit_bytes=32 * 1024 * 1024),
    )(x_tbf, pe_t, wx_cat, bx_cat, lng, lnb, we2d, be2d, wh_cat)


# ----------------------------------------------------------------------------
# Kernel 2: LSTM decoder (batch-tiled, time-chunked) + lane-dense projection
# ----------------------------------------------------------------------------
def _lstm_decode_project_kernel(a_ref, wih_ref, whh_ref, b_ref, wp_ref, bp_ref,
                                out_ref, h_scr, c_scr, xp_scr, hall_scr):
    TC, tB, D = a_ref.shape
    G = wih_ref.shape[1]
    DP = G // 4
    NYP = wp_ref.shape[1]

    # new batch tile -> reset recurrent state
    @pl.when(pl.program_id(1) == 0)
    def _():
        h_scr[...] = jnp.zeros_like(h_scr)
        c_scr[...] = jnp.zeros_like(c_scr)

    # input-to-hidden projection for the whole time chunk, hoisted off the
    # serial critical path (tB multiple of 16 -> bf16 reshape is layout-free).
    xc = a_ref[...].reshape(TC * tB, D)
    xp_scr[...] = (jnp.dot(xc, wih_ref[...],
                           preferred_element_type=jnp.float32) + b_ref[...])

    whh = whh_ref[...]

    def _step(t, carry):
        h = h_scr[...]
        c = c_scr[...]
        r0 = pl.multiple_of(t * tB, tB)
        # recurrence only carries h @ W_hh (bf16 MXU, f32 accumulate)
        gates = (xp_scr[pl.ds(r0, tB), :]
                 + jnp.dot(h.astype(jnp.bfloat16), whh,
                           preferred_element_type=jnp.float32))
        # PyTorch gate order i|f|g|o; each block padded to DP (x128) lanes, so
        # slices are lane-tile aligned.  Padded lanes stay exactly zero.
        i_g = jax.nn.sigmoid(gates[:, 0 * DP:1 * DP])
        f_g = jax.nn.sigmoid(gates[:, 1 * DP:2 * DP])
        g_g = jnp.tanh(gates[:, 2 * DP:3 * DP])
        o_g = jax.nn.sigmoid(gates[:, 3 * DP:4 * DP])
        c_new = f_g * c + i_g * g_g
        h_new = o_g * jnp.tanh(c_new)
        h_scr[...] = h_new
        c_scr[...] = c_new
        hall_scr[pl.ds(r0, tB), :] = h_new
        return carry

    jax.lax.fori_loop(0, TC, _step, 0, unroll=(TC <= 16))

    # one lane-dense output projection per chunk (NYP multiple of 128)
    proj = (jnp.dot(hall_scr[...].astype(jnp.bfloat16), wp_ref[...],
                    preferred_element_type=jnp.float32) + bp_ref[...])
    out_ref[...] = proj.reshape(TC, tB, NYP)


def lstm_decode_project(adapted, wih_p, whh_p, b_p, wp_p, bp_p):
    """adapted: [T, B_pad, D] bf16.  Returns [T, B_pad, NY_pad] f32."""
    T, Bp, D = adapted.shape
    G = wih_p.shape[1]
    DP = G // 4
    NYP = wp_p.shape[1]
    tB = _pick_batch_tile(Bp)
    TC = _pick_time_chunk(T, tB, D, DP, NYP)
    c2 = lambda b, t: (0, 0)
    return pl.pallas_call(
        _lstm_decode_project_kernel,
        out_shape=jax.ShapeDtypeStruct((T, Bp, NYP), jnp.float32),
        grid=(Bp // tB, T // TC),          # time chunks iterate innermost
        in_specs=[
            pl.BlockSpec((TC, tB, D), lambda b, t: (t, b, 0)),
            pl.BlockSpec((D, G), c2),
            pl.BlockSpec((DP, G), c2),
            pl.BlockSpec((1, G), c2),
            pl.BlockSpec((DP, NYP), c2),
            pl.BlockSpec((1, NYP), c2),
        ],
        out_specs=pl.BlockSpec((TC, tB, NYP), lambda b, t: (t, b, 0)),
        scratch_shapes=[
            pltpu.VMEM((tB, DP), jnp.float32),           # h
            pltpu.VMEM((tB, DP), jnp.float32),           # c
            pltpu.VMEM((TC * tB, G), jnp.float32),       # x @ W_ih + b (chunk)
            pltpu.VMEM((TC * tB, DP), jnp.float32),      # hidden states (chunk)
        ],
        compiler_params=pltpu.CompilerParams(
            dimension_semantics=("parallel", "arbitrary"),
            vmem_limit_bytes=32 * 1024 * 1024),
    )(adapted, wih_p, whh_p, b_p, wp_p, bp_p)


# ----------------------------------------------------------------------------
# Glue (plain JAX): NaN median fill, positional encoding
# ----------------------------------------------------------------------------
def torch_nanmedian(a):
    """torch.nanmedian over the whole tensor: lower-middle of non-NaN values;
    0.0 if everything is NaN (matching the module's fallback).  Global sort has
    no clean Pallas equivalent; kept in plain JAX (negligible)."""
    flat = a.reshape(-1)
    isn = jnp.isnan(flat)
    n_valid = jnp.sum(~isn)
    sorted_vals = jnp.sort(jnp.where(isn, jnp.inf, flat))
    idx = jnp.maximum((n_valid - 1) // 2, 0)
    med = sorted_vals[idx]
    return jnp.where(n_valid == 0, jnp.float32(0.0), med)


def sinusoidal_pe(length, d_model):
    pos = jnp.arange(length, dtype=jnp.float32)[:, None]
    i = jnp.arange(d_model // 2, dtype=jnp.float32)[None, :]
    angle = pos / jnp.power(10000.0, 2.0 * i / d_model)
    pe = jnp.zeros((length, d_model), jnp.float32)
    pe = pe.at[:, 0::2].set(jnp.sin(angle))
    pe = pe.at[:, 1::2].set(jnp.cos(angle))
    return pe


# ----------------------------------------------------------------------------
# Forward
# ----------------------------------------------------------------------------
def finetuner_forward(params, xc_nn_norm, n_time_series):
    B, T, _ = xc_nn_norm.shape
    D = params["e2d_w"].shape[0]
    NY = params["proj_w"].shape[1]
    DP = _round_up(D, 128)          # lane-padded LSTM hidden
    NYP = _round_up(NY, 128)        # lane-padded projection output
    B_pad = _round_up(B, 16)        # bf16 sublane pack + wider MXU rows

    # split forcings / static attributes (static taken at time index 0)
    batch_x = xc_nn_norm[..., :n_time_series]                      # [B, T, F]
    batch_c = xc_nn_norm[..., n_time_series:][:, 0, :]             # [B, S]

    # NaN handling: masked_fill with global nanmedian
    x_mask = jnp.isnan(batch_x)
    c_mask = jnp.isnan(batch_c)
    batch_x = jnp.where(x_mask, torch_nanmedian(batch_x), batch_x)
    batch_c = jnp.where(c_mask, torch_nanmedian(batch_c), batch_c)

    pe = sinusoidal_pe(T + 1, D)

    # Static-embedding token (appended as token T in the original model).
    # TODO(synk): with the identity-encoder stand-in it never mixes into the
    # time tokens and is dropped by hidden[:, :T] (as in the PyTorch module),
    # so it is computed for parity only and not fed into the kernels.
    _enc_c = batch_c @ params["st_emb_w"] + params["st_emb_b"] + pe[T]

    # --- kernel-1 fused weights (concat halves fused along lanes, bf16 GEMMs)
    gate_w_h, gate_w_x = params["gate_w"][:D], params["gate_w"][D:]
    trans_w_h, trans_w_x = params["trans_w"][:D], params["trans_w"][D:]
    wx_cat = jnp.concatenate(
        [params["ts_emb_w"], gate_w_x, trans_w_x], axis=1).astype(jnp.bfloat16)
    bx_cat = jnp.concatenate(
        [params["ts_emb_b"], params["gate_b"], params["trans_b"]]).reshape(1, 3 * D)
    wh_cat = jnp.concatenate([gate_w_h, trans_w_h], axis=1).astype(jnp.bfloat16)
    we2d = params["e2d_w"].astype(jnp.bfloat16)
    be2d = params["e2d_b"].reshape(1, D)
    lng = params["ln_g"].reshape(1, D)
    lnb = params["ln_b"].reshape(1, D)

    # time-major input, batch padded with zeros (padded rows sliced off below)
    x_tbf = jnp.transpose(batch_x, (1, 0, 2))                      # [T, B, F]
    x_tbf = jnp.pad(x_tbf, ((0, 0), (0, B_pad - B), (0, 0)))       # [T, B_pad, F]
    pe_t = pe[:T].reshape(T, 1, D)

    adapted = encode_adapt(x_tbf, pe_t, wx_cat, bx_cat, lng, lnb,
                           we2d, be2d, wh_cat)                     # [T, B_pad, D] bf16

    # --- LSTM / projection weights, lane-padded gate blocks, bf16 GEMM weights
    # (in production these would be padded/cast once at parameter-load time)
    wih_p = _pad_gate_blocks(params["lstm_wih"], D, DP).astype(jnp.bfloat16)
    whh_p = jnp.pad(_pad_gate_blocks(params["lstm_whh"], D, DP),
                    ((0, DP - D), (0, 0))).astype(jnp.bfloat16)    # [DP, 4*DP]
    b_p = _pad_gate_blocks(params["lstm_b"].reshape(1, -1), D, DP) # [1, 4*DP] f32
    wp_p = jnp.pad(params["proj_w"],
                   ((0, DP - D), (0, NYP - NY))).astype(jnp.bfloat16)
    bp_p = jnp.pad(params["proj_b"], (0, NYP - NY)).reshape(1, NYP)

    out = lstm_decode_project(adapted, wih_p, whh_p, b_p, wp_p, bp_p)
    # already time-major == outputs.permute(1, 0, 2); drop batch / lane padding
    return out[:, :B, :NY]


# ----------------------------------------------------------------------------
# Deterministic parameter construction (PyTorch-layout-compatible)
# ----------------------------------------------------------------------------
def make_params(key, d_model, n_ts, n_static, ny):
    keys = jax.random.split(key, 16)
    s = 0.1

    def rnd(k, shape):
        return s * jax.random.normal(k, shape, jnp.float32)

    return {
        "ts_emb_w": rnd(keys[0], (n_ts, d_model)),
        "ts_emb_b": rnd(keys[1], (d_model,)),
        "st_emb_w": rnd(keys[2], (n_static, d_model)),
        "st_emb_b": rnd(keys[3], (d_model,)),
        "ln_g": jnp.ones((d_model,), jnp.float32),
        "ln_b": jnp.zeros((d_model,), jnp.float32),
        "e2d_w": rnd(keys[4], (d_model, d_model)),
        "e2d_b": rnd(keys[5], (d_model,)),
        "gate_w": rnd(keys[6], (d_model + n_ts, d_model)),
        "gate_b": rnd(keys[7], (d_model,)),
        "trans_w": rnd(keys[8], (d_model + n_ts, d_model)),
        "trans_b": rnd(keys[9], (d_model,)),
        "lstm_wih": rnd(keys[10], (d_model, 4 * d_model)),
        "lstm_whh": rnd(keys[11], (d_model, 4 * d_model)),
        "lstm_b": rnd(keys[12], (4 * d_model,)),   # b_ih + b_hh combined
        "proj_w": rnd(keys[13], (d_model, ny)),
        "proj_b": rnd(keys[14], (ny,)),
    }


if __name__ == "__main__":
    B, T, N_TS, N_STATIC, D_MODEL, NY = 2, 8, 4, 3, 32, 2

    key = jax.random.PRNGKey(0)
    k_data, k_param = jax.random.split(key)

    xc_nn_norm = jax.random.normal(k_data, (B, T, N_TS + N_STATIC), jnp.float32)
    # inject NaNs to exercise the nanmedian / masked_fill path
    xc_nn_norm = xc_nn_norm.at[0, 1, 0].set(jnp.nan)
    xc_nn_norm = xc_nn_norm.at[1, 3, N_TS + 1].set(jnp.nan)

    params = make_params(k_param, D_MODEL, N_TS, N_STATIC, NY)

    fwd = jax.jit(functools.partial(finetuner_forward, n_time_series=N_TS))
    out = fwd(params, xc_nn_norm)
    out = jax.block_until_ready(out)

    assert out.shape == (T, B, NY), out.shape
    assert not bool(jnp.any(jnp.isnan(out)))
    print("KERNEL_OK")
</pallas_src>

<mosaic_0001>
module attributes {stable_mosaic.version = 11 : i64} {
  func.func @_encode_adapt_kernel(%arg0: i32, %arg1: memref<2x16x4xf32, #tpu.memory_space<vmem>>, %arg2: memref<2x1x32xf32, #tpu.memory_space<vmem>>, %arg3: memref<4x96xbf16, #tpu.memory_space<vmem>>, %arg4: memref<1x96xf32, #tpu.memory_space<vmem>>, %arg5: memref<1x32xf32, #tpu.memory_space<vmem>>, %arg6: memref<1x32xf32, #tpu.memory_space<vmem>>, %arg7: memref<32x32xbf16, #tpu.memory_space<vmem>>, %arg8: memref<1x32xf32, #tpu.memory_space<vmem>>, %arg9: memref<32x64xbf16, #tpu.memory_space<vmem>>, %arg10: memref<2x16x32xbf16, #tpu.memory_space<vmem>>) attributes {dimension_semantics = [#tpu.dimension_semantics<parallel>], iteration_bounds = array<i64: 4>, scalar_prefetch = 0 : i64, scratch_operands = 0 : i64, tpu.core_type = #tpu.core_type<tc>, window_params = [{transform_indices = @transform_0, window_bounds = array<i64: 2, 16, 4>}, {transform_indices = @transform_1, window_bounds = array<i64: 2, 1, 32>}, {pipeline_mode = #tpu.pipeline_mode<synchronous>, transform_indices = @transform_2, window_bounds = array<i64: 4, 96>}, {pipeline_mode = #tpu.pipeline_mode<synchronous>, transform_indices = @transform_3, window_bounds = array<i64: 1, 96>}, {pipeline_mode = #tpu.pipeline_mode<synchronous>, transform_indices = @transform_4, window_bounds = array<i64: 1, 32>}, {pipeline_mode = #tpu.pipeline_mode<synchronous>, transform_indices = @transform_5, window_bounds = array<i64: 1, 32>}, {pipeline_mode = #tpu.pipeline_mode<synchronous>, transform_indices = @transform_6, window_bounds = array<i64: 32, 32>}, {pipeline_mode = #tpu.pipeline_mode<synchronous>, transform_indices = @transform_7, window_bounds = array<i64: 1, 32>}, {pipeline_mode = #tpu.pipeline_mode<synchronous>, transform_indices = @transform_8, window_bounds = array<i64: 32, 64>}, {transform_indices = @transform_9, window_bounds = array<i64: 2, 16, 32>}]} {
    %c0 = arith.constant 0 : index
    %c0_0 = arith.constant 0 : index
    %c0_1 = arith.constant 0 : index
    %0 = vector.load %arg1[%c0, %c0_0, %c0_1] : memref<2x16x4xf32, #tpu.memory_space<vmem>>, vector<2x16x4xf32>
    %1 = vector.shape_cast %0 : vector<2x16x4xf32> to vector<32x4xf32>
    %c0_2 = arith.constant 0 : index
    %c0_3 = arith.constant 0 : index
    %c0_4 = arith.constant 0 : index
    %2 = vector.load %arg2[%c0_2, %c0_3, %c0_4] : memref<2x1x32xf32, #tpu.memory_space<vmem>>, vector<2x1x32xf32>
    %3 = vector.shape_cast %2 : vector<2x1x32xf32> to vector<2x1x32xf32>
    %4 = vector.broadcast %3 : vector<2x1x32xf32> to vector<2x16x32xf32>
    %5 = vector.shape_cast %4 : vector<2x16x32xf32> to vector<32x32xf32>
    %6 = arith.truncf %1 : vector<32x4xf32> to vector<32x4xbf16>
    %c0_5 = arith.constant 0 : index
    %c0_6 = arith.constant 0 : index
    %7 = vector.load %arg3[%c0_5, %c0_6] : memref<4x96xbf16, #tpu.memory_space<vmem>>, vector<4x96xbf16>
    %cst = arith.constant dense<0.000000e+00> : vector<32x96xf32>
    %8 = tpu.matmul %6, %7, %cst {dimension_numbers = #tpu.dot_dimension_numbers<[1], [0], [0], [1], [0, 0, 1, 1], [], []>} : vector<32x4xbf16>, vector<4x96xbf16>, vector<32x96xf32> -> vector<32x96xf32>
    %c0_7 = arith.constant 0 : index
    %c0_8 = arith.constant 0 : index
    %9 = vector.load %arg4[%c0_7, %c0_8] : memref<1x96xf32, #tpu.memory_space<vmem>>, vector<1x96xf32>
    %10 = vector.broadcast %9 : vector<1x96xf32> to vector<32x96xf32>
    %11 = arith.addf %8, %10 : vector<32x96xf32>
    %12 = vector.extract_strided_slice %11 {offsets = [0, 0], sizes = [32, 32], strides = [1, 1]} : vector<32x96xf32> to vector<32x32xf32>
    %13 = arith.addf %12, %5 : vector<32x32xf32>
    %cst_9 = arith.constant dense<0.000000e+00> : vector<32xf32>
    %14 = vector.multi_reduction <add>, %13, %cst_9 [1] : vector<32x32xf32> to vector<32xf32>
    %15 = vector.shape_cast %14 : vector<32xf32> to vector<32x1xf32>
    %cst_10 = arith.constant 3.200000e+01 : f32
    %16 = vector.broadcast %cst_10 : f32 to vector<32x1xf32>
    %17 = arith.divf %15, %16 : vector<32x1xf32>
    %18 = vector.broadcast %17 : vector<32x1xf32> to vector<32x32xf32>
    %19 = arith.subf %13, %18 : vector<32x32xf32>
    %20 = arith.mulf %19, %19 : vector<32x32xf32>
    %cst_11 = arith.constant dense<0.000000e+00> : vector<32xf32>
    %21 = vector.multi_reduction <add>, %20, %cst_11 [1] : vector<32x32xf32> to vector<32xf32>
    %22 = vector.shape_cast %21 : vector<32xf32> to vector<32x1xf32>
    %cst_12 = arith.constant 3.200000e+01 : f32
    %23 = vector.broadcast %cst_12 : f32 to vector<32x1xf32>
    %24 = arith.divf %22, %23 : vector<32x1xf32>
    %25 = vector.broadcast %17 : vector<32x1xf32> to vector<32x32xf32>
    %26 = arith.subf %13, %25 : vector<32x32xf32>
    %cst_13 = arith.constant 9.99999974E-6 : f32
    %27 = vector.broadcast %cst_13 : f32 to vector<32x1xf32>
    %28 = arith.addf %24, %27 : vector<32x1xf32>
    %29 = math.rsqrt %28 : vector<32x1xf32>
    %30 = vector.broadcast %29 : vector<32x1xf32> to vector<32x32xf32>
    %31 = arith.mulf %26, %30 : vector<32x32xf32>
    %c0_14 = arith.constant 0 : index
    %c0_15 = arith.constant 0 : index
    %32 = vector.load %arg5[%c0_14, %c0_15] : memref<1x32xf32, #tpu.memory_space<vmem>>, vector<1x32xf32>
    %33 = vector.broadcast %32 : vector<1x32xf32> to vector<32x32xf32>
    %34 = arith.mulf %31, %33 : vector<32x32xf32>
    %c0_16 = arith.constant 0 : index
    %c0_17 = arith.constant 0 : index
    %35 = vector.load %arg6[%c0_16, %c0_17] : memref<1x32xf32, #tpu.memory_space<vmem>>, vector<1x32xf32>
    %36 = vector.broadcast %35 : vector<1x32xf32> to vector<32x32xf32>
    %37 = arith.addf %34, %36 : vector<32x32xf32>
    %38 = arith.truncf %37 : vector<32x32xf32> to vector<32x32xbf16>
    %c0_18 = arith.constant 0 : index
    %c0_19 = arith.constant 0 : index
    %39 = vector.load %arg7[%c0_18, %c0_19] : memref<32x32xbf16, #tpu.memory_space<vmem>>, vector<32x32xbf16>
    %cst_20 = arith.constant dense<0.000000e+00> : vector<32x32xf32>
    %40 = tpu.matmul %38, %39, %cst_20 {dimension_numbers = #tpu.dot_dimension_numbers<[1], [0], [0], [1], [0, 0, 1, 1], [], []>} : vector<32x32xbf16>, vector<32x32xbf16>, vector<32x32xf32> -> vector<32x32xf32>
    %c0_21 = arith.constant 0 : index
    %c0_22 = arith.constant 0 : index
    %41 = vector.load %arg8[%c0_21, %c0_22] : memref<1x32xf32, #tpu.memory_space<vmem>>, vector<1x32xf32>
    %42 = vector.broadcast %41 : vector<1x32xf32> to vector<32x32xf32>
    %43 = arith.addf %40, %42 : vector<32x32xf32>
    %44 = arith.truncf %43 : vector<32x32xf32> to vector<32x32xbf16>
    %c0_23 = arith.constant 0 : index
    %c0_24 = arith.constant 0 : index
    %45 = vector.load %arg9[%c0_23, %c0_24] : memref<32x64xbf16, #tpu.memory_space<vmem>>, vector<32x64xbf16>
    %cst_25 = arith.constant dense<0.000000e+00> : vector<32x64xf32>
    %46 = tpu.matmul %44, %45, %cst_25 {dimension_numbers = #tpu.dot_dimension_numbers<[1], [0], [0], [1], [0, 0, 1, 1], [], []>} : vector<32x32xbf16>, vector<32x64xbf16>, vector<32x64xf32> -> vector<32x64xf32>
    %47 = vector.extract_strided_slice %46 {offsets = [0, 0], sizes = [32, 32], strides = [1, 1]} : vector<32x64xf32> to vector<32x32xf32>
    %48 = vector.extract_strided_slice %11 {offsets = [0, 32], sizes = [32, 32], strides = [1, 1]} : vector<32x96xf32> to vector<32x32xf32>
    %49 = arith.addf %47, %48 : vector<32x32xf32>
    %50 = arith.negf %49 : vector<32x32xf32>
    %51 = math.exp %50 : vector<32x32xf32>
    %cst_26 = arith.constant 1.000000e+00 : f32
    %52 = vector.broadcast %cst_26 : f32 to vector<32x32xf32>
    %53 = arith.addf %52, %51 : vector<32x32xf32>
    %54 = arith.divf %52, %53 : vector<32x32xf32>
    %55 = vector.extract_strided_slice %46 {offsets = [0, 32], sizes = [32, 32], strides = [1, 1]} : vector<32x64xf32> to vector<32x32xf32>
    %56 = vector.extract_strided_slice %11 {offsets = [0, 64], sizes = [32, 32], strides = [1, 1]} : vector<32x96xf32> to vector<32x32xf32>
    %57 = arith.addf %55, %56 : vector<32x32xf32>
    %58 = arith.mulf %54, %57 : vector<32x32xf32>
    %59 = arith.addf %43, %58 : vector<32x32xf32>
    %60 = arith.truncf %59 : vector<32x32xf32> to vector<32x32xbf16>
    %61 = vector.shape_cast %60 : vector<32x32xbf16> to vector<2x16x32xbf16>
    %c0_27 = arith.constant 0 : index
    %c0_28 = arith.constant 0 : index
    %c0_29 = arith.constant 0 : index
    %62 = vector.load %arg10[%c0_27, %c0_28, %c0_29] : memref<2x16x32xbf16, #tpu.memory_space<vmem>>, vector<2x16x32xbf16>
    tpu.vector_store %arg10[%c0_27, %c0_28, %c0_29], %61 {strides = array<i32>} : memref<2x16x32xbf16, #tpu.memory_space<vmem>>, vector<2x16x32xbf16>,
    return
  }
  func.func @transform_0(%arg0: i32) -> (i32, i32, i32) {
    %c0_i32 = arith.constant 0 : i32
    %c0_i32_0 = arith.constant 0 : i32
    %c0_i32_1 = arith.constant 0 : i32
    return %arg0, %c0_i32, %c0_i32_0 : i32, i32, i32
  }
  func.func @transform_1(%arg0: i32) -> (i32, i32, i32) {
    %c0_i32 = arith.constant 0 : i32
    %c0_i32_0 = arith.constant 0 : i32
    %c0_i32_1 = arith.constant 0 : i32
    return %arg0, %c0_i32, %c0_i32_0 : i32, i32, i32
  }
  func.func @transform_2(%arg0: i32) -> (i32, i32) {
    %c0_i32 = arith.constant 0 : i32
    %c0_i32_0 = arith.constant 0 : i32
    %c0_i32_1 = arith.constant 0 : i32
    return %c0_i32, %c0_i32_0 : i32, i32
  }
  func.func @transform_3(%arg0: i32) -> (i32, i32) {
    %c0_i32 = arith.constant 0 : i32
    %c0_i32_0 = arith.constant 0 : i32
    %c0_i32_1 = arith.constant 0 : i32
    return %c0_i32, %c0_i32_0 : i32, i32
  }
  func.func @transform_4(%arg0: i32) -> (i32, i32) {
    %c0_i32 = arith.constant 0 : i32
    %c0_i32_0 = arith.constant 0 : i32
    %c0_i32_1 = arith.constant 0 : i32
    return %c0_i32, %c0_i32_0 : i32, i32
  }
  func.func @transform_5(%arg0: i32) -> (i32, i32) {
    %c0_i32 = arith.constant 0 : i32
    %c0_i32_0 = arith.constant 0 : i32
    %c0_i32_1 = arith.constant 0 : i32
    return %c0_i32, %c0_i32_0 : i32, i32
  }
  func.func @transform_6(%arg0: i32) -> (i32, i32) {
    %c0_i32 = arith.constant 0 : i32
    %c0_i32_0 = arith.constant 0 : i32
    %c0_i32_1 = arith.constant 0 : i32
    return %c0_i32, %c0_i32_0 : i32, i32
  }
  func.func @transform_7(%arg0: i32) -> (i32, i32) {
    %c0_i32 = arith.constant 0 : i32
    %c0_i32_0 = arith.constant 0 : i32
    %c0_i32_1 = arith.constant 0 : i32
    return %c0_i32, %c0_i32_0 : i32, i32
  }
  func.func @transform_8(%arg0: i32) -> (i32, i32) {
    %c0_i32 = arith.constant 0 : i32
    %c0_i32_0 = arith.constant 0 : i32
    %c0_i32_1 = arith.constant 0 : i32
    return %c0_i32, %c0_i32_0 : i32, i32
  }
  func.func @transform_9(%arg0: i32) -> (i32, i32, i32) {
    %c0_i32 = arith.constant 0 : i32
    %c0_i32_0 = arith.constant 0 : i32
    %c0_i32_1 = arith.constant 0 : i32
    return %arg0, %c0_i32, %c0_i32_0 : i32, i32, i32
  }
}

module attributes {stable_mosaic.version = 11 : i64} {
  func.func @_lstm_decode_project_kernel(%arg0: i32, %arg1: i32, %arg2: memref<4x16x32xbf16, #tpu.memory_space<vmem>>, %arg3: memref<32x512xbf16, #tpu.memory_space<vmem>>, %arg4: memref<128x512xbf16, #tpu.memory_space<vmem>>, %arg5: memref<1x512xf32, #tpu.memory_space<vmem>>, %arg6: memref<128x128xbf16, #tpu.memory_space<vmem>>, %arg7: memref<1x128xf32, #tpu.memory_space<vmem>>, %arg8: memref<4x16x128xf32, #tpu.memory_space<vmem>>, %arg9: memref<16x128xf32, #tpu.memory_space<vmem>>, %arg10: memref<16x128xf32, #tpu.memory_space<vmem>>, %arg11: memref<64x512xf32, #tpu.memory_space<vmem>>, %arg12: memref<64x128xf32, #tpu.memory_space<vmem>>) attributes {dimension_semantics = [#tpu.dimension_semantics<parallel>, #tpu.dimension_semantics<arbitrary>], iteration_bounds = array<i64: 1, 2>, scalar_prefetch = 0 : i64, scratch_operands = 4 : i64, tpu.core_type = #tpu.core_type<tc>, window_params = [{transform_indices = @transform_0, window_bounds = array<i64: 4, 16, 32>}, {pipeline_mode = #tpu.pipeline_mode<synchronous>, transform_indices = @transform_1, window_bounds = array<i64: 32, 512>}, {pipeline_mode = #tpu.pipeline_mode<synchronous>, transform_indices = @transform_2, window_bounds = array<i64: 128, 512>}, {pipeline_mode = #tpu.pipeline_mode<synchronous>, transform_indices = @transform_3, window_bounds = array<i64: 1, 512>}, {pipeline_mode = #tpu.pipeline_mode<synchronous>, transform_indices = @transform_4, window_bounds = array<i64: 128, 128>}, {pipeline_mode = #tpu.pipeline_mode<synchronous>, transform_indices = @transform_5, window_bounds = array<i64: 1, 128>}, {transform_indices = @transform_6, window_bounds = array<i64: 4, 16, 128>}]} {
    %c0_i32 = arith.constant 0 : i32
    %0 = arith.cmpi eq, %arg1, %c0_i32 : i32
    %1 = arith.extui %0 : i1 to i32
    %c0_i32_0 = arith.constant 0 : i32
    %2 = arith.cmpi ne, %1, %c0_i32_0 : i32
    scf.if %2 {
      %cst_81 = arith.constant 0.000000e+00 : f32
      %173 = vector.broadcast %cst_81 : f32 to vector<16x128xf32>
      %c0_82 = arith.constant 0 : index
      %c0_83 = arith.constant 0 : index
      %174 = vector.load %arg9[%c0_82, %c0_83] : memref<16x128xf32, #tpu.memory_space<vmem>>, vector<16x128xf32>
      tpu.vector_store %arg9[%c0_82, %c0_83], %173 {strides = array<i32>} : memref<16x128xf32, #tpu.memory_space<vmem>>, vector<16x128xf32>,
      %cst_84 = arith.constant 0.000000e+00 : f32
      %175 = vector.broadcast %cst_84 : f32 to vector<16x128xf32>
      %c0_85 = arith.constant 0 : index
      %c0_86 = arith.constant 0 : index
      %176 = vector.load %arg10[%c0_85, %c0_86] : memref<16x128xf32, #tpu.memory_space<vmem>>, vector<16x128xf32>
      tpu.vector_store %arg10[%c0_85, %c0_86], %175 {strides = array<i32>} : memref<16x128xf32, #tpu.memory_space<vmem>>, vector<16x128xf32>,
    } else {
    }
    %c0 = arith.constant 0 : index
    %c0_1 = arith.constant 0 : index
    %c0_2 = arith.constant 0 : index
    %3 = vector.load %arg2[%c0, %c0_1, %c0_2] : memref<4x16x32xbf16, #tpu.memory_space<vmem>>, vector<4x16x32xbf16>
    %4 = vector.shape_cast %3 : vector<4x16x32xbf16> to vector<64x32xbf16>
    %c0_3 = arith.constant 0 : index
    %c0_4 = arith.constant 0 : index
    %5 = vector.load %arg3[%c0_3, %c0_4] : memref<32x512xbf16, #tpu.memory_space<vmem>>, vector<32x512xbf16>
    %cst = arith.constant dense<0.000000e+00> : vector<64x512xf32>
    %6 = tpu.matmul %4, %5, %cst {dimension_numbers = #tpu.dot_dimension_numbers<[1], [0], [0], [1], [0, 0, 1, 1], [], []>} : vector<64x32xbf16>, vector<32x512xbf16>, vector<64x512xf32> -> vector<64x512xf32>
    %c0_5 = arith.constant 0 : index
    %c0_6 = arith.constant 0 : index
    %7 = vector.load %arg5[%c0_5, %c0_6] : memref<1x512xf32, #tpu.memory_space<vmem>>, vector<1x512xf32>
    %8 = vector.broadcast %7 : vector<1x512xf32> to vector<64x512xf32>
    %9 = arith.addf %6, %8 : vector<64x512xf32>
    %c0_7 = arith.constant 0 : index
    %c0_8 = arith.constant 0 : index
    %10 = vector.load %arg11[%c0_7, %c0_8] : memref<64x512xf32, #tpu.memory_space<vmem>>, vector<64x512xf32>
    tpu.vector_store %arg11[%c0_7, %c0_8], %9 {strides = array<i32>} : memref<64x512xf32, #tpu.memory_space<vmem>>, vector<64x512xf32>,
    %c0_9 = arith.constant 0 : index
    %c0_10 = arith.constant 0 : index
    %11 = vector.load %arg4[%c0_9, %c0_10] : memref<128x512xbf16, #tpu.memory_space<vmem>>, vector<128x512xbf16>
    %c0_i32_11 = arith.constant 0 : i32
    %c0_12 = arith.constant 0 : index
    %c0_13 = arith.constant 0 : index
    %12 = vector.load %arg9[%c0_12, %c0_13] : memref<16x128xf32, #tpu.memory_space<vmem>>, vector<16x128xf32>
    %c0_14 = arith.constant 0 : index
    %c0_15 = arith.constant 0 : index
    %13 = vector.load %arg10[%c0_14, %c0_15] : memref<16x128xf32, #tpu.memory_space<vmem>>, vector<16x128xf32>
    %c16_i32 = arith.constant 16 : i32
    %14 = arith.muli %c0_i32_11, %c16_i32 : i32
    %15 = tpu.assume_multiple %14, 16 : i32
    %16 = arith.index_cast %15 : i32 to index
    %c0_16 = arith.constant 0 : index
    %17 = vector.load %arg11[%16, %c0_16] : memref<64x512xf32, #tpu.memory_space<vmem>>, vector<16x512xf32>
    %18 = arith.truncf %12 : vector<16x128xf32> to vector<16x128xbf16>
    %cst_17 = arith.constant dense<0.000000e+00> : vector<16x512xf32>
    %19 = tpu.matmul %18, %11, %cst_17 {dimension_numbers = #tpu.dot_dimension_numbers<[1], [0], [0], [1], [0, 0, 1, 1], [], []>} : vector<16x128xbf16>, vector<128x512xbf16>, vector<16x512xf32> -> vector<16x512xf32>
    %20 = arith.addf %17, %19 : vector<16x512xf32>
    %21 = vector.extract_strided_slice %20 {offsets = [0, 0], sizes = [16, 128], strides = [1, 1]} : vector<16x512xf32> to vector<16x128xf32>
    %22 = arith.negf %21 : vector<16x128xf32>
    %23 = math.exp %22 : vector<16x128xf32>
    %cst_18 = arith.constant 1.000000e+00 : f32
    %24 = vector.broadcast %cst_18 : f32 to vector<16x128xf32>
    %25 = arith.addf %24, %23 : vector<16x128xf32>
    %26 = arith.divf %24, %25 : vector<16x128xf32>
    %27 = vector.extract_strided_slice %20 {offsets = [0, 128], sizes = [16, 128], strides = [1, 1]} : vector<16x512xf32> to vector<16x128xf32>
    %28 = arith.negf %27 : vector<16x128xf32>
    %29 = math.exp %28 : vector<16x128xf32>
    %cst_19 = arith.constant 1.000000e+00 : f32
    %30 = vector.broadcast %cst_19 : f32 to vector<16x128xf32>
    %31 = arith.addf %30, %29 : vector<16x128xf32>
    %32 = arith.divf %30, %31 : vector<16x128xf32>
    %33 = vector.extract_strided_slice %20 {offsets = [0, 256], sizes = [16, 128], strides = [1, 1]} : vector<16x512xf32> to vector<16x128xf32>
    %34 = math.tanh %33 : vector<16x128xf32>
    %35 = vector.extract_strided_slice %20 {offsets = [0, 384], sizes = [16, 128], strides = [1, 1]} : vector<16x512xf32> to vector<16x128xf32>
    %36 = arith.negf %35 : vector<16x128xf32>
    %37 = math.exp %36 : vector<16x128xf32>
    %cst_20 = arith.constant 1.000000e+00 : f32
    %38 = vector.broadcast %cst_20 : f32 to vector<16x128xf32>
    %39 = arith.addf %38, %37 : vector<16x128xf32>
    %40 = arith.divf %38, %39 : vector<16x128xf32>
    %41 = arith.mulf %32, %13 : vector<16x128xf32>
    %42 = arith.mulf %26, %34 : vector<16x128xf32>
    %43 = arith.addf %41, %42 : vector<16x128xf32>
    %44 = math.tanh %43 : vector<16x128xf32>
    %45 = arith.mulf %40, %44 : vector<16x128xf32>
    %c0_21 = arith.constant 0 : index
    %c0_22 = arith.constant 0 : index
    %46 = vector.load %arg9[%c0_21, %c0_22] : memref<16x128xf32, #tpu.memory_space<vmem>>, vector<16x128xf32>
    tpu.vector_store %arg9[%c0_21, %c0_22], %45 {strides = array<i32>} : memref<16x128xf32, #tpu.memory_space<vmem>>, vector<16x128xf32>,
    %c0_23 = arith.constant 0 : index
    %c0_24 = arith.constant 0 : index
    %47 = vector.load %arg10[%c0_23, %c0_24] : memref<16x128xf32, #tpu.memory_space<vmem>>, vector<16x128xf32>
    tpu.vector_store %arg10[%c0_23, %c0_24], %43 {strides = array<i32>} : memref<16x128xf32, #tpu.memory_space<vmem>>, vector<16x128xf32>,
    %48 = arith.index_cast %15 : i32 to index
    %c0_25 = arith.constant 0 : index
    %49 = vector.load %arg12[%48, %c0_25] : memref<64x128xf32, #tpu.memory_space<vmem>>, vector<16x128xf32>
    tpu.vector_store %arg12[%48, %c0_25], %45 {strides = array<i32>} : memref<64x128xf32, #tpu.memory_space<vmem>>, vector<16x128xf32>,
    %c1_i32 = arith.constant 1 : i32
    %c0_26 = arith.constant 0 : index
    %c0_27 = arith.constant 0 : index
    %50 = vector.load %arg9[%c0_26, %c0_27] : memref<16x128xf32, #tpu.memory_space<vmem>>, vector<16x128xf32>
    %c0_28 = arith.constant 0 : index
    %c0_29 = arith.constant 0 : index
    %51 = vector.load %arg10[%c0_28, %c0_29] : memref<16x128xf32, #tpu.memory_space<vmem>>, vector<16x128xf32>
    %c16_i32_30 = arith.constant 16 : i32
    %52 = arith.muli %c1_i32, %c16_i32_30 : i32
    %53 = tpu.assume_multiple %52, 16 : i32
    %54 = arith.index_cast %53 : i32 to index
    %c0_31 = arith.constant 0 : index
    %55 = vector.load %arg11[%54, %c0_31] : memref<64x512xf32, #tpu.memory_space<vmem>>, vector<16x512xf32>
    %56 = arith.truncf %50 : vector<16x128xf32> to vector<16x128xbf16>
    %cst_32 = arith.constant dense<0.000000e+00> : vector<16x512xf32>
    %57 = tpu.matmul %56, %11, %cst_32 {dimension_numbers = #tpu.dot_dimension_numbers<[1], [0], [0], [1], [0, 0, 1, 1], [], []>} : vector<16x128xbf16>, vector<128x512xbf16>, vector<16x512xf32> -> vector<16x512xf32>
    %58 = arith.addf %55, %57 : vector<16x512xf32>
    %59 = vector.extract_strided_slice %58 {offsets = [0, 0], sizes = [16, 128], strides = [1, 1]} : vector<16x512xf32> to vector<16x128xf32>
    %60 = arith.negf %59 : vector<16x128xf32>
    %61 = math.exp %60 : vector<16x128xf32>
    %cst_33 = arith.constant 1.000000e+00 : f32
    %62 = vector.broadcast %cst_33 : f32 to vector<16x128xf32>
    %63 = arith.addf %62, %61 : vector<16x128xf32>
    %64 = arith.divf %62, %63 : vector<16x128xf32>
    %65 = vector.extract_strided_slice %58 {offsets = [0, 128], sizes = [16, 128], strides = [1, 1]} : vector<16x512xf32> to vector<16x128xf32>
    %66 = arith.negf %65 : vector<16x128xf32>
    %67 = math.exp %66 : vector<16x128xf32>
    %cst_34 = arith.constant 1.000000e+00 : f32
    %68 = vector.broadcast %cst_34 : f32 to vector<16x128xf32>
    %69 = arith.addf %68, %67 : vector<16x128xf32>
    %70 = arith.divf %68, %69 : vector<16x128xf32>
    %71 = vector.extract_strided_slice %58 {offsets = [0, 256], sizes = [16, 128], strides = [1, 1]} : vector<16x512xf32> to vector<16x128xf32>
    %72 = math.tanh %71 : vector<16x128xf32>
    %73 = vector.extract_strided_slice %58 {offsets = [0, 384], sizes = [16, 128], strides = [1, 1]} : vector<16x512xf32> to vector<16x128xf32>
    %74 = arith.negf %73 : vector<16x128xf32>
    %75 = math.exp %74 : vector<16x128xf32>
    %cst_35 = arith.constant 1.000000e+00 : f32
    %76 = vector.broadcast %cst_35 : f32 to vector<16x128xf32>
    %77 = arith.addf %76, %75 : vector<16x128xf32>
    %78 = arith.divf %76, %77 : vector<16x128xf32>
    %79 = arith.mulf %70, %51 : vector<16x128xf32>
    %80 = arith.mulf %64, %72 : vector<16x128xf32>
    %81 = arith.addf %79, %80 : vector<16x128xf32>
    %82 = math.tanh %81 : vector<16x128xf32>
    %83 = arith.mulf %78, %82 : vector<16x128xf32>
    %c0_36 = arith.constant 0 : index
    %c0_37 = arith.constant 0 : index
    %84 = vector.load %arg9[%c0_36, %c0_37] : memref<16x128xf32, #tpu.memory_space<vmem>>, vector<16x128xf32>
    tpu.vector_store %arg9[%c0_36, %c0_37], %83 {strides = array<i32>} : memref<16x128xf32, #tpu.memory_space<vmem>>, vector<16x128xf32>,
    %c0_38 = arith.constant 0 : index
    %c0_39 = arith.constant 0 : index
    %85 = vector.load %arg10[%c0_38, %c0_39] : memref<16x128xf32, #tpu.memory_space<vmem>>, vector<16x128xf32>
    tpu.vector_store %arg10[%c0_38, %c0_39], %81 {strides = array<i32>} : memref<16x128xf32, #tpu.memory_space<vmem>>, vector<16x128xf32>,
    %86 = arith.index_cast %53 : i32 to index
    %c0_40 = arith.constant 0 : index
    %87 = vector.load %arg12[%86, %c0_40] : memref<64x128xf32, #tpu.memory_space<vmem>>, vector<16x128xf32>
    tpu.vector_store %arg12[%86, %c0_40], %83 {strides = array<i32>} : memref<64x128xf32, #tpu.memory_space<vmem>>, vector<16x128xf32>,
    %c2_i32 = arith.constant 2 : i32
    %c0_41 = arith.constant 0 : index
    %c0_42 = arith.constant 0 : index
    %88 = vector.load %arg9[%c0_41, %c0_42] : memref<16x128xf32, #tpu.memory_space<vmem>>, vector<16x128xf32>
    %c0_43 = arith.constant 0 : index
    %c0_44 = arith.constant 0 : index
    %89 = vector.load %arg10[%c0_43, %c0_44] : memref<16x128xf32, #tpu.memory_space<vmem>>, vector<16x128xf32>
    %c16_i32_45 = arith.constant 16 : i32
    %90 = arith.muli %c2_i32, %c16_i32_45 : i32
    %91 = tpu.assume_multiple %90, 16 : i32
    %92 = arith.index_cast %91 : i32 to index
    %c0_46 = arith.constant 0 : index
    %93 = vector.load %arg11[%92, %c0_46] : memref<64x512xf32, #tpu.memory_space<vmem>>, vector<16x512xf32>
    %94 = arith.truncf %88 : vector<16x128xf32> to vector<16x128xbf16>
    %cst_47 = arith.constant dense<0.000000e+00> : vector<16x512xf32>
    %95 = tpu.matmul %94, %11, %cst_47 {dimension_numbers = #tpu.dot_dimension_numbers<[1], [0], [0], [1], [0, 0, 1, 1], [], []>} : vector<16x128xbf16>, vector<128x512xbf16>, vector<16x512xf32> -> vector<16x512xf32>
    %96 = arith.addf %93, %95 : vector<16x512xf32>
    %97 = vector.extract_strided_slice %96 {offsets = [0, 0], sizes = [16, 128], strides = [1, 1]} : vector<16x512xf32> to vector<16x128xf32>
    %98 = arith.negf %97 : vector<16x128xf32>
    %99 = math.exp %98 : vector<16x128xf32>
    %cst_48 = arith.constant 1.000000e+00 : f32
    %100 = vector.broadcast %cst_48 : f32 to vector<16x128xf32>
    %101 = arith.addf %100, %99 : vector<16x128xf32>
    %102 = arith.divf %100, %101 : vector<16x128xf32>
    %103 = vector.extract_strided_slice %96 {offsets = [0, 128], sizes = [16, 128], strides = [1, 1]} : vector<16x512xf32> to vector<16x128xf32>
    %104 = arith.negf %103 : vector<16x128xf32>
    %105 = math.exp %104 : vector<16x128xf32>
    %cst_49 = arith.constant 1.000000e+00 : f32
    %106 = vector.broadcast %cst_49 : f32 to vector<16x128xf32>
    %107 = arith.addf %106, %105 : vector<16x128xf32>
    %108 = arith.divf %106, %107 : vector<16x128xf32>
    %109 = vector.extract_strided_slice %96 {offsets = [0, 256], sizes = [16, 128], strides = [1, 1]} : vector<16x512xf32> to vector<16x128xf32>
    %110 = math.tanh %109 : vector<16x128xf32>
    %111 = vector.extract_strided_slice %96 {offsets = [0, 384], sizes = [16, 128], strides = [1, 1]} : vector<16x512xf32> to vector<16x128xf32>
    %112 = arith.negf %111 : vector<16x128xf32>
    %113 = math.exp %112 : vector<16x128xf32>
    %cst_50 = arith.constant 1.000000e+00 : f32
    %114 = vector.broadcast %cst_50 : f32 to vector<16x128xf32>
    %115 = arith.addf %114, %113 : vector<16x128xf32>
    %116 = arith.divf %114, %115 : vector<16x128xf32>
    %117 = arith.mulf %108, %89 : vector<16x128xf32>
    %118 = arith.mulf %102, %110 : vector<16x128xf32>
    %119 = arith.addf %117, %118 : vector<16x128xf32>
    %120 = math.tanh %119 : vector<16x128xf32>
    %121 = arith.mulf %116, %120 : vector<16x128xf32>
    %c0_51 = arith.constant 0 : index
    %c0_52 = arith.constant 0 : index
    %122 = vector.load %arg9[%c0_51, %c0_52] : memref<16x128xf32, #tpu.memory_space<vmem>>, vector<16x128xf32>
    tpu.vector_store %arg9[%c0_51, %c0_52], %121 {strides = array<i32>} : memref<16x128xf32, #tpu.memory_space<vmem>>, vector<16x128xf32>,
    %c0_53 = arith.constant 0 : index
    %c0_54 = arith.constant 0 : index
    %123 = vector.load %arg10[%c0_53, %c0_54] : memref<16x128xf32, #tpu.memory_space<vmem>>, vector<16x128xf32>
    tpu.vector_store %arg10[%c0_53, %c0_54], %119 {strides = array<i32>} : memref<16x128xf32, #tpu.memory_space<vmem>>, vector<16x128xf32>,
    %124 = arith.index_cast %91 : i32 to index
    %c0_55 = arith.constant 0 : index
    %125 = vector.load %arg12[%124, %c0_55] : memref<64x128xf32, #tpu.memory_space<vmem>>, vector<16x128xf32>
    tpu.vector_store %arg12[%124, %c0_55], %121 {strides = array<i32>} : memref<64x128xf32, #tpu.memory_space<vmem>>, vector<16x128xf32>,
    %c3_i32 = arith.constant 3 : i32
    %c0_56 = arith.constant 0 : index
    %c0_57 = arith.constant 0 : index
    %126 = vector.load %arg9[%c0_56, %c0_57] : memref<16x128xf32, #tpu.memory_space<vmem>>, vector<16x128xf32>
    %c0_58 = arith.constant 0 : index
    %c0_59 = arith.constant 0 : index
    %127 = vector.load %arg10[%c0_58, %c0_59] : memref<16x128xf32, #tpu.memory_space<vmem>>, vector<16x128xf32>
    %c16_i32_60 = arith.constant 16 : i32
    %128 = arith.muli %c3_i32, %c16_i32_60 : i32
    %129 = tpu.assume_multiple %128, 16 : i32
    %130 = arith.index_cast %129 : i32 to index
    %c0_61 = arith.constant 0 : index
    %131 = vector.load %arg11[%130, %c0_61] : memref<64x512xf32, #tpu.memory_space<vmem>>, vector<16x512xf32>
    %132 = arith.truncf %126 : vector<16x128xf32> to vector<16x128xbf16>
    %cst_62 = arith.constant dense<0.000000e+00> : vector<16x512xf32>
    %133 = tpu.matmul %132, %11, %cst_62 {dimension_numbers = #tpu.dot_dimension_numbers<[1], [0], [0], [1], [0, 0, 1, 1], [], []>} : vector<16x128xbf16>, vector<128x512xbf16>, vector<16x512xf32> -> vector<16x512xf32>
    %134 = arith.addf %131, %133 : vector<16x512xf32>
    %135 = vector.extract_strided_slice %134 {offsets = [0, 0], sizes = [16, 128], strides = [1, 1]} : vector<16x512xf32> to vector<16x128xf32>
    %136 = arith.negf %135 : vector<16x128xf32>
    %137 = math.exp %136 : vector<16x128xf32>
    %cst_63 = arith.constant 1.000000e+00 : f32
    %138 = vector.broadcast %cst_63 : f32 to vector<16x128xf32>
    %139 = arith.addf %138, %137 : vector<16x128xf32>
    %140 = arith.divf %138, %139 : vector<16x128xf32>
    %141 = vector.extract_strided_slice %134 {offsets = [0, 128], sizes = [16, 128], strides = [1, 1]} : vector<16x512xf32> to vector<16x128xf32>
    %142 = arith.negf %141 : vector<16x128xf32>
    %143 = math.exp %142 : vector<16x128xf32>
    %cst_64 = arith.constant 1.000000e+00 : f32
    %144 = vector.broadcast %cst_64 : f32 to vector<16x128xf32>
    %145 = arith.addf %144, %143 : vector<16x128xf32>
    %146 = arith.divf %144, %145 : vector<16x128xf32>
    %147 = vector.extract_strided_slice %134 {offsets = [0, 256], sizes = [16, 128], strides = [1, 1]} : vector<16x512xf32> to vector<16x128xf32>
    %148 = math.tanh %147 : vector<16x128xf32>
    %149 = vector.extract_strided_slice %134 {offsets = [0, 384], sizes = [16, 128], strides = [1, 1]} : vector<16x512xf32> to vector<16x128xf32>
    %150 = arith.negf %149 : vector<16x128xf32>
    %151 = math.exp %150 : vector<16x128xf32>
    %cst_65 = arith.constant 1.000000e+00 : f32
    %152 = vector.broadcast %cst_65 : f32 to vector<16x128xf32>
    %153 = arith.addf %152, %151 : vector<16x128xf32>
    %154 = arith.divf %152, %153 : vector<16x128xf32>
    %155 = arith.mulf %146, %127 : vector<16x128xf32>
    %156 = arith.mulf %140, %148 : vector<16x128xf32>
    %157 = arith.addf %155, %156 : vector<16x128xf32>
    %158 = math.tanh %157 : vector<16x128xf32>
    %159 = arith.mulf %154, %158 : vector<16x128xf32>
    %c0_66 = arith.constant 0 : index
    %c0_67 = arith.constant 0 : index
    %160 = vector.load %arg9[%c0_66, %c0_67] : memref<16x128xf32, #tpu.memory_space<vmem>>, vector<16x128xf32>
    tpu.vector_store %arg9[%c0_66, %c0_67], %159 {strides = array<i32>} : memref<16x128xf32, #tpu.memory_space<vmem>>, vector<16x128xf32>,
    %c0_68 = arith.constant 0 : index
    %c0_69 = arith.constant 0 : index
    %161 = vector.load %arg10[%c0_68, %c0_69] : memref<16x128xf32, #tpu.memory_space<vmem>>, vector<16x128xf32>
    tpu.vector_store %arg10[%c0_68, %c0_69], %157 {strides = array<i32>} : memref<16x128xf32, #tpu.memory_space<vmem>>, vector<16x128xf32>,
    %162 = arith.index_cast %129 : i32 to index
    %c0_70 = arith.constant 0 : index
    %163 = vector.load %arg12[%162, %c0_70] : memref<64x128xf32, #tpu.memory_space<vmem>>, vector<16x128xf32>
    tpu.vector_store %arg12[%162, %c0_70], %159 {strides = array<i32>} : memref<64x128xf32, #tpu.memory_space<vmem>>, vector<16x128xf32>,
    %c4_i32 = arith.constant 4 : i32
    %c0_71 = arith.constant 0 : index
    %c0_72 = arith.constant 0 : index
    %164 = vector.load %arg12[%c0_71, %c0_72] : memref<64x128xf32, #tpu.memory_space<vmem>>, vector<64x128xf32>
    %165 = arith.truncf %164 : vector<64x128xf32> to vector<64x128xbf16>
    %c0_73 = arith.constant 0 : index
    %c0_74 = arith.constant 0 : index
    %166 = vector.load %arg6[%c0_73, %c0_74] : memref<128x128xbf16, #tpu.memory_space<vmem>>, vector<128x128xbf16>
    %cst_75 = arith.constant dense<0.000000e+00> : vector<64x128xf32>
    %167 = tpu.matmul %165, %166, %cst_75 {dimension_numbers = #tpu.dot_dimension_numbers<[1], [0], [0], [1], [0, 0, 1, 1], [], []>} : vector<64x128xbf16>, vector<128x128xbf16>, vector<64x128xf32> -> vector<64x128xf32>
    %c0_76 = arith.constant 0 : index
    %c0_77 = arith.constant 0 : index
    %168 = vector.load %arg7[%c0_76, %c0_77] : memref<1x128xf32, #tpu.memory_space<vmem>>, vector<1x128xf32>
    %169 = vector.broadcast %168 : vector<1x128xf32> to vector<64x128xf32>
    %170 = arith.addf %167, %169 : vector<64x128xf32>
    %171 = vector.shape_cast %170 : vector<64x128xf32> to vector<4x16x128xf32>
    %c0_78 = arith.constant 0 : index
    %c0_79 = arith.constant 0 : index
    %c0_80 = arith.constant 0 : index
    %172 = vector.load %arg8[%c0_78, %c0_79, %c0_80] : memref<4x16x128xf32, #tpu.memory_space<vmem>>, vector<4x16x128xf32>
    tpu.vector_store %arg8[%c0_78, %c0_79, %c0_80], %171 {strides = array<i32>} : memref<4x16x128xf32, #tpu.memory_space<vmem>>, vector<4x16x128xf32>,
    return
  }
  func.func @transform_0(%arg0: i32, %arg1: i32) -> (i32, i32, i32) {
    %c0_i32 = arith.constant 0 : i32
    %c0_i32_0 = arith.constant 0 : i32
    return %arg1, %arg0, %c0_i32 : i32, i32, i32
  }
  func.func @transform_1(%arg0: i32, %arg1: i32) -> (i32, i32) {
    %c0_i32 = arith.constant 0 : i32
    %c0_i32_0 = arith.constant 0 : i32
    %c0_i32_1 = arith.constant 0 : i32
    return %c0_i32, %c0_i32_0 : i32, i32
  }
  func.func @transform_2(%arg0: i32, %arg1: i32) -> (i32, i32) {
    %c0_i32 = arith.constant 0 : i32
    %c0_i32_0 = arith.constant 0 : i32
    %c0_i32_1 = arith.constant 0 : i32
    return %c0_i32, %c0_i32_0 : i32, i32
  }
  func.func @transform_3(%arg0: i32, %arg1: i32) -> (i32, i32) {
    %c0_i32 = arith.constant 0 : i32
    %c0_i32_0 = arith.constant 0 : i32
    %c0_i32_1 = arith.constant 0 : i32
    return %c0_i32, %c0_i32_0 : i32, i32
  }
  func.func @transform_4(%arg0: i32, %arg1: i32) -> (i32, i32) {
    %c0_i32 = arith.constant 0 : i32
    %c0_i32_0 = arith.constant 0 : i32
    %c0_i32_1 = arith.constant 0 : i32
    return %c0_i32, %c0_i32_0 : i32, i32
  }
  func.func @transform_5(%arg0: i32, %arg1: i32) -> (i32, i32) {
    %c0_i32 = arith.constant 0 : i32
    %c0_i32_0 = arith.constant 0 : i32
    %c0_i32_1 = arith.constant 0 : i32
    return %c0_i32, %c0_i32_0 : i32, i32
  }
  func.func @transform_6(%arg0: i32, %arg1: i32) -> (i32, i32, i32) {
    %c0_i32 = arith.constant 0 : i32
    %c0_i32_0 = arith.constant 0 : i32
    return %arg1, %arg0, %c0_i32 : i32, i32, i32
  }
}

</mosaic_0001>

<llo_original>
// kernel: finetuner_forward.2
$region0: #{finetuner_forward.2}
  #allocation0 [shape = 'u32[]', space=smem, size = 0x4, offset = 0x4, fixed_abs, tag = 'smem constant byte address 0x4 - core index']
  #allocation1 [shape = 'u32[144,128]{1,0:T(1,128)}', space=vmem, size = 0x12000, scoped, tag = 'internal scratch']
  %s0 = inlined_call_operand.vmem [shape: f32[8,16,4], index: 0, kind: input, shape index: {}]
  %s1 = inlined_call_operand.vmem [shape: f32[8,1,32], index: 1, kind: input, shape index: {}]
  %s2 = inlined_call_operand.vmem [shape: bf16[4,96], index: 2, kind: input, shape index: {}]
  %s3 = inlined_call_operand.vmem [shape: f32[1,96], index: 3, kind: input, shape index: {}]
  %s4 = inlined_call_operand.vmem [shape: f32[1,32], index: 4, kind: input, shape index: {}]
  %s5 = inlined_call_operand.vmem [shape: f32[1,32], index: 5, kind: input, shape index: {}]
  %s6 = inlined_call_operand.vmem [shape: bf16[32,32], index: 6, kind: input, shape index: {}]
  %s7 = inlined_call_operand.vmem [shape: f32[1,32], index: 7, kind: input, shape index: {}]
  %s8 = inlined_call_operand.vmem [shape: bf16[32,64], index: 8, kind: input, shape index: {}]
  %s9 = inlined_call_operand.vmem [shape: bf16[8,16,32], index: 9, kind: output, shape index: {}]
  %s10 = sld [smem:[#allocation0]]
  $region69: #{finetuner_forward.2} parent=0
    _
  %s12 = ssub.s32 1, %s10
  %s13 = scalar_select 0, %s12, %s10
  loop: start=0, step=1, limit=6
  $region2: #{finetuner_forward.2} parent=0 // loop_pre_header
    _
  $region3: #{finetuner_forward.2} parent=0 // loop_header
    %s15 = sphi 0, %s19
    %p16 = scmp.ge.s32.totalorder %s15, 6
    %s25 = sphi 0, %s27
    %s28 = sphi 0, %s25
    %s29 = sphi 0, %s28
    %s45 = sphi 0, %s29
    %s51 = sphi 0, %s53
    %s54 = sphi 0, %s51
    %s55 = sphi 0, %s54
    %s71 = sphi 0, %s55
    %s75 = sphi 0, %s75
    %s77 = sphi 0, %s75
    %s78 = sphi 0, %s77
    %s92 = sphi 0, %s78
    %s96 = sphi 0, %s96
    %s98 = sphi 0, %s96
    %s99 = sphi 0, %s98
    %s113 = sphi 0, %s99
    %s117 = sphi 0, %s117
    %s119 = sphi 0, %s117
    %s120 = sphi 0, %s119
    %s134 = sphi 0, %s120
    %s138 = sphi 0, %s138
    %s140 = sphi 0, %s138
    %s141 = sphi 0, %s140
    %s155 = sphi 0, %s141
    %s159 = sphi 0, %s159
    %s161 = sphi 0, %s159
    %s162 = sphi 0, %s161
    %s176 = sphi 0, %s162
    %s180 = sphi 0, %s180
    %s182 = sphi 0, %s180
    %s183 = sphi 0, %s182
    %s197 = sphi 0, %s183
    %s201 = sphi 0, %s201
    %s203 = sphi 0, %s201
    %s204 = sphi 0, %s203
    %s218 = sphi 0, %s204
    %s224 = sphi 0, %s226
    %s227 = sphi 0, %s224
    %s228 = sphi 0, %s227
    %s244 = sphi 0, %s228
  $region4: #{finetuner_forward.2} parent=0 // loop_header_branch
    %18 = sbr.rel (%p16) target = $region8
  $region5: #{finetuner_forward.2} parent=0 // loop_body
    %s20 = ssub.s32 %s15, 1
    %s21 = ssub.s32 %s15, 2
    %s22 = sadd.s32 %s15, 1
    %s23 = ssub.s32 %s15, %s22
    %p24 = scmp.eq.s32.totalorder %s23, 0
    %s26 = sadd.s32 %s25, 1
    %s27 = scalar_select %p24, %s25, %s26
    %p30 = pneg %p24
    %p31 = scmp.eq.s32.totalorder %s15, 3
    %p32 = por %p30, %p31
    %p33 = scmp.ne.s32.totalorder %s25, %s28
    %p34 = scmp.eq.s32.totalorder %s15, 0
    %p35 = por %p33, %p34
    %p36 = scmp.ne.s32.totalorder %s25, %s28
    %p37 = scmp.eq.s32.totalorder %s20, 3
    %p38 = por %p36, %p37
    %p39 = scmp.ne.s32.totalorder %s28, %s29
    %p40 = scmp.eq.s32.totalorder %s20, 0
    %p41 = por %p39, %p40
    %p42 = scmp.ne.s32.totalorder %s28, %s29
    %p43 = scmp.eq.s32.totalorder %s21, 3
    %p44 = por %p42, %p43
    %p46 = scmp.ne.s32.totalorder %s29, %s45
    %p47 = scmp.eq.s32.totalorder %s21, 0
    %p48 = por %p46, %p47
    %s49 = ssub.s32 %s15, %s22
    %p50 = scmp.eq.s32.totalorder %s49, 0
    %s52 = sadd.s32 %s51, 1
    %s53 = scalar_select %p50, %s51, %s52
    %p56 = pneg %p50
    %p57 = scmp.eq.s32.totalorder %s15, 3
    %p58 = por %p56, %p57
    %p59 = scmp.ne.s32.totalorder %s51, %s54
    %p60 = scmp.eq.s32.totalorder %s15, 0
    %p61 = por %p59, %p60
    %p62 = scmp.ne.s32.totalorder %s51, %s54
    %p63 = scmp.eq.s32.totalorder %s20, 3
    %p64 = por %p62, %p63
    %p65 = scmp.ne.s32.totalorder %s54, %s55
    %p66 = scmp.eq.s32.totalorder %s20, 0
    %p67 = por %p65, %p66
    %p68 = scmp.ne.s32.totalorder %s54, %s55
    %p69 = scmp.eq.s32.totalorder %s21, 3
    %p70 = por %p68, %p69
    %p72 = scmp.ne.s32.totalorder %s55, %s71
    %p73 = scmp.eq.s32.totalorder %s21, 0
    %p74 = por %p72, %p73
    %s76 = sadd.s32 %s75, 1
    %p79 = scmp.eq.s32.totalorder %s15, 3
    %p80 = scmp.ne.s32.totalorder %s75, %s77
    %p81 = scmp.eq.s32.totalorder %s15, 0
    %p82 = por %p80, %p81
    %p83 = scmp.ne.s32.totalorder %s75, %s77
    %p84 = scmp.eq.s32.totalorder %s20, 3
    %p85 = por %p83, %p84
    %p86 = scmp.ne.s32.totalorder %s77, %s78
    %p87 = scmp.eq.s32.totalorder %s20, 0
    %p88 = por %p86, %p87
    %p89 = scmp.ne.s32.totalorder %s77, %s78
    %p90 = scmp.eq.s32.totalorder %s21, 3
    %p91 = por %p89, %p90
    %p93 = scmp.ne.s32.totalorder %s78, %s92
    %p94 = scmp.eq.s32.totalorder %s21, 0
    %p95 = por %p93, %p94
    %s97 = sadd.s32 %s96, 1
    %p100 = scmp.eq.s32.totalorder %s15, 3
    %p101 = scmp.ne.s32.totalorder %s96, %s98
    %p102 = scmp.eq.s32.totalorder %s15, 0
    %p103 = por %p101, %p102
    %p104 = scmp.ne.s32.totalorder %s96, %s98
    %p105 = scmp.eq.s32.totalorder %s20, 3
    %p106 = por %p104, %p105
    %p107 = scmp.ne.s32.totalorder %s98, %s99
    %p108 = scmp.eq.s32.totalorder %s20, 0
    %p109 = por %p107, %p108
    %p110 = scmp.ne.s32.totalorder %s98, %s99
    %p111 = scmp.eq.s32.totalorder %s21, 3
    %p112 = por %p110, %p111
    %p114 = scmp.ne.s32.totalorder %s99, %s113
    %p115 = scmp.eq.s32.totalorder %s21, 0
    %p116 = por %p114, %p115
    %s118 = sadd.s32 %s117, 1
    %p121 = scmp.eq.s32.totalorder %s15, 3
    %p122 = scmp.ne.s32.totalorder %s117, %s119
    %p123 = scmp.eq.s32.totalorder %s15, 0
    %p124 = por %p122, %p123
    %p125 = scmp.ne.s32.totalorder %s117, %s119
    %p126 = scmp.eq.s32.totalorder %s20, 3
    %p127 = por %p125, %p126
    %p128 = scmp.ne.s32.totalorder %s119, %s120
    %p129 = scmp.eq.s32.totalorder %s20, 0
    %p130 = por %p128, %p129
    %p131 = scmp.ne.s32.totalorder %s119, %s120
    %p132 = scmp.eq.s32.totalorder %s21, 3
    %p133 = por %p131, %p132
    %p135 = scmp.ne.s32.totalorder %s120, %s134
    %p136 = scmp.eq.s32.totalorder %s21, 0
    %p137 = por %p135, %p136
    %s139 = sadd.s32 %s138, 1
    %p142 = scmp.eq.s32.totalorder %s15, 3
    %p143 = scmp.ne.s32.totalorder %s138, %s140
    %p144 = scmp.eq.s32.totalorder %s15, 0
    %p145 = por %p143, %p144
    %p146 = scmp.ne.s32.totalorder %s138, %s140
    %p147 = scmp.eq.s32.totalorder %s20, 3
    %p148 = por %p146, %p147
    %p149 = scmp.ne.s32.totalorder %s140, %s141
    %p150 = scmp.eq.s32.totalorder %s20, 0
    %p151 = por %p149, %p150
    %p152 = scmp.ne.s32.totalorder %s140, %s141
    %p153 = scmp.eq.s32.totalorder %s21, 3
    %p154 = por %p152, %p153
    %p156 = scmp.ne.s32.totalorder %s141, %s155
    %p157 = scmp.eq.s32.totalorder %s21, 0
    %p158 = por %p156, %p157
    %s160 = sadd.s32 %s159, 1
    %p163 = scmp.eq.s32.totalorder %s15, 3
    %p164 = scmp.ne.s32.totalorder %s159, %s161
    %p165 = scmp.eq.s32.totalorder %s15, 0
    %p166 = por %p164, %p165
    %p167 = scmp.ne.s32.totalorder %s159, %s161
    %p168 = scmp.eq.s32.totalorder %s20, 3
    %p169 = por %p167, %p168
    %p170 = scmp.ne.s32.totalorder %s161, %s162
    %p171 = scmp.eq.s32.totalorder %s20, 0
    %p172 = por %p170, %p171
    %p173 = scmp.ne.s32.totalorder %s161, %s162
    %p174 = scmp.eq.s32.totalorder %s21, 3
    %p175 = por %p173, %p174
    %p177 = scmp.ne.s32.totalorder %s162, %s176
    %p178 = scmp.eq.s32.totalorder %s21, 0
    %p179 = por %p177, %p178
    %s181 = sadd.s32 %s180, 1
    %p184 = scmp.eq.s32.totalorder %s15, 3
    %p185 = scmp.ne.s32.totalorder %s180, %s182
    %p186 = scmp.eq.s32.totalorder %s15, 0
    %p187 = por %p185, %p186
    %p188 = scmp.ne.s32.totalorder %s180, %s182
    %p189 = scmp.eq.s32.totalorder %s20, 3
    %p190 = por %p188, %p189
    %p191 = scmp.ne.s32.totalorder %s182, %s183
    %p192 = scmp.eq.s32.totalorder %s20, 0
    %p193 = por %p191, %p192
    %p194 = scmp.ne.s32.totalorder %s182, %s183
    %p195 = scmp.eq.s32.totalorder %s21, 3
    %p196 = por %p194, %p195
    %p198 = scmp.ne.s32.totalorder %s183, %s197
    %p199 = scmp.eq.s32.totalorder %s21, 0
    %p200 = por %p198, %p199
    %s202 = sadd.s32 %s201, 1
    %p205 = scmp.eq.s32.totalorder %s15, 3
    %p206 = scmp.ne.s32.totalorder %s201, %s203
    %p207 = scmp.eq.s32.totalorder %s15, 0
    %p208 = por %p206, %p207
    %p209 = scmp.ne.s32.totalorder %s201, %s203
    %p210 = scmp.eq.s32.totalorder %s20, 3
    %p211 = por %p209, %p210
    %p212 = scmp.ne.s32.totalorder %s203, %s204
    %p213 = scmp.eq.s32.totalorder %s20, 0
    %p214 = por %p212, %p213
    %p215 = scmp.ne.s32.totalorder %s203, %s204
    %p216 = scmp.eq.s32.totalorder %s21, 3
    %p217 = por %p215, %p216
    %p219 = scmp.ne.s32.totalorder %s204, %s218
    %p220 = scmp.eq.s32.totalorder %s21, 0
    %p221 = por %p219, %p220
    %s222 = ssub.s32 %s15, %s22
    %p223 = scmp.eq.s32.totalorder %s222, 0
    %s225 = sadd.s32 %s224, 1
    %s226 = scalar_select %p223, %s224, %s225
    %p229 = pneg %p223
    %p230 = scmp.eq.s32.totalorder %s15, 3
    %p231 = por %p229, %p230
    %p232 = scmp.ne.s32.totalorder %s224, %s227
    %p233 = scmp.eq.s32.totalorder %s15, 0
    %p234 = por %p232, %p233
    %p235 = scmp.ne.s32.totalorder %s224, %s227
    %p236 = scmp.eq.s32.totalorder %s20, 3
    %p237 = por %p235, %p236
    %p238 = scmp.ne.s32.totalorder %s227, %s228
    %p239 = scmp.eq.s32.totalorder %s20, 0
    %p240 = por %p238, %p239
    %p241 = scmp.ne.s32.totalorder %s227, %s228
    %p242 = scmp.eq.s32.totalorder %s21, 3
    %p243 = por %p241, %p242
    %p245 = scmp.ne.s32.totalorder %s228, %s244
    %p246 = scmp.eq.s32.totalorder %s21, 0
    %p247 = por %p245, %p246
    %p248 = scmp.le.s32.totalorder 1, %s15
    %p249 = scmp.lt.s32.totalorder %s15, 5
    %p250 = pnand %p248, %p249
    %p251 = pneg %p250
    // Predicated region
    $region9: #{finetuner_forward.2} parent=5 // pred_check
      _
    $region10: #{finetuner_forward.2} parent=5 // pred_check_branch
      %253 = sbr.rel (%p250) target = $region12
    $region11: #{finetuner_forward.2} parent=5 // pred_region
      %s254 = ssub.s32 %s15, 1
      // Predicated region
      $region13: #{finetuner_forward.2} parent=11 // pred_check
        %p255 = pneg %p88
      $region14: #{finetuner_forward.2} parent=11 // pred_check_branch
        %257 = sbr.rel (%p255) target = $region16
      $region15: #{finetuner_forward.2} parent=11 // pred_region
        _
      $region16: #{finetuner_forward.2} parent=11 // pred_fallthru
        _
      // Predicated region
      $region17: #{finetuner_forward.2} parent=11 // pred_check
        %p258 = pneg %p109
      $region18: #{finetuner_forward.2} parent=11 // pred_check_branch
        %260 = sbr.rel (%p258) target = $region20
      $region19: #{finetuner_forward.2} parent=11 // pred_region
        _
      $region20: #{finetuner_forward.2} parent=11 // pred_fallthru
        _
      // Predicated region
      $region21: #{finetuner_forward.2} parent=11 // pred_check
        %p261 = pneg %p130
      $region22: #{finetuner_forward.2} parent=11 // pred_check_branch
        %263 = sbr.rel (%p261) target = $region24
      $region23: #{finetuner_forward.2} parent=11 // pred_region
        _
      $region24: #{finetuner_forward.2} parent=11 // pred_fallthru
        _
      // Predicated region
      $region25: #{finetuner_forward.2} parent=11 // pred_check
        %p264 = pneg %p151
      $region26: #{finetuner_forward.2} parent=11 // pred_check_branch
        %266 = sbr.rel (%p264) target = $region28
      $region27: #{finetuner_forward.2} parent=11 // pred_region
        _
      $region28: #{finetuner_forward.2} parent=11 // pred_fallthru
        _
      // Predicated region
      $region29: #{finetuner_forward.2} parent=11 // pred_check
        %p267 = pneg %p172
      $region30: #{finetuner_forward.2} parent=11 // pred_check_branch
        %269 = sbr.rel (%p267) target = $region32
      $region31: #{finetuner_forward.2} parent=11 // pred_region
        _
      $region32: #{finetuner_forward.2} parent=11 // pred_fallthru
        _
      // Predicated region
      $region33: #{finetuner_forward.2} parent=11 // pred_check
        %p270 = pneg %p193
      $region34: #{finetuner_forward.2} parent=11 // pred_check_branch
        %272 = sbr.rel (%p270) target = $region36
      $region35: #{finetuner_forward.2} parent=11 // pred_region
        _
      $region36: #{finetuner_forward.2} parent=11 // pred_fallthru
        _
      // Predicated region
      $region37: #{finetuner_forward.2} parent=11 // pred_check
        %p273 = pneg %p214
      $region38: #{finetuner_forward.2} parent=11 // pred_check_branch
        %275 = sbr.rel (%p273) target = $region40
      $region39: #{finetuner_forward.2} parent=11 // pred_region
        _
      $region40: #{finetuner_forward.2} parent=11 // pred_fallthru
        _
    $region12: #{finetuner_forward.2} parent=5 // pred_fallthru
      _
    %p276 = scmp.lt.s32.totalorder %s15, 4
    // Predicated region
    $region41: #{finetuner_forward.2} parent=5 // pred_check
      %p277 = pneg %p276
    $region42: #{finetuner_forward.2} parent=5 // pred_check_branch
      %279 = sbr.rel (%p277) target = $region44
    $region43: #{finetuner_forward.2} parent=5 // pred_region
      // Predicated region
      $region45: #{finetuner_forward.2} parent=43 // pred_check
        %p280 = pneg %p35
      $region46: #{finetuner_forward.2} parent=43 // pred_check_branch
        %282 = sbr.rel (%p280) target = $region48
      $region47: #{finetuner_forward.2} parent=43 // pred_region
        %s283 = smul.u32 2, %s15
        %p284 = scmp.lt.s32.totalorder %s283, 7
        %s285 = scalar_select %p284, %s283, 7
        %s286 = smul.addr %s285, 2
        %s287 = smul.addr %s286, 8
        %s288 = scalar_lea.vmem %s0, %s287
        %s289 = smul.u32 2, %s15
      $region48: #{finetuner_forward.2} parent=43 // pred_fallthru
        _
      // Predicated region
      $region49: #{finetuner_forward.2} parent=43 // pred_check
        %p290 = pneg %p61
      $region50: #{finetuner_forward.2} parent=43 // pred_check_branch
        %292 = sbr.rel (%p290) target = $region52
      $region51: #{finetuner_forward.2} parent=43 // pred_region
        %s293 = smul.u32 2, %s15
        %p294 = scmp.lt.s32.totalorder %s293, 7
        %s295 = scalar_select %p294, %s293, 7
        %s296 = scalar_lea.vmem %s1, %s295
        %s297 = smul.u32 2, %s15
      $region52: #{finetuner_forward.2} parent=43 // pred_fallthru
        _
    $region44: #{finetuner_forward.2} parent=5 // pred_fallthru
      _
    %p298 = scmp.le.s32.totalorder 1, %s15
    %p299 = scmp.lt.s32.totalorder %s15, 5
    %p300 = pnand %p298, %p299
    %p301 = pneg %p300
    // Predicated region
    $region53: #{finetuner_forward.2} parent=5 // pred_check
      _
    $region54: #{finetuner_forward.2} parent=5 // pred_check_branch
      %303 = sbr.rel (%p300) target = $region56
    $region55: #{finetuner_forward.2} parent=5 // pred_region
      %s304 = ssub.s32 %s15, 1
      %s305 = smul.u32 2, %s20
      %p306 = scmp.lt.s32.totalorder %s305, 7
      %s307 = scalar_select %p306, %s305, 7
      %s308 = smul.addr %s307, 2
      %s309 = smul.addr %s308, 8
      %s310 = scalar_lea.vmem %s0, %s309
      %p311 = pneg %p41
      %p312 = pneg %p38
      %s313 = smul.u32 2, %s20
      %p314 = scmp.lt.s32.totalorder %s313, 7
      %s315 = scalar_select %p314, %s313, 7
      %s316 = scalar_lea.vmem %s1, %s315
      %p317 = pneg %p67
      %p318 = pneg %p64
      %p319 = pneg %p88
      %p320 = pneg %p85
      %p321 = pneg %p109
      %p322 = pneg %p106
      %p323 = pneg %p130
      %p324 = pneg %p127
      %p325 = pneg %p151
      %p326 = pneg %p148
      %p327 = pneg %p172
      %p328 = pneg %p169
      %p329 = pneg %p193
      %p330 = pneg %p190
      %p331 = pneg %p214
      %p332 = pneg %p211
      %p333 = pneg %p240
      %p334 = pneg %p237
      %s335 = smul.u32 2, %s20
      %p336 = scmp.lt.s32.totalorder %s335, 7
      %s337 = scalar_select %p336, %s335, 7
      %s338 = smul.addr %s337, 2
      %s339 = smul.addr %s338, 4
      %s340 = scalar_lea.vmem %s9, %s339
      %s341 = smul.u32 2, %s20
      %p342 = scmp.lt.s32.totalorder %s341, 7
      %s343 = scalar_select %p342, %s341, 7
      %s344 = smul.addr %s343, 2
      %s345 = smul.addr %s344, 8
      %s346 = scalar_lea.vmem %s0, %s345
      %s347 = smul.u32 2, %s20
      %s348 = smul.u32 2, %s20
      %p349 = scmp.lt.s32.totalorder %s348, 7
      %s350 = scalar_select %p349, %s348, 7
      %s351 = scalar_lea.vmem %s1, %s350
      %s352 = smul.u32 2, %s20
      %s353 = smul.u32 2, %s20
      %p354 = scmp.lt.s32.totalorder %s353, 7
      %s355 = scalar_select %p354, %s353, 7
      %s356 = smul.addr %s355, 2
      %s357 = smul.addr %s356, 4
      %s358 = scalar_lea.vmem %s9, %s357
      %s359 = smul.u32 2, %s20
      %v361 = vld [vmem:[%s346] sm:$0xff]
      %v362 = vld [vmem:[%s346 + $0x8] sm:$0xff]
      %v363 = vld [vmem:[%s346 + $0x10] sm:$0xff]
      %v364 = vld [vmem:[%s346 + $0x18] sm:$0xff]
      %v365 = vld [vmem:[%s351] sm:$0x1]
      %v366 = vld [vmem:[%s351 + $0x1] sm:$0x1]
      %v369 = vlaneseq
      %v370 = vshrl.u32 %v369, 7
      %v371 = vsub.s32 0, %v370
      %v372 = vrot.slane %v365, %v371
      %v373 = vlaneseq
      %v374 = vshrl.u32 %v373, 7
      %v375 = vsub.s32 0, %v374
      %v376 = vrot.slane %v366, %v375
      %v379 = vpack.c.bf16 %v362, %v361
      %v380 = vpack.c.bf16 %v364, %v363
      %v381 = vld [vmem:[%s2] sm:$0x3]
      %v382 = vld [vmem:[%s3] sm:$0x1]
      %v384 = vlaneseq
      %v385 = vshrl.u32 %v384, 7
      %v386 = vsub.s32 0, %v385
      %v387 = vrot.slane %v382, %v386
      %vm389 = vcmask 31744
      %v391 = vsel %vm389, %v379, 0
      %v394 = vsel %vm389, %v380, 0
      %vm396 = vcmask 1041408
      %v398 = vsel %vm396, %v381, 0
      %400 = vmatprep.subr.bf16.mxu0 0
      %401 = vmatpush1.bf16.msra.mxu0 %v398
      %402 = vmatprep.subr.bf16.mxu0 0
      %403 = vmatpush1.bf16.msra.mxu0 0
      %404 = vmatprep.subr.bf16.mxu0 0
      %405 = vmatpush1.bf16.msra.mxu0 0
      %406 = vmatprep.subr.bf16.mxu0 0
      %407 = vmatpush1.bf16.msra.mxu0 0
      %408 = vmatprep.subr.bf16.mxu0 0
      %409 = vmatpush1.bf16.msra.mxu0 0
      %410 = vmatprep.subr.bf16.mxu0 0
      %411 = vmatpush1.bf16.msra.mxu0 0
      %412 = vmatprep.subr.bf16.mxu0 0
      %413 = vmatpush1.bf16.msra.mxu0 0
      %414 = vmatprep.subr.bf16.mxu0 0
      %415 = vmatpush1.bf16.msra.mxu0 0
      %416 = vmatprep.subr.bf16.mxu0 0
      %417 = vmatpush1.bf16.msra.mxu0 0
      %418 = vmatprep.subr.bf16.mxu0 0
      %419 = vmatpush1.bf16.msra.mxu0 0
      %420 = vmatprep.subr.bf16.mxu0 0
      %421 = vmatpush1.bf16.msra.mxu0 0
      %422 = vmatprep.subr.bf16.mxu0 0
      %423 = vmatpush1.bf16.msra.mxu0 0
      %424 = vmatprep.subr.bf16.mxu0 0
      %425 = vmatpush1.bf16.msra.mxu0 0
      %426 = vmatprep.subr.bf16.mxu0 0
      %427 = vmatpush1.bf16.msra.mxu0 0
      %428 = vmatprep.subr.bf16.mxu0 0
      %429 = vmatpush1.bf16.msra.mxu0 0
      %430 = vmatprep.subr.bf16.mxu0 0
      %431 = vmatpush1.bf16.msra.mxu0 0
      %432 = vmatprep.mubr.bf16.mxu0 0
      %433 = vmatmul.mubr.bf16.gmra.mrb[0].mxu0 %v391
      %v434 = vpop.f32.mrb[0].mxu0
      %v435 = vadd.f32 %v387, %v434
      %v436 = vpop.f32.mrb[0].mxu0
      %v437 = vpop.f32.mrb[0].mxu0
      %v438 = vadd.f32 %v387, %v437
      %v439 = vpop.f32.mrb[0].mxu0
      %440 = vmatprep.mubr.bf16.mxu0 0
      %441 = vmatmul.mubr.bf16.gmra.mrb[0].mxu0 %v394
      %v442 = vpop.f32.mrb[0].mxu0
      %v443 = vadd.f32 %v387, %v442
      %v444 = vpop.f32.mrb[0].mxu0
      %v445 = vpop.f32.mrb[0].mxu0
      %v446 = vadd.f32 %v387, %v445
      %v447 = vpop.f32.mrb[0].mxu0
      %448 = vdwg.mxu0
      %v449 = vadd.f32 %v435, %v372
      %v450 = vadd.f32 %v438, %v372
      %v451 = vadd.f32 %v443, %v376
      %v452 = vadd.f32 %v446, %v376
      %vm453 = vcmask 261120
      %v454 = vsel %vm453, %v449, 0.0
      %455 = vadd.xlane.f32.xlu0 %v454
      %v456 = vpop.xlane.xlu0 %455
      %v457 = vsel %vm453, %v450, 0.0
      %458 = vadd.xlane.f32.xlu0 %v457
      %v459 = vpop.xlane.xlu0 %458
      %v460 = vsel %vm453, %v451, 0.0
      %461 = vadd.xlane.f32.xlu0 %v460
      %v462 = vpop.xlane.xlu0 %461
      %v463 = vsel %vm453, %v452, 0.0
      %464 = vadd.xlane.f32.xlu0 %v463
      %v465 = vpop.xlane.xlu0 %464
      %v466 = vrcp.pop 32.0
      %v467 = vmul.f32 %v456, %v466
      %v468 = vmul.f32 %v459, %v466
      %v469 = vmul.f32 %v462, %v466
      %v470 = vmul.f32 %v465, %v466
      %v471 = vsub.f32 %v449, %v467
      %v472 = vsub.f32 %v450, %v468
      %v473 = vsub.f32 %v451, %v469
      %v474 = vsub.f32 %v452, %v470
      %v475 = vmul.f32 %v471, %v471
      %v476 = vmul.f32 %v472, %v472
      %v477 = vmul.f32 %v473, %v473
      %v478 = vmul.f32 %v474, %v474
      %v479 = vsel %vm453, %v475, 0.0
      %480 = vadd.xlane.f32.xlu0 %v479
      %v481 = vpop.xlane.xlu0 %480
      %v482 = vsel %vm453, %v476, 0.0
      %483 = vadd.xlane.f32.xlu0 %v482
      %v484 = vpop.xlane.xlu0 %483
      %v485 = vsel %vm453, %v477, 0.0
      %486 = vadd.xlane.f32.xlu0 %v485
      %v487 = vpop.xlane.xlu0 %486
      %v488 = vsel %vm453, %v478, 0.0
      %489 = vadd.xlane.f32.xlu0 %v488
      %v490 = vpop.xlane.xlu0 %489
      %v491 = vmul.f32 %v481, %v466
      %v492 = vmul.f32 %v484, %v466
      %v493 = vmul.f32 %v487, %v466
      %v494 = vmul.f32 %v490, %v466
      %v495 = vadd.f32 %v491, 1e-05
      %v496 = vadd.f32 %v492, 1e-05
      %v497 = vadd.f32 %v493, 1e-05
      %v498 = vadd.f32 %v494, 1e-05
      %v499 = vrsqrt.pop %v495
      %v500 = vrsqrt.pop %v496
      %v501 = vrsqrt.pop %v497
      %v502 = vrsqrt.pop %v498
      %v503 = vmul.f32 %v471, %v499
      %v504 = vmul.f32 %v472, %v500
      %v505 = vmul.f32 %v473, %v501
      %v506 = vmul.f32 %v474, %v502
      %v507 = vld [vmem:[%s4] sm:$0x1]
      %v509 = vlaneseq
      %v510 = vshrl.u32 %v509, 7
      %v511 = vsub.s32 0, %v510
      %v512 = vrot.slane %v507, %v511
      %v514 = vmul.f32 %v503, %v512
      %v515 = vmul.f32 %v504, %v512
      %v516 = vmul.f32 %v505, %v512
      %v517 = vmul.f32 %v506, %v512
      %v518 = vld [vmem:[%s5] sm:$0x1]
      %v520 = vlaneseq
      %v521 = vshrl.u32 %v520, 7
      %v522 = vsub.s32 0, %v521
      %v523 = vrot.slane %v518, %v522
      %v525 = vadd.f32 %v514, %v523
      %v526 = vadd.f32 %v515, %v523
      %v527 = vadd.f32 %v516, %v523
      %v528 = vadd.f32 %v517, %v523
      %v529 = vpack.c.bf16 %v526, %v525
      %v530 = vpack.c.bf16 %v528, %v527
      %v531 = vld [vmem:[%s6] sm:$0xf]
      %v532 = vld [vmem:[%s6 + $0x4] sm:$0xf]
      %v533 = vld [vmem:[%s6 + $0x8] sm:$0xf]
      %v534 = vld [vmem:[%s6 + $0xc] sm:$0xf]
      %v535 = vld [vmem:[%s7] sm:$0x1]
      %v537 = vlaneseq
      %v538 = vshrl.u32 %v537, 7
      %v539 = vsub.s32 0, %v538
      %v540 = vrot.slane %v535, %v539
      %v546 = vunpack.c.l.b16 %v531
      %v547 = vunpack.c.l.b16 %v532
      %v548 = vunpack.c.l.b16 %v533
      %v549 = vunpack.c.l.b16 %v534
      %v550 = vpack.c.b16 %v547, %v546
      %v551 = vpack.c.b16 %v549, %v548
      %v555 = vsel %vm453, %v529, 0
      %v558 = vsel %vm453, %v530, 0
      %560 = vmatprep.subr.bf16.mxu0 0
      %561 = vmatpush1.bf16.msra.mxu0 %v550
      %562 = vmatprep.subr.bf16.mxu0 0
      %563 = vmatpush1.bf16.msra.mxu0 %v551
      %564 = vmatprep.subr.bf16.mxu0 0
      %565 = vmatpush1.bf16.msra.mxu0 0
      %566 = vmatprep.subr.bf16.mxu0 0
      %567 = vmatpush1.bf16.msra.mxu0 0
      %568 = vmatprep.subr.bf16.mxu0 0
      %569 = vmatpush1.bf16.msra.mxu0 0
      %570 = vmatprep.subr.bf16.mxu0 0
      %571 = vmatpush1.bf16.msra.mxu0 0
      %572 = vmatprep.subr.bf16.mxu0 0
      %573 = vmatpush1.bf16.msra.mxu0 0
      %574 = vmatprep.subr.bf16.mxu0 0
      %575 = vmatpush1.bf16.msra.mxu0 0
      %576 = vmatprep.subr.bf16.mxu0 0
      %577 = vmatpush1.bf16.msra.mxu0 0
      %578 = vmatprep.subr.bf16.mxu0 0
      %579 = vmatpush1.bf16.msra.mxu0 0
      %580 = vmatprep.subr.bf16.mxu0 0
      %581 = vmatpush1.bf16.msra.mxu0 0
      %582 = vmatprep.subr.bf16.mxu0 0
      %583 = vmatpush1.bf16.msra.mxu0 0
      %584 = vmatprep.subr.bf16.mxu0 0
      %585 = vmatpush1.bf16.msra.mxu0 0
      %586 = vmatprep.subr.bf16.mxu0 0
      %587 = vmatpush1.bf16.msra.mxu0 0
      %588 = vmatprep.subr.bf16.mxu0 0
      %589 = vmatpush1.bf16.msra.mxu0 0
      %590 = vmatprep.subr.bf16.mxu0 0
      %591 = vmatpush1.bf16.msra.mxu0 0
      %592 = vmatprep.mubr.bf16.mxu0 0
      %593 = vmatmul.mubr.bf16.gmra.mrb[0].mxu0 %v555
      %v594 = vpop.f32.mrb[0].mxu0
      %v595 = vadd.f32 %v540, %v594
      %v596 = vpop.f32.mrb[0].mxu0
      %v597 = vpop.f32.mrb[0].mxu0
      %v598 = vadd.f32 %v540, %v597
      %v599 = vpop.f32.mrb[0].mxu0
      %600 = vmatprep.mubr.bf16.mxu0 0
      %601 = vmatmul.mubr.bf16.gmra.mrb[0].mxu0 %v558
      %v602 = vpop.f32.mrb[0].mxu0
      %v603 = vadd.f32 %v540, %v602
      %v604 = vpop.f32.mrb[0].mxu0
      %v605 = vpop.f32.mrb[0].mxu0
      %v606 = vadd.f32 %v540, %v605
      %v607 = vpop.f32.mrb[0].mxu0
      %608 = vdwg.mxu0
      %v609 = vpack.c.bf16 %v598, %v595
      %v610 = vpack.c.bf16 %v606, %v603
      %v611 = vld [vmem:[%s8] sm:$0xf]
      %v612 = vld [vmem:[%s8 + $0x4] sm:$0xf]
      %v613 = vld [vmem:[%s8 + $0x8] sm:$0xf]
      %v614 = vld [vmem:[%s8 + $0xc] sm:$0xf]
      %v619 = vunpack.c.l.b16 %v611
      %v620 = vunpack.c.l.b16 %v612
      %v621 = vunpack.c.l.b16 %v613
      %v622 = vunpack.c.l.b16 %v614
      %v623 = vpack.c.b16 %v620, %v619
      %v624 = vpack.c.b16 %v622, %v621
      %v628 = vsel %vm453, %v609, 0
      %v631 = vsel %vm453, %v610, 0
      %633 = vmatprep.subr.bf16.mxu0 0
      %634 = vmatpush1.bf16.msra.mxu0 %v623
      %635 = vmatprep.subr.bf16.mxu0 0
      %636 = vmatpush1.bf16.msra.mxu0 %v624
      %637 = vmatprep.subr.bf16.mxu0 0
      %638 = vmatpush1.bf16.msra.mxu0 0
      %639 = vmatprep.subr.bf16.mxu0 0
      %640 = vmatpush1.bf16.msra.mxu0 0
      %641 = vmatprep.subr.bf16.mxu0 0
      %642 = vmatpush1.bf16.msra.mxu0 0
      %643 = vmatprep.subr.bf16.mxu0 0
      %644 = vmatpush1.bf16.msra.mxu0 0
      %645 = vmatprep.subr.bf16.mxu0 0
      %646 = vmatpush1.bf16.msra.mxu0 0
      %647 = vmatprep.subr.bf16.mxu0 0
      %648 = vmatpush1.bf16.msra.mxu0 0
      %649 = vmatprep.subr.bf16.mxu0 0
      %650 = vmatpush1.bf16.msra.mxu0 0
      %651 = vmatprep.subr.bf16.mxu0 0
      %652 = vmatpush1.bf16.msra.mxu0 0
      %653 = vmatprep.subr.bf16.mxu0 0
      %654 = vmatpush1.bf16.msra.mxu0 0
      %655 = vmatprep.subr.bf16.mxu0 0
      %656 = vmatpush1.bf16.msra.mxu0 0
      %657 = vmatprep.subr.bf16.mxu0 0
      %658 = vmatpush1.bf16.msra.mxu0 0
      %659 = vmatprep.subr.bf16.mxu0 0
      %660 = vmatpush1.bf16.msra.mxu0 0
      %661 = vmatprep.subr.bf16.mxu0 0
      %662 = vmatpush1.bf16.msra.mxu0 0
      %663 = vmatprep.subr.bf16.mxu0 0
      %664 = vmatpush1.bf16.msra.mxu0 0
      %665 = vmatprep.mubr.bf16.mxu0 0
      %666 = vmatmul.mubr.bf16.gmra.mrb[0].mxu0 %v628
      %v667 = vpop.f32.mrb[0].mxu0
      %v668 = vadd.f32 0.0, %v667
      %v669 = vpop.f32.mrb[0].mxu0
      %v670 = vpop.f32.mrb[0].mxu0
      %v671 = vadd.f32 0.0, %v670
      %v672 = vpop.f32.mrb[0].mxu0
      %673 = vmatprep.mubr.bf16.mxu0 0
      %674 = vmatmul.mubr.bf16.gmra.mrb[0].mxu0 %v631
      %v675 = vpop.f32.mrb[0].mxu0
      %v676 = vadd.f32 0.0, %v675
      %v677 = vpop.f32.mrb[0].mxu0
      %v678 = vpop.f32.mrb[0].mxu0
      %v679 = vadd.f32 0.0, %v678
      %v680 = vpop.f32.mrb[0].mxu0
      %681 = vdwg.mxu0
      %686 = vrot.lane.b32.xlu0 %v435, 96
      %v687 = vpop.permute.xlu0 %686
      %688 = vrot.lane.b32.xlu0 %v438, 96
      %v689 = vpop.permute.xlu0 %688
      %690 = vrot.lane.b32.xlu0 %v443, 96
      %v691 = vpop.permute.xlu0 %690
      %692 = vrot.lane.b32.xlu0 %v446, 96
      %v693 = vpop.permute.xlu0 %692
      %v698 = vadd.f32 %v668, %v687
      %v699 = vadd.f32 %v671, %v689
      %v700 = vadd.f32 %v676, %v691
      %v701 = vadd.f32 %v679, %v693
      %v702 = vxor.u32 %v698, 2147483648
      %v703 = vxor.u32 %v699, 2147483648
      %v704 = vxor.u32 %v700, 2147483648
      %v705 = vxor.u32 %v701, 2147483648
      %v706 = vmul.f32 %v702, 1.442695
      %v707 = vpow.pop %v706
      %v708 = vmul.f32 %v703, 1.442695
      %v709 = vpow.pop %v708
      %v710 = vmul.f32 %v704, 1.442695
      %v711 = vpow.pop %v710
      %v712 = vmul.f32 %v705, 1.442695
      %v713 = vpow.pop %v712
      %v714 = vadd.f32 %v707, 1.0
      %v715 = vadd.f32 %v709, 1.0
      %v716 = vadd.f32 %v711, 1.0
      %v717 = vadd.f32 %v713, 1.0
      %v718 = vrcp.pop %v714
      %v719 = vmul.f32 1.0, %v718
      %v720 = vrcp.pop %v715
      %v721 = vmul.f32 1.0, %v720
      %v722 = vrcp.pop %v716
      %v723 = vmul.f32 1.0, %v722
      %v724 = vrcp.pop %v717
      %v725 = vmul.f32 1.0, %v724
      %730 = vrot.lane.b32.xlu0 %v698, 96
      %v731 = vpop.permute.xlu0 %730
      %732 = vrot.lane.b32.xlu0 %v699, 96
      %v733 = vpop.permute.xlu0 %732
      %734 = vrot.lane.b32.xlu0 %v700, 96
      %v735 = vpop.permute.xlu0 %734
      %736 = vrot.lane.b32.xlu0 %v701, 96
      %v737 = vpop.permute.xlu0 %736
      %v742 = vmul.f32 %v719, %v731
      %v743 = vmul.f32 %v721, %v733
      %v744 = vmul.f32 %v723, %v735
      %v745 = vmul.f32 %v725, %v737
      %v746 = vadd.f32 %v595, %v742
      %v747 = vadd.f32 %v598, %v743
      %v748 = vadd.f32 %v603, %v744
      %v749 = vadd.f32 %v606, %v745
      %v750 = vpack.c.bf16 %v747, %v746
      %v751 = vpack.c.bf16 %v749, %v748
      %v754 = vunpack.c.l.b16 %v750
      %v755 = vunpack.c.h.b16 %v750
      %v756 = vunpack.c.l.b16 %v751
      %v757 = vunpack.c.h.b16 %v751
      %v758 = vpack.c.b16 %v754, %v754
      %v759 = vpack.c.b16 %v755, %v755
      %v760 = vpack.c.b16 %v756, %v756
      %v761 = vpack.c.b16 %v757, %v757
      %vm766 = vcmask 257024
      %767 = vst.msk [vmem:[%s358] sm:$0xf] %vm766, %v758
      %768 = vst.msk [vmem:[%s358 + $0x4] sm:$0xf] %vm766, %v759
      %769 = vst.msk [vmem:[%s358 + $0x8] sm:$0xf] %vm766, %v760
      %770 = vst.msk [vmem:[%s358 + $0xc] sm:$0xf] %vm766, %v761
      %s771 = smul.u32 2, %s20
      %p772 = scmp.lt.s32.totalorder %s771, 7
      %s773 = scalar_select %p772, %s771, 7
      %s774 = smul.addr %s773, 2
      %s775 = smul.addr %s774, 4
      %s776 = scalar_lea.vmem %s9, %s775
      // Predicated region
      $region57: #{finetuner_forward.2} parent=55 // pred_check
        %p777 = pneg %p237
      $region58: #{finetuner_forward.2} parent=55 // pred_check_branch
        %779 = sbr.rel (%p777) target = $region60
      $region59: #{finetuner_forward.2} parent=55 // pred_region
        %s780 = smul.u32 2, %s20
      $region60: #{finetuner_forward.2} parent=55 // pred_fallthru
        _
    $region56: #{finetuner_forward.2} parent=5 // pred_fallthru
      _
    %p781 = scmp.le.s32.totalorder 2, %s15
    // Predicated region
    $region61: #{finetuner_forward.2} parent=5 // pred_check
      %p782 = pneg %p781
    $region62: #{finetuner_forward.2} parent=5 // pred_check_branch
      %784 = sbr.rel (%p782) target = $region64
    $region63: #{finetuner_forward.2} parent=5 // pred_region
      %s785 = ssub.s32 %s15, 2
      // Predicated region
      $region65: #{finetuner_forward.2} parent=63 // pred_check
        %p786 = pneg %p243
      $region66: #{finetuner_forward.2} parent=63 // pred_check_branch
        %788 = sbr.rel (%p786) target = $region68
      $region67: #{finetuner_forward.2} parent=63 // pred_region
        %s789 = smul.u32 2, %s21
        %p790 = scmp.lt.s32.totalorder %s789, 7
        %s791 = scalar_select %p790, %s789, 7
        %s792 = smul.addr %s791, 2
        %s793 = smul.addr %s792, 4
        %s794 = scalar_lea.vmem %s9, %s793
      $region68: #{finetuner_forward.2} parent=63 // pred_fallthru
        _
    $region64: #{finetuner_forward.2} parent=5 // pred_fallthru
      _
  $region6: #{finetuner_forward.2} parent=0 // loop_footer
    %s19 = sadd.s32 1, %s15
  $region7: #{finetuner_forward.2} parent=0 // loop_footer_branch
    %14 = sbr.rel target = $region3
  $region8: #{finetuner_forward.2} parent=0 // loop_exit
    _

// kernel: finetuner_forward.3
$region0: #{finetuner_forward.3}
  #allocation0 [shape = 'u32[]', space=smem, size = 0x4, offset = 0x4, fixed_abs, tag = 'smem constant byte address 0x4 - core index']
  #allocation1 [shape = 'u32[144,128]{1,0:T(1,128)}', space=vmem, size = 0x12000, scoped, tag = 'internal scratch']
  #allocation2 [shape = 'f32[16,128]{1,0:T(8,128)}', space=vmem, size = 0x2000, scoped, tag = 'scratch operand']
  #allocation3 [shape = 'f32[16,128]{1,0:T(8,128)}', space=vmem, size = 0x2000, scoped, tag = 'scratch operand']
  #allocation4 [shape = 'f32[64,512]{1,0:T(8,128)}', space=vmem, size = 0x20000, scoped, tag = 'scratch operand']
  #allocation5 [shape = 'f32[64,128]{1,0:T(8,128)}', space=vmem, size = 0x8000, scoped, tag = 'scratch operand']
  %s0 = inlined_call_operand.vmem [shape: bf16[8,16,32], index: 0, kind: input, shape index: {}]
  %s1 = inlined_call_operand.vmem [shape: bf16[32,512], index: 1, kind: input, shape index: {}]
  %s2 = inlined_call_operand.vmem [shape: bf16[128,512], index: 2, kind: input, shape index: {}]
  %s3 = inlined_call_operand.vmem [shape: f32[1,512], index: 3, kind: input, shape index: {}]
  %s4 = inlined_call_operand.vmem [shape: bf16[128,128], index: 4, kind: input, shape index: {}]
  %s5 = inlined_call_operand.vmem [shape: f32[1,128], index: 5, kind: input, shape index: {}]
  %s6 = inlined_call_operand.vmem [shape: f32[8,16,128], index: 6, kind: output, shape index: {}]
  %s7 = sld [smem:[#allocation0]]
  $region61: #{finetuner_forward.3} parent=0
    _
  %s9 = ssub.s32 1, %s7
  %s10 = scalar_select 0, %s9, %s7
  loop: start=0, step=1, limit=4
  $region2: #{finetuner_forward.3} parent=0 // loop_pre_header
    _
  $region3: #{finetuner_forward.3} parent=0 // loop_header
    %s12 = sphi 0, %s16
    %p13 = scmp.ge.s32.totalorder %s12, 4
    %s19 = sphi 0, %s31
    %s20 = sphi 0, %s27
    %s21 = sphi 0, %s19
    %s22 = sphi 0, %s20
    %s23 = sphi 0, %s21
    %s24 = sphi 0, %s22
    %s36 = sphi 0, %s38
    %s39 = sphi 0, %s36
    %s40 = sphi 0, %s39
    %s56 = sphi 0, %s40
    %s60 = sphi 0, %s60
    %s62 = sphi 0, %s60
    %s63 = sphi 0, %s62
    %s77 = sphi 0, %s63
    %s81 = sphi 0, %s81
    %s83 = sphi 0, %s81
    %s84 = sphi 0, %s83
    %s98 = sphi 0, %s84
    %s102 = sphi 0, %s102
    %s104 = sphi 0, %s102
    %s105 = sphi 0, %s104
    %s119 = sphi 0, %s105
    %s123 = sphi 0, %s123
    %s125 = sphi 0, %s123
    %s126 = sphi 0, %s125
    %s140 = sphi 0, %s126
    %s144 = sphi 0, %s144
    %s146 = sphi 0, %s144
    %s147 = sphi 0, %s146
    %s161 = sphi 0, %s147
    %s169 = sphi 0, %s171
    %s172 = sphi 0, %s169
    %s173 = sphi 0, %s172
    %s189 = sphi 0, %s173
  $region4: #{finetuner_forward.3} parent=0 // loop_header_branch
    %15 = sbr.rel (%p13) target = $region8
  $region5: #{finetuner_forward.3} parent=0 // loop_body
    %s17 = ssub.s32 %s12, 1
    %s18 = ssub.s32 %s12, 2
    %s25 = sadd.s32 1, %s20
    %p26 = scmp.ge.s32.totalorder %s25, 2
    %s27 = scalar_select %p26, 0, %s25
    %s28 = sadd.s32 1, %s19
    %s29 = scalar_select %p26, %s28, %s19
    %p30 = scmp.ge.s32.totalorder %s29, 1
    %s31 = scalar_select %p30, 0, %s29
    %s32 = ssub.s32 %s20, %s27
    %s33 = ssub.s32 %s19, %s31
    %s34 = sor.u32 %s32, %s33
    %p35 = scmp.eq.s32.totalorder %s34, 0
    %s37 = sadd.s32 %s36, 1
    %s38 = scalar_select %p35, %s36, %s37
    %p41 = pneg %p35
    %p42 = scmp.eq.s32.totalorder %s12, 1
    %p43 = por %p41, %p42
    %p44 = scmp.ne.s32.totalorder %s36, %s39
    %p45 = scmp.eq.s32.totalorder %s12, 0
    %p46 = por %p44, %p45
    %p47 = scmp.ne.s32.totalorder %s36, %s39
    %p48 = scmp.eq.s32.totalorder %s17, 1
    %p49 = por %p47, %p48
    %p50 = scmp.ne.s32.totalorder %s39, %s40
    %p51 = scmp.eq.s32.totalorder %s17, 0
    %p52 = por %p50, %p51
    %p53 = scmp.ne.s32.totalorder %s39, %s40
    %p54 = scmp.eq.s32.totalorder %s18, 1
    %p55 = por %p53, %p54
    %p57 = scmp.ne.s32.totalorder %s40, %s56
    %p58 = scmp.eq.s32.totalorder %s18, 0
    %p59 = por %p57, %p58
    %s61 = sadd.s32 %s60, 1
    %p64 = scmp.eq.s32.totalorder %s12, 1
    %p65 = scmp.ne.s32.totalorder %s60, %s62
    %p66 = scmp.eq.s32.totalorder %s12, 0
    %p67 = por %p65, %p66
    %p68 = scmp.ne.s32.totalorder %s60, %s62
    %p69 = scmp.eq.s32.totalorder %s17, 1
    %p70 = por %p68, %p69
    %p71 = scmp.ne.s32.totalorder %s62, %s63
    %p72 = scmp.eq.s32.totalorder %s17, 0
    %p73 = por %p71, %p72
    %p74 = scmp.ne.s32.totalorder %s62, %s63
    %p75 = scmp.eq.s32.totalorder %s18, 1
    %p76 = por %p74, %p75
    %p78 = scmp.ne.s32.totalorder %s63, %s77
    %p79 = scmp.eq.s32.totalorder %s18, 0
    %p80 = por %p78, %p79
    %s82 = sadd.s32 %s81, 1
    %p85 = scmp.eq.s32.totalorder %s12, 1
    %p86 = scmp.ne.s32.totalorder %s81, %s83
    %p87 = scmp.eq.s32.totalorder %s12, 0
    %p88 = por %p86, %p87
    %p89 = scmp.ne.s32.totalorder %s81, %s83
    %p90 = scmp.eq.s32.totalorder %s17, 1
    %p91 = por %p89, %p90
    %p92 = scmp.ne.s32.totalorder %s83, %s84
    %p93 = scmp.eq.s32.totalorder %s17, 0
    %p94 = por %p92, %p93
    %p95 = scmp.ne.s32.totalorder %s83, %s84
    %p96 = scmp.eq.s32.totalorder %s18, 1
    %p97 = por %p95, %p96
    %p99 = scmp.ne.s32.totalorder %s84, %s98
    %p100 = scmp.eq.s32.totalorder %s18, 0
    %p101 = por %p99, %p100
    %s103 = sadd.s32 %s102, 1
    %p106 = scmp.eq.s32.totalorder %s12, 1
    %p107 = scmp.ne.s32.totalorder %s102, %s104
    %p108 = scmp.eq.s32.totalorder %s12, 0
    %p109 = por %p107, %p108
    %p110 = scmp.ne.s32.totalorder %s102, %s104
    %p111 = scmp.eq.s32.totalorder %s17, 1
    %p112 = por %p110, %p111
    %p113 = scmp.ne.s32.totalorder %s104, %s105
    %p114 = scmp.eq.s32.totalorder %s17, 0
    %p115 = por %p113, %p114
    %p116 = scmp.ne.s32.totalorder %s104, %s105
    %p117 = scmp.eq.s32.totalorder %s18, 1
    %p118 = por %p116, %p117
    %p120 = scmp.ne.s32.totalorder %s105, %s119
    %p121 = scmp.eq.s32.totalorder %s18, 0
    %p122 = por %p120, %p121
    %s124 = sadd.s32 %s123, 1
    %p127 = scmp.eq.s32.totalorder %s12, 1
    %p128 = scmp.ne.s32.totalorder %s123, %s125
    %p129 = scmp.eq.s32.totalorder %s12, 0
    %p130 = por %p128, %p129
    %p131 = scmp.ne.s32.totalorder %s123, %s125
    %p132 = scmp.eq.s32.totalorder %s17, 1
    %p133 = por %p131, %p132
    %p134 = scmp.ne.s32.totalorder %s125, %s126
    %p135 = scmp.eq.s32.totalorder %s17, 0
    %p136 = por %p134, %p135
    %p137 = scmp.ne.s32.totalorder %s125, %s126
    %p138 = scmp.eq.s32.totalorder %s18, 1
    %p139 = por %p137, %p138
    %p141 = scmp.ne.s32.totalorder %s126, %s140
    %p142 = scmp.eq.s32.totalorder %s18, 0
    %p143 = por %p141, %p142
    %s145 = sadd.s32 %s144, 1
    %p148 = scmp.eq.s32.totalorder %s12, 1
    %p149 = scmp.ne.s32.totalorder %s144, %s146
    %p150 = scmp.eq.s32.totalorder %s12, 0
    %p151 = por %p149, %p150
    %p152 = scmp.ne.s32.totalorder %s144, %s146
    %p153 = scmp.eq.s32.totalorder %s17, 1
    %p154 = por %p152, %p153
    %p155 = scmp.ne.s32.totalorder %s146, %s147
    %p156 = scmp.eq.s32.totalorder %s17, 0
    %p157 = por %p155, %p156
    %p158 = scmp.ne.s32.totalorder %s146, %s147
    %p159 = scmp.eq.s32.totalorder %s18, 1
    %p160 = por %p158, %p159
    %p162 = scmp.ne.s32.totalorder %s147, %s161
    %p163 = scmp.eq.s32.totalorder %s18, 0
    %p164 = por %p162, %p163
    %s165 = ssub.s32 %s20, %s27
    %s166 = ssub.s32 %s19, %s31
    %s167 = sor.u32 %s165, %s166
    %p168 = scmp.eq.s32.totalorder %s167, 0
    %s170 = sadd.s32 %s169, 1
    %s171 = scalar_select %p168, %s169, %s170
    %p174 = pneg %p168
    %p175 = scmp.eq.s32.totalorder %s12, 1
    %p176 = por %p174, %p175
    %p177 = scmp.ne.s32.totalorder %s169, %s172
    %p178 = scmp.eq.s32.totalorder %s12, 0
    %p179 = por %p177, %p178
    %p180 = scmp.ne.s32.totalorder %s169, %s172
    %p181 = scmp.eq.s32.totalorder %s17, 1
    %p182 = por %p180, %p181
    %p183 = scmp.ne.s32.totalorder %s172, %s173
    %p184 = scmp.eq.s32.totalorder %s17, 0
    %p185 = por %p183, %p184
    %p186 = scmp.ne.s32.totalorder %s172, %s173
    %p187 = scmp.eq.s32.totalorder %s18, 1
    %p188 = por %p186, %p187
    %p190 = scmp.ne.s32.totalorder %s173, %s189
    %p191 = scmp.eq.s32.totalorder %s18, 0
    %p192 = por %p190, %p191
    %p193 = scmp.le.s32.totalorder 1, %s12
    %p194 = scmp.lt.s32.totalorder %s12, 3
    %p195 = pnand %p193, %p194
    %p196 = pneg %p195
    // Predicated region
    $region9: #{finetuner_forward.3} parent=5 // pred_check
      _
    $region10: #{finetuner_forward.3} parent=5 // pred_check_branch
      %198 = sbr.rel (%p195) target = $region12
    $region11: #{finetuner_forward.3} parent=5 // pred_region
      %s199 = ssub.s32 %s12, 1
      // Predicated region
      $region13: #{finetuner_forward.3} parent=11 // pred_check
        %p200 = pneg %p73
      $region14: #{finetuner_forward.3} parent=11 // pred_check_branch
        %202 = sbr.rel (%p200) target = $region16
      $region15: #{finetuner_forward.3} parent=11 // pred_region
        _
      $region16: #{finetuner_forward.3} parent=11 // pred_fallthru
        _
      // Predicated region
      $region17: #{finetuner_forward.3} parent=11 // pred_check
        %p203 = pneg %p94
      $region18: #{finetuner_forward.3} parent=11 // pred_check_branch
        %205 = sbr.rel (%p203) target = $region20
      $region19: #{finetuner_forward.3} parent=11 // pred_region
        _
      $region20: #{finetuner_forward.3} parent=11 // pred_fallthru
        _
      // Predicated region
      $region21: #{finetuner_forward.3} parent=11 // pred_check
        %p206 = pneg %p115
      $region22: #{finetuner_forward.3} parent=11 // pred_check_branch
        %208 = sbr.rel (%p206) target = $region24
      $region23: #{finetuner_forward.3} parent=11 // pred_region
        _
      $region24: #{finetuner_forward.3} parent=11 // pred_fallthru
        _
      // Predicated region
      $region25: #{finetuner_forward.3} parent=11 // pred_check
        %p209 = pneg %p136
      $region26: #{finetuner_forward.3} parent=11 // pred_check_branch
        %211 = sbr.rel (%p209) target = $region28
      $region27: #{finetuner_forward.3} parent=11 // pred_region
        _
      $region28: #{finetuner_forward.3} parent=11 // pred_fallthru
        _
      // Predicated region
      $region29: #{finetuner_forward.3} parent=11 // pred_check
        %p212 = pneg %p157
      $region30: #{finetuner_forward.3} parent=11 // pred_check_branch
        %214 = sbr.rel (%p212) target = $region32
      $region31: #{finetuner_forward.3} parent=11 // pred_region
        _
      $region32: #{finetuner_forward.3} parent=11 // pred_fallthru
        _
    $region12: #{finetuner_forward.3} parent=5 // pred_fallthru
      _
    %p215 = scmp.lt.s32.totalorder %s12, 2
    // Predicated region
    $region33: #{finetuner_forward.3} parent=5 // pred_check
      %p216 = pneg %p215
    $region34: #{finetuner_forward.3} parent=5 // pred_check_branch
      %218 = sbr.rel (%p216) target = $region36
    $region35: #{finetuner_forward.3} parent=5 // pred_region
      // Predicated region
      $region37: #{finetuner_forward.3} parent=35 // pred_check
        %p219 = pneg %p46
      $region38: #{finetuner_forward.3} parent=35 // pred_check_branch
        %221 = sbr.rel (%p219) target = $region40
      $region39: #{finetuner_forward.3} parent=35 // pred_region
        %s222 = smul.u32 4, %s20
        %s223 = smul.u32 2, %s19
        %p224 = scmp.lt.s32.totalorder %s222, 7
        %s225 = scalar_select %p224, %s222, 7
        %p226 = scmp.lt.s32.totalorder %s223, 1
        %s227 = scalar_select %p226, %s223, 1
        %s228 = smul.addr %s225, 2
        %s229 = sadd.s32 %s227, %s228
        %s230 = smul.addr %s229, 4
        %s231 = scalar_lea.vmem %s0, %s230
        %s232 = smul.u32 4, %s20
        %s233 = smul.u32 2, %s19
      $region40: #{finetuner_forward.3} parent=35 // pred_fallthru
        _
    $region36: #{finetuner_forward.3} parent=5 // pred_fallthru
      _
    %p234 = scmp.le.s32.totalorder 1, %s12
    %p235 = scmp.lt.s32.totalorder %s12, 3
    %p236 = pnand %p234, %p235
    %p237 = pneg %p236
    // Predicated region
    $region41: #{finetuner_forward.3} parent=5 // pred_check
      _
    $region42: #{finetuner_forward.3} parent=5 // pred_check_branch
      %239 = sbr.rel (%p236) target = $region44
    $region43: #{finetuner_forward.3} parent=5 // pred_region
      %s240 = ssub.s32 %s12, 1
      %s241 = smul.u32 4, %s22
      %s242 = smul.u32 2, %s21
      %p243 = scmp.lt.s32.totalorder %s241, 7
      %s244 = scalar_select %p243, %s241, 7
      %p245 = scmp.lt.s32.totalorder %s242, 1
      %s246 = scalar_select %p245, %s242, 1
      %s247 = smul.addr %s244, 2
      %s248 = sadd.s32 %s246, %s247
      %s249 = smul.addr %s248, 4
      %s250 = scalar_lea.vmem %s0, %s249
      %p251 = pneg %p52
      %p252 = pneg %p49
      %p253 = pneg %p73
      %p254 = pneg %p70
      %p255 = pneg %p94
      %p256 = pneg %p91
      %p257 = pneg %p115
      %p258 = pneg %p112
      %p259 = pneg %p136
      %p260 = pneg %p133
      %p261 = pneg %p157
      %p262 = pneg %p154
      %p263 = pneg %p185
      %p264 = pneg %p182
      %s265 = smul.u32 4, %s22
      %s266 = smul.u32 2, %s21
      %p267 = scmp.lt.s32.totalorder %s265, 7
      %s268 = scalar_select %p267, %s265, 7
      %p269 = scmp.lt.s32.totalorder %s266, 1
      %s270 = scalar_select %p269, %s266, 1
      %s271 = smul.addr %s268, 2
      %s272 = sadd.s32 %s270, %s271
      %s273 = smul.addr %s272, 8
      %s274 = scalar_lea.vmem %s6, %s273
      %s275 = smul.u32 4, %s22
      %s276 = smul.u32 2, %s21
      %p277 = scmp.lt.s32.totalorder %s275, 7
      %s278 = scalar_select %p277, %s275, 7
      %p279 = scmp.lt.s32.totalorder %s276, 1
      %s280 = scalar_select %p279, %s276, 1
      %s281 = smul.addr %s278, 2
      %s282 = sadd.s32 %s280, %s281
      %s283 = smul.addr %s282, 4
      %s284 = scalar_lea.vmem %s0, %s283
      %s285 = smul.u32 4, %s22
      %s286 = smul.u32 2, %s21
      %s287 = smul.u32 4, %s22
      %s288 = smul.u32 2, %s21
      %p289 = scmp.lt.s32.totalorder %s287, 7
      %s290 = scalar_select %p289, %s287, 7
      %p291 = scmp.lt.s32.totalorder %s288, 1
      %s292 = scalar_select %p291, %s288, 1
      %s293 = smul.addr %s290, 2
      %s294 = sadd.s32 %s292, %s293
      %s295 = smul.addr %s294, 8
      %s296 = scalar_lea.vmem %s6, %s295
      %s297 = smul.u32 4, %s22
      %s298 = smul.u32 2, %s21
      %p300 = scmp.eq.s32.totalorder %s22, 0
      // Predicated region
      $region45: #{finetuner_forward.3} parent=43 // pred_check
        %p301 = pneg %p300
      $region46: #{finetuner_forward.3} parent=43 // pred_check_branch
        %303 = sbr.rel (%p301) target = $region48
      $region47: #{finetuner_forward.3} parent=43 // pred_region
        %304 = vst [vmem:[#allocation2] sm:$0xff] 0.0
        %305 = vst [vmem:[#allocation2 + $0x8] sm:$0xff] 0.0
        %306 = vst [vmem:[#allocation3] sm:$0xff] 0.0
        %307 = vst [vmem:[#allocation3 + $0x8] sm:$0xff] 0.0
      $region48: #{finetuner_forward.3} parent=43 // pred_fallthru
        _
      %v308 = vld [vmem:[%s284] sm:$0xf]
      %v309 = vld [vmem:[%s284 + $0x4] sm:$0xf]
      %v310 = vld [vmem:[%s284 + $0x8] sm:$0xf]
      %v311 = vld [vmem:[%s284 + $0xc] sm:$0xf]
      %v312 = vld [vmem:[%s284 + $0x10] sm:$0xf]
      %v313 = vld [vmem:[%s284 + $0x14] sm:$0xf]
      %v314 = vld [vmem:[%s284 + $0x18] sm:$0xf]
      %v315 = vld [vmem:[%s284 + $0x1c] sm:$0xf]
      %v316 = vld [vmem:[%s1] sm:$0xff]
      %v317 = vld [vmem:[%s1 + $0x8] sm:$0xff]
      %v318 = vld [vmem:[%s1 + $0x10] sm:$0xff]
      %v319 = vld [vmem:[%s1 + $0x18] sm:$0xff]
      %v320 = vld [vmem:[%s1 + $0x20] sm:$0xff]
      %v321 = vld [vmem:[%s1 + $0x28] sm:$0xff]
      %v322 = vld [vmem:[%s1 + $0x30] sm:$0xff]
      %v323 = vld [vmem:[%s1 + $0x38] sm:$0xff]
      %v324 = vld [vmem:[%s3] sm:$0xf]
      %v326 = vlaneseq
      %v327 = vshrl.u32 %v326, 7
      %v328 = vsub.s32 0, %v327
      %v329 = vrot.slane %v324, %v328
      %v330 = vlaneseq
      %v331 = vshrl.u32 %v330, 7
      %v332 = vsub.s32 1, %v331
      %v333 = vrot.slane %v324, %v332
      %v334 = vlaneseq
      %v335 = vshrl.u32 %v334, 7
      %v336 = vsub.s32 2, %v335
      %v337 = vrot.slane %v324, %v336
      %v338 = vlaneseq
      %v339 = vshrl.u32 %v338, 7
      %v340 = vsub.s32 3, %v339
      %v341 = vrot.slane %v324, %v340
      %v354 = vunpack.c.l.b16 %v308
      %v355 = vunpack.c.l.b16 %v309
      %v356 = vunpack.c.l.b16 %v310
      %v357 = vunpack.c.l.b16 %v311
      %v358 = vunpack.c.l.b16 %v312
      %v359 = vunpack.c.l.b16 %v313
      %v360 = vunpack.c.l.b16 %v314
      %v361 = vunpack.c.l.b16 %v315
      %v362 = vpack.c.b16 %v355, %v354
      %v363 = vpack.c.b16 %v357, %v356
      %v364 = vpack.c.b16 %v359, %v358
      %v365 = vpack.c.b16 %v361, %v360
      %v374 = vunpack.c.l.b16 %v316
      %v375 = vunpack.c.h.b16 %v316
      %v376 = vunpack.c.l.b16 %v317
      %v377 = vunpack.c.h.b16 %v317
      %v378 = vunpack.c.l.b16 %v318
      %v379 = vunpack.c.h.b16 %v318
      %v380 = vunpack.c.l.b16 %v319
      %v381 = vunpack.c.h.b16 %v319
      %v382 = vunpack.c.l.b16 %v320
      %v383 = vunpack.c.h.b16 %v320
      %v384 = vunpack.c.l.b16 %v321
      %v385 = vunpack.c.h.b16 %v321
      %v386 = vunpack.c.l.b16 %v322
      %v387 = vunpack.c.h.b16 %v322
      %v388 = vunpack.c.l.b16 %v323
      %v389 = vunpack.c.h.b16 %v323
      %v390 = vpack.c.b16 %v378, %v374
      %v391 = vpack.c.b16 %v379, %v375
      %v392 = vpack.c.b16 %v380, %v376
      %v393 = vpack.c.b16 %v381, %v377
      %v394 = vpack.c.b16 %v386, %v382
      %v395 = vpack.c.b16 %v387, %v383
      %v396 = vpack.c.b16 %v388, %v384
      %v397 = vpack.c.b16 %v389, %v385
      %vm406 = vcmask 261120
      %v408 = vsel %vm406, %v362, 0
      %v411 = vsel %vm406, %v363, 0
      %v414 = vsel %vm406, %v364, 0
      %v417 = vsel %vm406, %v365, 0
      %419 = vmatprep.subr.bf16.mxu0 %v391
      %420 = vmatpush1.bf16.msra.mxu0 %v390
      %421 = vmatprep.subr.bf16.mxu0 %v395
      %422 = vmatpush1.bf16.msra.mxu0 %v394
      %423 = vmatprep.subr.bf16.mxu0 0
      %424 = vmatpush1.bf16.msra.mxu0 0
      %425 = vmatprep.subr.bf16.mxu0 0
      %426 = vmatpush1.bf16.msra.mxu0 0
      %427 = vmatprep.subr.bf16.mxu0 0
      %428 = vmatpush1.bf16.msra.mxu0 0
      %429 = vmatprep.subr.bf16.mxu0 0
      %430 = vmatpush1.bf16.msra.mxu0 0
      %431 = vmatprep.subr.bf16.mxu0 0
      %432 = vmatpush1.bf16.msra.mxu0 0
      %433 = vmatprep.subr.bf16.mxu0 0
      %434 = vmatpush1.bf16.msra.mxu0 0
      %435 = vmatprep.subr.bf16.mxu0 0
      %436 = vmatpush1.bf16.msra.mxu0 0
      %437 = vmatprep.subr.bf16.mxu0 0
      %438 = vmatpush1.bf16.msra.mxu0 0
      %439 = vmatprep.subr.bf16.mxu0 0
      %440 = vmatpush1.bf16.msra.mxu0 0
      %441 = vmatprep.subr.bf16.mxu0 0
      %442 = vmatpush1.bf16.msra.mxu0 0
      %443 = vmatprep.subr.bf16.mxu0 0
      %444 = vmatpush1.bf16.msra.mxu0 0
      %445 = vmatprep.subr.bf16.mxu0 0
      %446 = vmatpush1.bf16.msra.mxu0 0
      %447 = vmatprep.subr.bf16.mxu0 0
      %448 = vmatpush1.bf16.msra.mxu0 0
      %449 = vmatprep.subr.bf16.mxu0 0
      %450 = vmatpush1.bf16.msra.mxu0 0
      %451 = vmatprep.mubr.bf16.mxu0 0
      %452 = vmatmul.mubr.bf16.gmra.mrb[0].mxu0 %v408
      %v453 = vpop.f32.mrb[0].mxu0
      %v454 = vadd.f32 %v329, %v453
      %v455 = vpop.f32.mrb[0].mxu0
      %v456 = vadd.f32 %v333, %v455
      %v457 = vpop.f32.mrb[0].mxu0
      %v458 = vadd.f32 %v329, %v457
      %v459 = vpop.f32.mrb[0].mxu0
      %v460 = vadd.f32 %v333, %v459
      %461 = vmatprep.mubr.bf16.mxu0 0
      %462 = vmatmul.mubr.bf16.gmra.mrb[0].mxu0 %v411
      %v463 = vpop.f32.mrb[0].mxu0
      %v464 = vadd.f32 %v329, %v463
      %v465 = vpop.f32.mrb[0].mxu0
      %v466 = vadd.f32 %v333, %v465
      %v467 = vpop.f32.mrb[0].mxu0
      %v468 = vadd.f32 %v329, %v467
      %v469 = vpop.f32.mrb[0].mxu0
      %v470 = vadd.f32 %v333, %v469
      %471 = vmatprep.mubr.bf16.mxu0 0
      %472 = vmatmul.mubr.bf16.gmra.mrb[0].mxu0 %v414
      %v473 = vpop.f32.mrb[0].mxu0
      %v474 = vadd.f32 %v329, %v473
      %v475 = vpop.f32.mrb[0].mxu0
      %v476 = vadd.f32 %v333, %v475
      %v477 = vpop.f32.mrb[0].mxu0
      %v478 = vadd.f32 %v329, %v477
      %v479 = vpop.f32.mrb[0].mxu0
      %v480 = vadd.f32 %v333, %v479
      %481 = vmatprep.mubr.bf16.mxu0 0
      %482 = vmatmul.mubr.bf16.gmra.mrb[0].mxu0 %v417
      %v483 = vpop.f32.mrb[0].mxu0
      %v484 = vadd.f32 %v329, %v483
      %v485 = vpop.f32.mrb[0].mxu0
      %v486 = vadd.f32 %v333, %v485
      %v487 = vpop.f32.mrb[0].mxu0
      %v488 = vadd.f32 %v329, %v487
      %v489 = vpop.f32.mrb[0].mxu0
      %v490 = vadd.f32 %v333, %v489
      %491 = vdwg.mxu0
      %492 = vmatprep.subr.bf16.mxu0 %v393
      %493 = vmatpush1.bf16.msra.mxu0 %v392
      %494 = vmatprep.subr.bf16.mxu0 %v397
      %495 = vmatpush1.bf16.msra.mxu0 %v396
      %496 = vmatprep.subr.bf16.mxu0 0
      %497 = vmatpush1.bf16.msra.mxu0 0
      %498 = vmatprep.subr.bf16.mxu0 0
      %499 = vmatpush1.bf16.msra.mxu0 0
      %500 = vmatprep.subr.bf16.mxu0 0
      %501 = vmatpush1.bf16.msra.mxu0 0
      %502 = vmatprep.subr.bf16.mxu0 0
      %503 = vmatpush1.bf16.msra.mxu0 0
      %504 = vmatprep.subr.bf16.mxu0 0
      %505 = vmatpush1.bf16.msra.mxu0 0
      %506 = vmatprep.subr.bf16.mxu0 0
      %507 = vmatpush1.bf16.msra.mxu0 0
      %508 = vmatprep.subr.bf16.mxu0 0
      %509 = vmatpush1.bf16.msra.mxu0 0
      %510 = vmatprep.subr.bf16.mxu0 0
      %511 = vmatpush1.bf16.msra.mxu0 0
      %512 = vmatprep.subr.bf16.mxu0 0
      %513 = vmatpush1.bf16.msra.mxu0 0
      %514 = vmatprep.subr.bf16.mxu0 0
      %515 = vmatpush1.bf16.msra.mxu0 0
      %516 = vmatprep.subr.bf16.mxu0 0
      %517 = vmatpush1.bf16.msra.mxu0 0
      %518 = vmatprep.subr.bf16.mxu0 0
      %519 = vmatpush1.bf16.msra.mxu0 0
      %520 = vmatprep.subr.bf16.mxu0 0
      %521 = vmatpush1.bf16.msra.mxu0 0
      %522 = vmatprep.subr.bf16.mxu0 0
      %523 = vmatpush1.bf16.msra.mxu0 0
      %524 = vmatprep.mubr.bf16.mxu0 0
      %525 = vmatmul.mubr.bf16.gmra.mrb[0].mxu0 %v408
      %v526 = vpop.f32.mrb[0].mxu0
      %v527 = vadd.f32 %v337, %v526
      %v528 = vpop.f32.mrb[0].mxu0
      %v529 = vadd.f32 %v341, %v528
      %v530 = vpop.f32.mrb[0].mxu0
      %v531 = vadd.f32 %v337, %v530
      %v532 = vpop.f32.mrb[0].mxu0
      %v533 = vadd.f32 %v341, %v532
      %534 = vmatprep.mubr.bf16.mxu0 0
      %535 = vmatmul.mubr.bf16.gmra.mrb[0].mxu0 %v411
      %v536 = vpop.f32.mrb[0].mxu0
      %v537 = vadd.f32 %v337, %v536
      %v538 = vpop.f32.mrb[0].mxu0
      %v539 = vadd.f32 %v341, %v538
      %v540 = vpop.f32.mrb[0].mxu0
      %v541 = vadd.f32 %v337, %v540
      %v542 = vpop.f32.mrb[0].mxu0
      %v543 = vadd.f32 %v341, %v542
      %544 = vmatprep.mubr.bf16.mxu0 0
      %545 = vmatmul.mubr.bf16.gmra.mrb[0].mxu0 %v414
      %v546 = vpop.f32.mrb[0].mxu0
      %v547 = vadd.f32 %v337, %v546
      %v548 = vpop.f32.mrb[0].mxu0
      %v549 = vadd.f32 %v341, %v548
      %v550 = vpop.f32.mrb[0].mxu0
      %v551 = vadd.f32 %v337, %v550
      %v552 = vpop.f32.mrb[0].mxu0
      %v553 = vadd.f32 %v341, %v552
      %554 = vmatprep.mubr.bf16.mxu0 0
      %555 = vmatmul.mubr.bf16.gmra.mrb[0].mxu0 %v417
      %v556 = vpop.f32.mrb[0].mxu0
      %v557 = vadd.f32 %v337, %v556
      %v558 = vpop.f32.mrb[0].mxu0
      %v559 = vadd.f32 %v341, %v558
      %v560 = vpop.f32.mrb[0].mxu0
      %v561 = vadd.f32 %v337, %v560
      %v562 = vpop.f32.mrb[0].mxu0
      %v563 = vadd.f32 %v341, %v562
      %564 = vdwg.mxu0
      %565 = vst [vmem:[#allocation4] sm:$0xff] %v454
      %566 = vst [vmem:[#allocation4 + $0x8] sm:$0xff] %v456
      %567 = vst [vmem:[#allocation4 + $0x10] sm:$0xff] %v527
      %568 = vst [vmem:[#allocation4 + $0x18] sm:$0xff] %v529
      %569 = vst [vmem:[#allocation4 + $0x20] sm:$0xff] %v458
      %570 = vst [vmem:[#allocation4 + $0x28] sm:$0xff] %v460
      %571 = vst [vmem:[#allocation4 + $0x30] sm:$0xff] %v531
      %572 = vst [vmem:[#allocation4 + $0x38] sm:$0xff] %v533
      %573 = vst [vmem:[#allocation4 + $0x40] sm:$0xff] %v464
      %574 = vst [vmem:[#allocation4 + $0x48] sm:$0xff] %v466
      %575 = vst [vmem:[#allocation4 + $0x50] sm:$0xff] %v537
      %576 = vst [vmem:[#allocation4 + $0x58] sm:$0xff] %v539
      %577 = vst [vmem:[#allocation4 + $0x60] sm:$0xff] %v468
      %578 = vst [vmem:[#allocation4 + $0x68] sm:$0xff] %v470
      %579 = vst [vmem:[#allocation4 + $0x70] sm:$0xff] %v541
      %580 = vst [vmem:[#allocation4 + $0x78] sm:$0xff] %v543
      %581 = vst [vmem:[#allocation4 + $0x80] sm:$0xff] %v474
      %582 = vst [vmem:[#allocation4 + $0x88] sm:$0xff] %v476
      %583 = vst [vmem:[#allocation4 + $0x90] sm:$0xff] %v547
      %584 = vst [vmem:[#allocation4 + $0x98] sm:$0xff] %v549
      %585 = vst [vmem:[#allocation4 + $0xa0] sm:$0xff] %v478
      %586 = vst [vmem:[#allocation4 + $0xa8] sm:$0xff] %v480
      %587 = vst [vmem:[#allocation4 + $0xb0] sm:$0xff] %v551
      %588 = vst [vmem:[#allocation4 + $0xb8] sm:$0xff] %v553
      %589 = vst [vmem:[#allocation4 + $0xc0] sm:$0xff] %v484
      %590 = vst [vmem:[#allocation4 + $0xc8] sm:$0xff] %v486
      %591 = vst [vmem:[#allocation4 + $0xd0] sm:$0xff] %v557
      %592 = vst [vmem:[#allocation4 + $0xd8] sm:$0xff] %v559
      %593 = vst [vmem:[#allocation4 + $0xe0] sm:$0xff] %v488
      %594 = vst [vmem:[#allocation4 + $0xe8] sm:$0xff] %v490
      %595 = vst [vmem:[#allocation4 + $0xf0] sm:$0xff] %v561
      %596 = vst [vmem:[#allocation4 + $0xf8] sm:$0xff] %v563
      %v597 = vld [vmem:[%s2] sm:$0xff]
      %v598 = vld [vmem:[%s2 + $0x8] sm:$0xff]
      %v599 = vld [vmem:[%s2 + $0x10] sm:$0xff]
      %v600 = vld [vmem:[%s2 + $0x18] sm:$0xff]
      %v601 = vld [vmem:[%s2 + $0x20] sm:$0xff]
      %v602 = vld [vmem:[%s2 + $0x28] sm:$0xff]
      %v603 = vld [vmem:[%s2 + $0x30] sm:$0xff]
      %v604 = vld [vmem:[%s2 + $0x38] sm:$0xff]
      %v605 = vld [vmem:[%s2 + $0x40] sm:$0xff]
      %v606 = vld [vmem:[%s2 + $0x48] sm:$0xff]
      %v607 = vld [vmem:[%s2 + $0x50] sm:$0xff]
      %v608 = vld [vmem:[%s2 + $0x58] sm:$0xff]
      %v609 = vld [vmem:[%s2 + $0x60] sm:$0xff]
      %v610 = vld [vmem:[%s2 + $0x68] sm:$0xff]
      %v611 = vld [vmem:[%s2 + $0x70] sm:$0xff]
      %v612 = vld [vmem:[%s2 + $0x78] sm:$0xff]
      %v613 = vld [vmem:[%s2 + $0x80] sm:$0xff]
      %v614 = vld [vmem:[%s2 + $0x88] sm:$0xff]
      %v615 = vld [vmem:[%s2 + $0x90] sm:$0xff]
      %v616 = vld [vmem:[%s2 + $0x98] sm:$0xff]
      %v617 = vld [vmem:[%s2 + $0xa0] sm:$0xff]
      %v618 = vld [vmem:[%s2 + $0xa8] sm:$0xff]
      %v619 = vld [vmem:[%s2 + $0xb0] sm:$0xff]
      %v620 = vld [vmem:[%s2 + $0xb8] sm:$0xff]
      %v621 = vld [vmem:[%s2 + $0xc0] sm:$0xff]
      %v622 = vld [vmem:[%s2 + $0xc8] sm:$0xff]
      %v623 = vld [vmem:[%s2 + $0xd0] sm:$0xff]
      %v624 = vld [vmem:[%s2 + $0xd8] sm:$0xff]
      %v625 = vld [vmem:[%s2 + $0xe0] sm:$0xff]
      %v626 = vld [vmem:[%s2 + $0xe8] sm:$0xff]
      %v627 = vld [vmem:[%s2 + $0xf0] sm:$0xff]
      %v628 = vld [vmem:[%s2 + $0xf8] sm:$0xff]
      %v629 = vld [vmem:[#allocation2] sm:$0xff]
      %v630 = vld [vmem:[#allocation2 + $0x8] sm:$0xff]
      %v631 = vld [vmem:[#allocation3] sm:$0xff]
      %v632 = vld [vmem:[#allocation3 + $0x8] sm:$0xff]
      %s633 = smul.u32 0, 4
      %s634 = smul.addr %s633, 8
      %s635 = scalar_lea.vmem [#allocation4], %s634
      %v636 = vld [vmem:[%s635] sm:$0xff]
      %v637 = vld [vmem:[%s635 + $0x8] sm:$0xff]
      %v638 = vld [vmem:[%s635 + $0x10] sm:$0xff]
      %v639 = vld [vmem:[%s635 + $0x18] sm:$0xff]
      %v640 = vld [vmem:[%s635 + $0x20] sm:$0xff]
      %v641 = vld [vmem:[%s635 + $0x28] sm:$0xff]
      %v642 = vld [vmem:[%s635 + $0x30] sm:$0xff]
      %v643 = vld [vmem:[%s635 + $0x38] sm:$0xff]
      %v644 = vpack.c.bf16 %v630, %v629
      %v677 = vunpack.c.l.b16 %v597
      %v678 = vunpack.c.h.b16 %v597
      %v679 = vunpack.c.l.b16 %v598
      %v680 = vunpack.c.h.b16 %v598
      %v681 = vunpack.c.l.b16 %v599
      %v682 = vunpack.c.h.b16 %v599
      %v683 = vunpack.c.l.b16 %v600
      %v684 = vunpack.c.h.b16 %v600
      %v685 = vunpack.c.l.b16 %v601
      %v686 = vunpack.c.h.b16 %v601
      %v687 = vunpack.c.l.b16 %v602
      %v688 = vunpack.c.h.b16 %v602
      %v689 = vunpack.c.l.b16 %v603
      %v690 = vunpack.c.h.b16 %v603
      %v691 = vunpack.c.l.b16 %v604
      %v692 = vunpack.c.h.b16 %v604
      %v693 = vunpack.c.l.b16 %v605
      %v694 = vunpack.c.h.b16 %v605
      %v695 = vunpack.c.l.b16 %v606
      %v696 = vunpack.c.h.b16 %v606
      %v697 = vunpack.c.l.b16 %v607
      %v698 = vunpack.c.h.b16 %v607
      %v699 = vunpack.c.l.b16 %v608
      %v700 = vunpack.c.h.b16 %v608
      %v701 = vunpack.c.l.b16 %v609
      %v702 = vunpack.c.h.b16 %v609
      %v703 = vunpack.c.l.b16 %v610
      %v704 = vunpack.c.h.b16 %v610
      %v705 = vunpack.c.l.b16 %v611
      %v706 = vunpack.c.h.b16 %v611
      %v707 = vunpack.c.l.b16 %v612
      %v708 = vunpack.c.h.b16 %v612
      %v709 = vunpack.c.l.b16 %v613
      %v710 = vunpack.c.h.b16 %v613
      %v711 = vunpack.c.l.b16 %v614
      %v712 = vunpack.c.h.b16 %v614
      %v713 = vunpack.c.l.b16 %v615
      %v714 = vunpack.c.h.b16 %v615
      %v715 = vunpack.c.l.b16 %v616
      %v716 = vunpack.c.h.b16 %v616
      %v717 = vunpack.c.l.b16 %v617
      %v718 = vunpack.c.h.b16 %v617
      %v719 = vunpack.c.l.b16 %v618
      %v720 = vunpack.c.h.b16 %v618
      %v721 = vunpack.c.l.b16 %v619
      %v722 = vunpack.c.h.b16 %v619
      %v723 = vunpack.c.l.b16 %v620
      %v724 = vunpack.c.h.b16 %v620
      %v725 = vunpack.c.l.b16 %v621
      %v726 = vunpack.c.h.b16 %v621
      %v727 = vunpack.c.l.b16 %v622
      %v728 = vunpack.c.h.b16 %v622
      %v729 = vunpack.c.l.b16 %v623
      %v730 = vunpack.c.h.b16 %v623
      %v731 = vunpack.c.l.b16 %v624
      %v732 = vunpack.c.h.b16 %v624
      %v733 = vunpack.c.l.b16 %v625
      %v734 = vunpack.c.h.b16 %v625
      %v735 = vunpack.c.l.b16 %v626
      %v736 = vunpack.c.h.b16 %v626
      %v737 = vunpack.c.l.b16 %v627
      %v738 = vunpack.c.h.b16 %v627
      %v739 = vunpack.c.l.b16 %v628
      %v740 = vunpack.c.h.b16 %v628
      %v741 = vpack.c.b16 %v681, %v677
      %v742 = vpack.c.b16 %v682, %v678
      %v743 = vpack.c.b16 %v683, %v679
      %v744 = vpack.c.b16 %v684, %v680
      %v745 = vpack.c.b16 %v689, %v685
      %v746 = vpack.c.b16 %v690, %v686
      %v747 = vpack.c.b16 %v691, %v687
      %v748 = vpack.c.b16 %v692, %v688
      %v749 = vpack.c.b16 %v697, %v693
      %v750 = vpack.c.b16 %v698, %v694
      %v751 = vpack.c.b16 %v699, %v695
      %v752 = vpack.c.b16 %v700, %v696
      %v753 = vpack.c.b16 %v705, %v701
      %v754 = vpack.c.b16 %v706, %v702
      %v755 = vpack.c.b16 %v707, %v703
      %v756 = vpack.c.b16 %v708, %v704
      %v757 = vpack.c.b16 %v713, %v709
      %v758 = vpack.c.b16 %v714, %v710
      %v759 = vpack.c.b16 %v715, %v711
      %v760 = vpack.c.b16 %v716, %v712
      %v761 = vpack.c.b16 %v721, %v717
      %v762 = vpack.c.b16 %v722, %v718
      %v763 = vpack.c.b16 %v723, %v719
      %v764 = vpack.c.b16 %v724, %v720
      %v765 = vpack.c.b16 %v729, %v725
      %v766 = vpack.c.b16 %v730, %v726
      %v767 = vpack.c.b16 %v731, %v727
      %v768 = vpack.c.b16 %v732, %v728
      %v769 = vpack.c.b16 %v737, %v733
      %v770 = vpack.c.b16 %v738, %v734
      %v771 = vpack.c.b16 %v739, %v735
      %v772 = vpack.c.b16 %v740, %v736
      %805 = vmatprep.subr.bf16.mxu0 %v742
      %806 = vmatpush1.bf16.msra.mxu0 %v741
      %807 = vmatprep.subr.bf16.mxu0 %v746
      %808 = vmatpush1.bf16.msra.mxu0 %v745
      %809 = vmatprep.subr.bf16.mxu0 %v750
      %810 = vmatpush1.bf16.msra.mxu0 %v749
      %811 = vmatprep.subr.bf16.mxu0 %v754
      %812 = vmatpush1.bf16.msra.mxu0 %v753
      %813 = vmatprep.subr.bf16.mxu0 %v758
      %814 = vmatpush1.bf16.msra.mxu0 %v757
      %815 = vmatprep.subr.bf16.mxu0 %v762
      %816 = vmatpush1.bf16.msra.mxu0 %v761
      %817 = vmatprep.subr.bf16.mxu0 %v766
      %818 = vmatpush1.bf16.msra.mxu0 %v765
      %819 = vmatprep.subr.bf16.mxu0 %v770
      %820 = vmatpush1.bf16.msra.mxu0 %v769
      %821 = vmatprep.subr.bf16.mxu0 0
      %822 = vmatpush1.bf16.msra.mxu0 0
      %823 = vmatprep.subr.bf16.mxu0 0
      %824 = vmatpush1.bf16.msra.mxu0 0
      %825 = vmatprep.subr.bf16.mxu0 0
      %826 = vmatpush1.bf16.msra.mxu0 0
      %827 = vmatprep.subr.bf16.mxu0 0
      %828 = vmatpush1.bf16.msra.mxu0 0
      %829 = vmatprep.subr.bf16.mxu0 0
      %830 = vmatpush1.bf16.msra.mxu0 0
      %831 = vmatprep.subr.bf16.mxu0 0
      %832 = vmatpush1.bf16.msra.mxu0 0
      %833 = vmatprep.subr.bf16.mxu0 0
      %834 = vmatpush1.bf16.msra.mxu0 0
      %835 = vmatprep.subr.bf16.mxu0 0
      %836 = vmatpush1.bf16.msra.mxu0 0
      %837 = vmatprep.mubr.bf16.mxu0 0
      %838 = vmatmul.mubr.bf16.gmra.mrb[0].mxu0 %v644
      %v839 = vpop.f32.mrb[0].mxu0
      %v840 = vadd.f32 0.0, %v839
      %v841 = vpop.f32.mrb[0].mxu0
      %v842 = vadd.f32 0.0, %v841
      %v843 = vpop.f32.mrb[0].mxu0
      %v844 = vadd.f32 0.0, %v843
      %v845 = vpop.f32.mrb[0].mxu0
      %v846 = vadd.f32 0.0, %v845
      %847 = vdwg.mxu0
      %848 = vmatprep.subr.bf16.mxu0 %v744
      %849 = vmatpush1.bf16.msra.mxu0 %v743
      %850 = vmatprep.subr.bf16.mxu0 %v748
      %851 = vmatpush1.bf16.msra.mxu0 %v747
      %852 = vmatprep.subr.bf16.mxu0 %v752
      %853 = vmatpush1.bf16.msra.mxu0 %v751
      %854 = vmatprep.subr.bf16.mxu0 %v756
      %855 = vmatpush1.bf16.msra.mxu0 %v755
      %856 = vmatprep.subr.bf16.mxu0 %v760
      %857 = vmatpush1.bf16.msra.mxu0 %v759
      %858 = vmatprep.subr.bf16.mxu0 %v764
      %859 = vmatpush1.bf16.msra.mxu0 %v763
      %860 = vmatprep.subr.bf16.mxu0 %v768
      %861 = vmatpush1.bf16.msra.mxu0 %v767
      %862 = vmatprep.subr.bf16.mxu0 %v772
      %863 = vmatpush1.bf16.msra.mxu0 %v771
      %864 = vmatprep.subr.bf16.mxu0 0
      %865 = vmatpush1.bf16.msra.mxu0 0
      %866 = vmatprep.subr.bf16.mxu0 0
      %867 = vmatpush1.bf16.msra.mxu0 0
      %868 = vmatprep.subr.bf16.mxu0 0
      %869 = vmatpush1.bf16.msra.mxu0 0
      %870 = vmatprep.subr.bf16.mxu0 0
      %871 = vmatpush1.bf16.msra.mxu0 0
      %872 = vmatprep.subr.bf16.mxu0 0
      %873 = vmatpush1.bf16.msra.mxu0 0
      %874 = vmatprep.subr.bf16.mxu0 0
      %875 = vmatpush1.bf16.msra.mxu0 0
      %876 = vmatprep.subr.bf16.mxu0 0
      %877 = vmatpush1.bf16.msra.mxu0 0
      %878 = vmatprep.subr.bf16.mxu0 0
      %879 = vmatpush1.bf16.msra.mxu0 0
      %880 = vmatprep.mubr.bf16.mxu0 0
      %881 = vmatmul.mubr.bf16.gmra.mrb[0].mxu0 %v644
      %v882 = vpop.f32.mrb[0].mxu0
      %v883 = vadd.f32 0.0, %v882
      %v884 = vpop.f32.mrb[0].mxu0
      %v885 = vadd.f32 0.0, %v884
      %v886 = vpop.f32.mrb[0].mxu0
      %v887 = vadd.f32 0.0, %v886
      %v888 = vpop.f32.mrb[0].mxu0
      %v889 = vadd.f32 0.0, %v888
      %890 = vdwg.mxu0
      %v891 = vadd.f32 %v636, %v840
      %v892 = vadd.f32 %v637, %v842
      %v893 = vadd.f32 %v638, %v883
      %v894 = vadd.f32 %v639, %v885
      %v895 = vadd.f32 %v640, %v844
      %v896 = vadd.f32 %v641, %v846
      %v897 = vadd.f32 %v642, %v887
      %v898 = vadd.f32 %v643, %v889
      %v899 = vxor.u32 %v891, 2147483648
      %v900 = vxor.u32 %v895, 2147483648
      %v901 = vmul.f32 %v899, 1.442695
      %v902 = vpow.pop %v901
      %v903 = vmul.f32 %v900, 1.442695
      %v904 = vpow.pop %v903
      %v905 = vadd.f32 %v902, 1.0
      %v906 = vadd.f32 %v904, 1.0
      %v907 = vrcp.pop %v905
      %v908 = vmul.f32 1.0, %v907
      %v909 = vrcp.pop %v906
      %v910 = vmul.f32 1.0, %v909
      %v911 = vxor.u32 %v892, 2147483648
      %v912 = vxor.u32 %v896, 2147483648
      %v913 = vmul.f32 %v911, 1.442695
      %v914 = vpow.pop %v913
      %v915 = vmul.f32 %v912, 1.442695
      %v916 = vpow.pop %v915
      %v917 = vadd.f32 %v914, 1.0
      %v918 = vadd.f32 %v916, 1.0
      %v919 = vrcp.pop %v917
      %v920 = vmul.f32 1.0, %v919
      %v921 = vrcp.pop %v918
      %v922 = vmul.f32 1.0, %v921
      %v923 = vtanh.pop %v893
      %v924 = vtanh.pop %v897
      %v925 = vxor.u32 %v894, 2147483648
      %v926 = vxor.u32 %v898, 2147483648
      %v927 = vmul.f32 %v925, 1.442695
      %v928 = vpow.pop %v927
      %v929 = vmul.f32 %v926, 1.442695
      %v930 = vpow.pop %v929
      %v931 = vadd.f32 %v928, 1.0
      %v932 = vadd.f32 %v930, 1.0
      %v933 = vrcp.pop %v931
      %v934 = vmul.f32 1.0, %v933
      %v935 = vrcp.pop %v932
      %v936 = vmul.f32 1.0, %v935
      %v937 = vmul.f32 %v920, %v631
      %v938 = vmul.f32 %v922, %v632
      %v939 = vmul.f32 %v908, %v923
      %v940 = vmul.f32 %v910, %v924
      %v941 = vadd.f32 %v937, %v939
      %v942 = vadd.f32 %v938, %v940
      %v943 = vtanh.pop %v941
      %v944 = vtanh.pop %v942
      %v945 = vmul.f32 %v934, %v943
      %v946 = vmul.f32 %v936, %v944
      %947 = vst [vmem:[#allocation2] sm:$0xff] %v945
      %948 = vst [vmem:[#allocation2 + $0x8] sm:$0xff] %v946
      %949 = vst [vmem:[#allocation3] sm:$0xff] %v941
      %950 = vst [vmem:[#allocation3 + $0x8] sm:$0xff] %v942
      %951 = vst [vmem:[#allocation5] sm:$0xff] %v945
      %952 = vst [vmem:[#allocation5 + $0x8] sm:$0xff] %v946
      %v953 = vld [vmem:[#allocation2] sm:$0xff]
      %v954 = vld [vmem:[#allocation2 + $0x8] sm:$0xff]
      %v955 = vld [vmem:[#allocation3] sm:$0xff]
      %v956 = vld [vmem:[#allocation3 + $0x8] sm:$0xff]
      %s957 = smul.u32 2, 4
      %s958 = smul.addr %s957, 8
      %s959 = scalar_lea.vmem [#allocation4], %s958
      %v960 = vld [vmem:[%s959] sm:$0xff]
      %v961 = vld [vmem:[%s959 + $0x8] sm:$0xff]
      %v962 = vld [vmem:[%s959 + $0x10] sm:$0xff]
      %v963 = vld [vmem:[%s959 + $0x18] sm:$0xff]
      %v964 = vld [vmem:[%s959 + $0x20] sm:$0xff]
      %v965 = vld [vmem:[%s959 + $0x28] sm:$0xff]
      %v966 = vld [vmem:[%s959 + $0x30] sm:$0xff]
      %v967 = vld [vmem:[%s959 + $0x38] sm:$0xff]
      %v968 = vpack.c.bf16 %v954, %v953
      %969 = vmatprep.subr.bf16.mxu0 %v742
      %970 = vmatpush1.bf16.msra.mxu0 %v741
      %971 = vmatprep.subr.bf16.mxu0 %v746
      %972 = vmatpush1.bf16.msra.mxu0 %v745
      %973 = vmatprep.subr.bf16.mxu0 %v750
      %974 = vmatpush1.bf16.msra.mxu0 %v749
      %975 = vmatprep.subr.bf16.mxu0 %v754
      %976 = vmatpush1.bf16.msra.mxu0 %v753
      %977 = vmatprep.subr.bf16.mxu0 %v758
      %978 = vmatpush1.bf16.msra.mxu0 %v757
      %979 = vmatprep.subr.bf16.mxu0 %v762
      %980 = vmatpush1.bf16.msra.mxu0 %v761
      %981 = vmatprep.subr.bf16.mxu0 %v766
      %982 = vmatpush1.bf16.msra.mxu0 %v765
      %983 = vmatprep.subr.bf16.mxu0 %v770
      %984 = vmatpush1.bf16.msra.mxu0 %v769
      %985 = vmatprep.subr.bf16.mxu0 0
      %986 = vmatpush1.bf16.msra.mxu0 0
      %987 = vmatprep.subr.bf16.mxu0 0
      %988 = vmatpush1.bf16.msra.mxu0 0
      %989 = vmatprep.subr.bf16.mxu0 0
      %990 = vmatpush1.bf16.msra.mxu0 0
      %991 = vmatprep.subr.bf16.mxu0 0
      %992 = vmatpush1.bf16.msra.mxu0 0
      %993 = vmatprep.subr.bf16.mxu0 0
      %994 = vmatpush1.bf16.msra.mxu0 0
      %995 = vmatprep.subr.bf16.mxu0 0
      %996 = vmatpush1.bf16.msra.mxu0 0
      %997 = vmatprep.subr.bf16.mxu0 0
      %998 = vmatpush1.bf16.msra.mxu0 0
      %999 = vmatprep.subr.bf16.mxu0 0
      %1000 = vmatpush1.bf16.msra.mxu0 0
      %1001 = vmatprep.mubr.bf16.mxu0 0
      %1002 = vmatmul.mubr.bf16.gmra.mrb[0].mxu0 %v968
      %v1003 = vpop.f32.mrb[0].mxu0
      %v1004 = vadd.f32 0.0, %v1003
      %v1005 = vpop.f32.mrb[0].mxu0
      %v1006 = vadd.f32 0.0, %v1005
      %v1007 = vpop.f32.mrb[0].mxu0
      %v1008 = vadd.f32 0.0, %v1007
      %v1009 = vpop.f32.mrb[0].mxu0
      %v1010 = vadd.f32 0.0, %v1009
      %1011 = vdwg.mxu0
      %1012 = vmatprep.subr.bf16.mxu0 %v744
      %1013 = vmatpush1.bf16.msra.mxu0 %v743
      %1014 = vmatprep.subr.bf16.mxu0 %v748
      %1015 = vmatpush1.bf16.msra.mxu0 %v747
      %1016 = vmatprep.subr.bf16.mxu0 %v752
      %1017 = vmatpush1.bf16.msra.mxu0 %v751
      %1018 = vmatprep.subr.bf16.mxu0 %v756
      %1019 = vmatpush1.bf16.msra.mxu0 %v755
      %1020 = vmatprep.subr.bf16.mxu0 %v760
      %1021 = vmatpush1.bf16.msra.mxu0 %v759
      %1022 = vmatprep.subr.bf16.mxu0 %v764
      %1023 = vmatpush1.bf16.msra.mxu0 %v763
      %1024 = vmatprep.subr.bf16.mxu0 %v768
      %1025 = vmatpush1.bf16.msra.mxu0 %v767
      %1026 = vmatprep.subr.bf16.mxu0 %v772
      %1027 = vmatpush1.bf16.msra.mxu0 %v771
      %1028 = vmatprep.subr.bf16.mxu0 0
      %1029 = vmatpush1.bf16.msra.mxu0 0
      %1030 = vmatprep.subr.bf16.mxu0 0
      %1031 = vmatpush1.bf16.msra.mxu0 0
      %1032 = vmatprep.subr.bf16.mxu0 0
      %1033 = vmatpush1.bf16.msra.mxu0 0
      %1034 = vmatprep.subr.bf16.mxu0 0
      %1035 = vmatpush1.bf16.msra.mxu0 0
      %1036 = vmatprep.subr.bf16.mxu0 0
      %1037 = vmatpush1.bf16.msra.mxu0 0
      %1038 = vmatprep.subr.bf16.mxu0 0
      %1039 = vmatpush1.bf16.msra.mxu0 0
      %1040 = vmatprep.subr.bf16.mxu0 0
      %1041 = vmatpush1.bf16.msra.mxu0 0
      %1042 = vmatprep.subr.bf16.mxu0 0
      %1043 = vmatpush1.bf16.msra.mxu0 0
      %1044 = vmatprep.mubr.bf16.mxu0 0
      %1045 = vmatmul.mubr.bf16.gmra.mrb[0].mxu0 %v968
      %v1046 = vpop.f32.mrb[0].mxu0
      %v1047 = vadd.f32 0.0, %v1046
      %v1048 = vpop.f32.mrb[0].mxu0
      %v1049 = vadd.f32 0.0, %v1048
      %v1050 = vpop.f32.mrb[0].mxu0
      %v1051 = vadd.f32 0.0, %v1050
      %v1052 = vpop.f32.mrb[0].mxu0
      %v1053 = vadd.f32 0.0, %v1052
      %1054 = vdwg.mxu0
      %v1055 = vadd.f32 %v960, %v1004
      %v1056 = vadd.f32 %v961, %v1006
      %v1057 = vadd.f32 %v962, %v1047
      %v1058 = vadd.f32 %v963, %v1049
      %v1059 = vadd.f32 %v964, %v1008
      %v1060 = vadd.f32 %v965, %v1010
      %v1061 = vadd.f32 %v966, %v1051
      %v1062 = vadd.f32 %v967, %v1053
      %v1063 = vxor.u32 %v1055, 2147483648
      %v1064 = vxor.u32 %v1059, 2147483648
      %v1065 = vmul.f32 %v1063, 1.442695
      %v1066 = vpow.pop %v1065
      %v1067 = vmul.f32 %v1064, 1.442695
      %v1068 = vpow.pop %v1067
      %v1069 = vadd.f32 %v1066, 1.0
      %v1070 = vadd.f32 %v1068, 1.0
      %v1071 = vrcp.pop %v1069
      %v1072 = vmul.f32 1.0, %v1071
      %v1073 = vrcp.pop %v1070
      %v1074 = vmul.f32 1.0, %v1073
      %v1075 = vxor.u32 %v1056, 2147483648
      %v1076 = vxor.u32 %v1060, 2147483648
      %v1077 = vmul.f32 %v1075, 1.442695
      %v1078 = vpow.pop %v1077
      %v1079 = vmul.f32 %v1076, 1.442695
      %v1080 = vpow.pop %v1079
      %v1081 = vadd.f32 %v1078, 1.0
      %v1082 = vadd.f32 %v1080, 1.0
      %v1083 = vrcp.pop %v1081
      %v1084 = vmul.f32 1.0, %v1083
      %v1085 = vrcp.pop %v1082
      %v1086 = vmul.f32 1.0, %v1085
      %v1087 = vtanh.pop %v1057
      %v1088 = vtanh.pop %v1061
      %v1089 = vxor.u32 %v1058, 2147483648
      %v1090 = vxor.u32 %v1062, 2147483648
      %v1091 = vmul.f32 %v1089, 1.442695
      %v1092 = vpow.pop %v1091
      %v1093 = vmul.f32 %v1090, 1.442695
      %v1094 = vpow.pop %v1093
      %v1095 = vadd.f32 %v1092, 1.0
      %v1096 = vadd.f32 %v1094, 1.0
      %v1097 = vrcp.pop %v1095
      %v1098 = vmul.f32 1.0, %v1097
      %v1099 = vrcp.pop %v1096
      %v1100 = vmul.f32 1.0, %v1099
      %v1101 = vmul.f32 %v1084, %v955
      %v1102 = vmul.f32 %v1086, %v956
      %v1103 = vmul.f32 %v1072, %v1087
      %v1104 = vmul.f32 %v1074, %v1088
      %v1105 = vadd.f32 %v1101, %v1103
      %v1106 = vadd.f32 %v1102, %v1104
      %v1107 = vtanh.pop %v1105
      %v1108 = vtanh.pop %v1106
      %v1109 = vmul.f32 %v1098, %v1107
      %v1110 = vmul.f32 %v1100, %v1108
      %1111 = vst [vmem:[#allocation2] sm:$0xff] %v1109
      %1112 = vst [vmem:[#allocation2 + $0x8] sm:$0xff] %v1110
      %1113 = vst [vmem:[#allocation3] sm:$0xff] %v1105
      %1114 = vst [vmem:[#allocation3 + $0x8] sm:$0xff] %v1106
      %s1115 = scalar_lea.vmem [#allocation5], 16
      %1116 = vst [vmem:[%s1115] sm:$0xff] %v1109
      %1117 = vst [vmem:[%s1115 + $0x8] sm:$0xff] %v1110
      %v1118 = vld [vmem:[#allocation2] sm:$0xff]
      %v1119 = vld [vmem:[#allocation2 + $0x8] sm:$0xff]
      %v1120 = vld [vmem:[#allocation3] sm:$0xff]
      %v1121 = vld [vmem:[#allocation3 + $0x8] sm:$0xff]
      %s1122 = smul.u32 4, 4
      %s1123 = smul.addr %s1122, 8
      %s1124 = scalar_lea.vmem [#allocation4], %s1123
      %v1125 = vld [vmem:[%s1124] sm:$0xff]
      %v1126 = vld [vmem:[%s1124 + $0x8] sm:$0xff]
      %v1127 = vld [vmem:[%s1124 + $0x10] sm:$0xff]
      %v1128 = vld [vmem:[%s1124 + $0x18] sm:$0xff]
      %v1129 = vld [vmem:[%s1124 + $0x20] sm:$0xff]
      %v1130 = vld [vmem:[%s1124 + $0x28] sm:$0xff]
      %v1131 = vld [vmem:[%s1124 + $0x30] sm:$0xff]
      %v1132 = vld [vmem:[%s1124 + $0x38] sm:$0xff]
      %v1133 = vpack.c.bf16 %v1119, %v1118
      %1134 = vmatprep.subr.bf16.mxu0 %v742
      %1135 = vmatpush1.bf16.msra.mxu0 %v741
      %1136 = vmatprep.subr.bf16.mxu0 %v746
      %1137 = vmatpush1.bf16.msra.mxu0 %v745
      %1138 = vmatprep.subr.bf16.mxu0 %v750
      %1139 = vmatpush1.bf16.msra.mxu0 %v749
      %1140 = vmatprep.subr.bf16.mxu0 %v754
      %1141 = vmatpush1.bf16.msra.mxu0 %v753
      %1142 = vmatprep.subr.bf16.mxu0 %v758
      %1143 = vmatpush1.bf16.msra.mxu0 %v757
      %1144 = vmatprep.subr.bf16.mxu0 %v762
      %1145 = vmatpush1.bf16.msra.mxu0 %v761
      %1146 = vmatprep.subr.bf16.mxu0 %v766
      %1147 = vmatpush1.bf16.msra.mxu0 %v765
      %1148 = vmatprep.subr.bf16.mxu0 %v770
      %1149 = vmatpush1.bf16.msra.mxu0 %v769
      %1150 = vmatprep.subr.bf16.mxu0 0
      %1151 = vmatpush1.bf16.msra.mxu0 0
      %1152 = vmatprep.subr.bf16.mxu0 0
      %1153 = vmatpush1.bf16.msra.mxu0 0
      %1154 = vmatprep.subr.bf16.mxu0 0
      %1155 = vmatpush1.bf16.msra.mxu0 0
      %1156 = vmatprep.subr.bf16.mxu0 0
      %1157 = vmatpush1.bf16.msra.mxu0 0
      %1158 = vmatprep.subr.bf16.mxu0 0
      %1159 = vmatpush1.bf16.msra.mxu0 0
      %1160 = vmatprep.subr.bf16.mxu0 0
      %1161 = vmatpush1.bf16.msra.mxu0 0
      %1162 = vmatprep.subr.bf16.mxu0 0
      %1163 = vmatpush1.bf16.msra.mxu0 0
      %1164 = vmatprep.subr.bf16.mxu0 0
      %1165 = vmatpush1.bf16.msra.mxu0 0
      %1166 = vmatprep.mubr.bf16.mxu0 0
      %1167 = vmatmul.mubr.bf16.gmra.mrb[0].mxu0 %v1133
      %v1168 = vpop.f32.mrb[0].mxu0
      %v1169 = vadd.f32 0.0, %v1168
      %v1170 = vpop.f32.mrb[0].mxu0
      %v1171 = vadd.f32 0.0, %v1170
      %v1172 = vpop.f32.mrb[0].mxu0
      %v1173 = vadd.f32 0.0, %v1172
      %v1174 = vpop.f32.mrb[0].mxu0
      %v1175 = vadd.f32 0.0, %v1174
      %1176 = vdwg.mxu0
      %1177 = vmatprep.subr.bf16.mxu0 %v744
      %1178 = vmatpush1.bf16.msra.mxu0 %v743
      %1179 = vmatprep.subr.bf16.mxu0 %v748
      %1180 = vmatpush1.bf16.msra.mxu0 %v747
      %1181 = vmatprep.subr.bf16.mxu0 %v752
      %1182 = vmatpush1.bf16.msra.mxu0 %v751
      %1183 = vmatprep.subr.bf16.mxu0 %v756
      %1184 = vmatpush1.bf16.msra.mxu0 %v755
      %1185 = vmatprep.subr.bf16.mxu0 %v760
      %1186 = vmatpush1.bf16.msra.mxu0 %v759
      %1187 = vmatprep.subr.bf16.mxu0 %v764
      %1188 = vmatpush1.bf16.msra.mxu0 %v763
      %1189 = vmatprep.subr.bf16.mxu0 %v768
      %1190 = vmatpush1.bf16.msra.mxu0 %v767
      %1191 = vmatprep.subr.bf16.mxu0 %v772
      %1192 = vmatpush1.bf16.msra.mxu0 %v771
      %1193 = vmatprep.subr.bf16.mxu0 0
      %1194 = vmatpush1.bf16.msra.mxu0 0
      %1195 = vmatprep.subr.bf16.mxu0 0
      %1196 = vmatpush1.bf16.msra.mxu0 0
      %1197 = vmatprep.subr.bf16.mxu0 0
      %1198 = vmatpush1.bf16.msra.mxu0 0
      %1199 = vmatprep.subr.bf16.mxu0 0
      %1200 = vmatpush1.bf16.msra.mxu0 0
      %1201 = vmatprep.subr.bf16.mxu0 0
      %1202 = vmatpush1.bf16.msra.mxu0 0
      %1203 = vmatprep.subr.bf16.mxu0 0
      %1204 = vmatpush1.bf16.msra.mxu0 0
      %1205 = vmatprep.subr.bf16.mxu0 0
      %1206 = vmatpush1.bf16.msra.mxu0 0
      %1207 = vmatprep.subr.bf16.mxu0 0
      %1208 = vmatpush1.bf16.msra.mxu0 0
      %1209 = vmatprep.mubr.bf16.mxu0 0
      %1210 = vmatmul.mubr.bf16.gmra.mrb[0].mxu0 %v1133
      %v1211 = vpop.f32.mrb[0].mxu0
      %v1212 = vadd.f32 0.0, %v1211
      %v1213 = vpop.f32.mrb[0].mxu0
      %v1214 = vadd.f32 0.0, %v1213
      %v1215 = vpop.f32.mrb[0].mxu0
      %v1216 = vadd.f32 0.0, %v1215
      %v1217 = vpop.f32.mrb[0].mxu0
      %v1218 = vadd.f32 0.0, %v1217
      %1219 = vdwg.mxu0
      %v1220 = vadd.f32 %v1125, %v1169
      %v1221 = vadd.f32 %v1126, %v1171
      %v1222 = vadd.f32 %v1127, %v1212
      %v1223 = vadd.f32 %v1128, %v1214
      %v1224 = vadd.f32 %v1129, %v1173
      %v1225 = vadd.f32 %v1130, %v1175
      %v1226 = vadd.f32 %v1131, %v1216
      %v1227 = vadd.f32 %v1132, %v1218
      %v1228 = vxor.u32 %v1220, 2147483648
      %v1229 = vxor.u32 %v1224, 2147483648
      %v1230 = vmul.f32 %v1228, 1.442695
      %v1231 = vpow.pop %v1230
      %v1232 = vmul.f32 %v1229, 1.442695
      %v1233 = vpow.pop %v1232
      %v1234 = vadd.f32 %v1231, 1.0
      %v1235 = vadd.f32 %v1233, 1.0
      %v1236 = vrcp.pop %v1234
      %v1237 = vmul.f32 1.0, %v1236
      %v1238 = vrcp.pop %v1235
      %v1239 = vmul.f32 1.0, %v1238
      %v1240 = vxor.u32 %v1221, 2147483648
      %v1241 = vxor.u32 %v1225, 2147483648
      %v1242 = vmul.f32 %v1240, 1.442695
      %v1243 = vpow.pop %v1242
      %v1244 = vmul.f32 %v1241, 1.442695
      %v1245 = vpow.pop %v1244
      %v1246 = vadd.f32 %v1243, 1.0
      %v1247 = vadd.f32 %v1245, 1.0
      %v1248 = vrcp.pop %v1246
      %v1249 = vmul.f32 1.0, %v1248
      %v1250 = vrcp.pop %v1247
      %v1251 = vmul.f32 1.0, %v1250
      %v1252 = vtanh.pop %v1222
      %v1253 = vtanh.pop %v1226
      %v1254 = vxor.u32 %v1223, 2147483648
      %v1255 = vxor.u32 %v1227, 2147483648
      %v1256 = vmul.f32 %v1254, 1.442695
      %v1257 = vpow.pop %v1256
      %v1258 = vmul.f32 %v1255, 1.442695
      %v1259 = vpow.pop %v1258
      %v1260 = vadd.f32 %v1257, 1.0
      %v1261 = vadd.f32 %v1259, 1.0
      %v1262 = vrcp.pop %v1260
      %v1263 = vmul.f32 1.0, %v1262
      %v1264 = vrcp.pop %v1261
      %v1265 = vmul.f32 1.0, %v1264
      %v1266 = vmul.f32 %v1249, %v1120
      %v1267 = vmul.f32 %v1251, %v1121
      %v1268 = vmul.f32 %v1237, %v1252
      %v1269 = vmul.f32 %v1239, %v1253
      %v1270 = vadd.f32 %v1266, %v1268
      %v1271 = vadd.f32 %v1267, %v1269
      %v1272 = vtanh.pop %v1270
      %v1273 = vtanh.pop %v1271
      %v1274 = vmul.f32 %v1263, %v1272
      %v1275 = vmul.f32 %v1265, %v1273
      %1276 = vst [vmem:[#allocation2] sm:$0xff] %v1274
      %1277 = vst [vmem:[#allocation2 + $0x8] sm:$0xff] %v1275
      %1278 = vst [vmem:[#allocation3] sm:$0xff] %v1270
      %1279 = vst [vmem:[#allocation3 + $0x8] sm:$0xff] %v1271
      %s1280 = scalar_lea.vmem [#allocation5], 32
      %1281 = vst [vmem:[%s1280] sm:$0xff] %v1274
      %1282 = vst [vmem:[%s1280 + $0x8] sm:$0xff] %v1275
      %v1283 = vld [vmem:[#allocation2] sm:$0xff]
      %v1284 = vld [vmem:[#allocation2 + $0x8] sm:$0xff]
      %v1285 = vld [vmem:[#allocation3] sm:$0xff]
      %v1286 = vld [vmem:[#allocation3 + $0x8] sm:$0xff]
      %s1287 = smul.u32 6, 4
      %s1288 = smul.addr %s1287, 8
      %s1289 = scalar_lea.vmem [#allocation4], %s1288
      %v1290 = vld [vmem:[%s1289] sm:$0xff]
      %v1291 = vld [vmem:[%s1289 + $0x8] sm:$0xff]
      %v1292 = vld [vmem:[%s1289 + $0x10] sm:$0xff]
      %v1293 = vld [vmem:[%s1289 + $0x18] sm:$0xff]
      %v1294 = vld [vmem:[%s1289 + $0x20] sm:$0xff]
      %v1295 = vld [vmem:[%s1289 + $0x28] sm:$0xff]
      %v1296 = vld [vmem:[%s1289 + $0x30] sm:$0xff]
      %v1297 = vld [vmem:[%s1289 + $0x38] sm:$0xff]
      %v1298 = vpack.c.bf16 %v1284, %v1283
      %1299 = vmatprep.subr.bf16.mxu0 %v742
      %1300 = vmatpush1.bf16.msra.mxu0 %v741
      %1301 = vmatprep.subr.bf16.mxu0 %v746
      %1302 = vmatpush1.bf16.msra.mxu0 %v745
      %1303 = vmatprep.subr.bf16.mxu0 %v750
      %1304 = vmatpush1.bf16.msra.mxu0 %v749
      %1305 = vmatprep.subr.bf16.mxu0 %v754
      %1306 = vmatpush1.bf16.msra.mxu0 %v753
      %1307 = vmatprep.subr.bf16.mxu0 %v758
      %1308 = vmatpush1.bf16.msra.mxu0 %v757
      %1309 = vmatprep.subr.bf16.mxu0 %v762
      %1310 = vmatpush1.bf16.msra.mxu0 %v761
      %1311 = vmatprep.subr.bf16.mxu0 %v766
      %1312 = vmatpush1.bf16.msra.mxu0 %v765
      %1313 = vmatprep.subr.bf16.mxu0 %v770
      %1314 = vmatpush1.bf16.msra.mxu0 %v769
      %1315 = vmatprep.subr.bf16.mxu0 0
      %1316 = vmatpush1.bf16.msra.mxu0 0
      %1317 = vmatprep.subr.bf16.mxu0 0
      %1318 = vmatpush1.bf16.msra.mxu0 0
      %1319 = vmatprep.subr.bf16.mxu0 0
      %1320 = vmatpush1.bf16.msra.mxu0 0
      %1321 = vmatprep.subr.bf16.mxu0 0
      %1322 = vmatpush1.bf16.msra.mxu0 0
      %1323 = vmatprep.subr.bf16.mxu0 0
      %1324 = vmatpush1.bf16.msra.mxu0 0
      %1325 = vmatprep.subr.bf16.mxu0 0
      %1326 = vmatpush1.bf16.msra.mxu0 0
      %1327 = vmatprep.subr.bf16.mxu0 0
      %1328 = vmatpush1.bf16.msra.mxu0 0
      %1329 = vmatprep.subr.bf16.mxu0 0
      %1330 = vmatpush1.bf16.msra.mxu0 0
      %1331 = vmatprep.mubr.bf16.mxu0 0
      %1332 = vmatmul.mubr.bf16.gmra.mrb[0].mxu0 %v1298
      %v1333 = vpop.f32.mrb[0].mxu0
      %v1334 = vadd.f32 0.0, %v1333
      %v1335 = vpop.f32.mrb[0].mxu0
      %v1336 = vadd.f32 0.0, %v1335
      %v1337 = vpop.f32.mrb[0].mxu0
      %v1338 = vadd.f32 0.0, %v1337
      %v1339 = vpop.f32.mrb[0].mxu0
      %v1340 = vadd.f32 0.0, %v1339
      %1341 = vdwg.mxu0
      %1342 = vmatprep.subr.bf16.mxu0 %v744
      %1343 = vmatpush1.bf16.msra.mxu0 %v743
      %1344 = vmatprep.subr.bf16.mxu0 %v748
      %1345 = vmatpush1.bf16.msra.mxu0 %v747
      %1346 = vmatprep.subr.bf16.mxu0 %v752
      %1347 = vmatpush1.bf16.msra.mxu0 %v751
      %1348 = vmatprep.subr.bf16.mxu0 %v756
      %1349 = vmatpush1.bf16.msra.mxu0 %v755
      %1350 = vmatprep.subr.bf16.mxu0 %v760
      %1351 = vmatpush1.bf16.msra.mxu0 %v759
      %1352 = vmatprep.subr.bf16.mxu0 %v764
      %1353 = vmatpush1.bf16.msra.mxu0 %v763
      %1354 = vmatprep.subr.bf16.mxu0 %v768
      %1355 = vmatpush1.bf16.msra.mxu0 %v767
      %1356 = vmatprep.subr.bf16.mxu0 %v772
      %1357 = vmatpush1.bf16.msra.mxu0 %v771
      %1358 = vmatprep.subr.bf16.mxu0 0
      %1359 = vmatpush1.bf16.msra.mxu0 0
      %1360 = vmatprep.subr.bf16.mxu0 0
      %1361 = vmatpush1.bf16.msra.mxu0 0
      %1362 = vmatprep.subr.bf16.mxu0 0
      %1363 = vmatpush1.bf16.msra.mxu0 0
      %1364 = vmatprep.subr.bf16.mxu0 0
      %1365 = vmatpush1.bf16.msra.mxu0 0
      %1366 = vmatprep.subr.bf16.mxu0 0
      %1367 = vmatpush1.bf16.msra.mxu0 0
      %1368 = vmatprep.subr.bf16.mxu0 0
      %1369 = vmatpush1.bf16.msra.mxu0 0
      %1370 = vmatprep.subr.bf16.mxu0 0
      %1371 = vmatpush1.bf16.msra.mxu0 0
      %1372 = vmatprep.subr.bf16.mxu0 0
      %1373 = vmatpush1.bf16.msra.mxu0 0
      %1374 = vmatprep.mubr.bf16.mxu0 0
      %1375 = vmatmul.mubr.bf16.gmra.mrb[0].mxu0 %v1298
      %v1376 = vpop.f32.mrb[0].mxu0
      %v1377 = vadd.f32 0.0, %v1376
      %v1378 = vpop.f32.mrb[0].mxu0
      %v1379 = vadd.f32 0.0, %v1378
      %v1380 = vpop.f32.mrb[0].mxu0
      %v1381 = vadd.f32 0.0, %v1380
      %v1382 = vpop.f32.mrb[0].mxu0
      %v1383 = vadd.f32 0.0, %v1382
      %1384 = vdwg.mxu0
      %v1385 = vadd.f32 %v1290, %v1334
      %v1386 = vadd.f32 %v1291, %v1336
      %v1387 = vadd.f32 %v1292, %v1377
      %v1388 = vadd.f32 %v1293, %v1379
      %v1389 = vadd.f32 %v1294, %v1338
      %v1390 = vadd.f32 %v1295, %v1340
      %v1391 = vadd.f32 %v1296, %v1381
      %v1392 = vadd.f32 %v1297, %v1383
      %v1393 = vxor.u32 %v1385, 2147483648
      %v1394 = vxor.u32 %v1389, 2147483648
      %v1395 = vmul.f32 %v1393, 1.442695
      %v1396 = vpow.pop %v1395
      %v1397 = vmul.f32 %v1394, 1.442695
      %v1398 = vpow.pop %v1397
      %v1399 = vadd.f32 %v1396, 1.0
      %v1400 = vadd.f32 %v1398, 1.0
      %v1401 = vrcp.pop %v1399
      %v1402 = vmul.f32 1.0, %v1401
      %v1403 = vrcp.pop %v1400
      %v1404 = vmul.f32 1.0, %v1403
      %v1405 = vxor.u32 %v1386, 2147483648
      %v1406 = vxor.u32 %v1390, 2147483648
      %v1407 = vmul.f32 %v1405, 1.442695
      %v1408 = vpow.pop %v1407
      %v1409 = vmul.f32 %v1406, 1.442695
      %v1410 = vpow.pop %v1409
      %v1411 = vadd.f32 %v1408, 1.0
      %v1412 = vadd.f32 %v1410, 1.0
      %v1413 = vrcp.pop %v1411
      %v1414 = vmul.f32 1.0, %v1413
      %v1415 = vrcp.pop %v1412
      %v1416 = vmul.f32 1.0, %v1415
      %v1417 = vtanh.pop %v1387
      %v1418 = vtanh.pop %v1391
      %v1419 = vxor.u32 %v1388, 2147483648
      %v1420 = vxor.u32 %v1392, 2147483648
      %v1421 = vmul.f32 %v1419, 1.442695
      %v1422 = vpow.pop %v1421
      %v1423 = vmul.f32 %v1420, 1.442695
      %v1424 = vpow.pop %v1423
      %v1425 = vadd.f32 %v1422, 1.0
      %v1426 = vadd.f32 %v1424, 1.0
      %v1427 = vrcp.pop %v1425
      %v1428 = vmul.f32 1.0, %v1427
      %v1429 = vrcp.pop %v1426
      %v1430 = vmul.f32 1.0, %v1429
      %v1431 = vmul.f32 %v1414, %v1285
      %v1432 = vmul.f32 %v1416, %v1286
      %v1433 = vmul.f32 %v1402, %v1417
      %v1434 = vmul.f32 %v1404, %v1418
      %v1435 = vadd.f32 %v1431, %v1433
      %v1436 = vadd.f32 %v1432, %v1434
      %v1437 = vtanh.pop %v1435
      %v1438 = vtanh.pop %v1436
      %v1439 = vmul.f32 %v1428, %v1437
      %v1440 = vmul.f32 %v1430, %v1438
      %1441 = vst [vmem:[#allocation2] sm:$0xff] %v1439
      %1442 = vst [vmem:[#allocation2 + $0x8] sm:$0xff] %v1440
      %1443 = vst [vmem:[#allocation3] sm:$0xff] %v1435
      %1444 = vst [vmem:[#allocation3 + $0x8] sm:$0xff] %v1436
      %s1445 = scalar_lea.vmem [#allocation5], 48
      %1446 = vst [vmem:[%s1445] sm:$0xff] %v1439
      %1447 = vst [vmem:[%s1445 + $0x8] sm:$0xff] %v1440
      %v1448 = vld [vmem:[#allocation5] sm:$0xff]
      %v1449 = vld [vmem:[#allocation5 + $0x8] sm:$0xff]
      %v1450 = vld [vmem:[#allocation5 + $0x10] sm:$0xff]
      %v1451 = vld [vmem:[#allocation5 + $0x18] sm:$0xff]
      %v1452 = vld [vmem:[#allocation5 + $0x20] sm:$0xff]
      %v1453 = vld [vmem:[#allocation5 + $0x28] sm:$0xff]
      %v1454 = vld [vmem:[#allocation5 + $0x30] sm:$0xff]
      %v1455 = vld [vmem:[#allocation5 + $0x38] sm:$0xff]
      %v1456 = vpack.c.bf16 %v1449, %v1448
      %v1457 = vpack.c.bf16 %v1451, %v1450
      %v1458 = vpack.c.bf16 %v1453, %v1452
      %v1459 = vpack.c.bf16 %v1455, %v1454
      %v1460 = vld [vmem:[%s4] sm:$0xf]
      %v1461 = vld [vmem:[%s4 + $0x4] sm:$0xf]
      %v1462 = vld [vmem:[%s4 + $0x8] sm:$0xf]
      %v1463 = vld [vmem:[%s4 + $0xc] sm:$0xf]
      %v1464 = vld [vmem:[%s4 + $0x10] sm:$0xf]
      %v1465 = vld [vmem:[%s4 + $0x14] sm:$0xf]
      %v1466 = vld [vmem:[%s4 + $0x18] sm:$0xf]
      %v1467 = vld [vmem:[%s4 + $0x1c] sm:$0xf]
      %v1468 = vld [vmem:[%s4 + $0x20] sm:$0xf]
      %v1469 = vld [vmem:[%s4 + $0x24] sm:$0xf]
      %v1470 = vld [vmem:[%s4 + $0x28] sm:$0xf]
      %v1471 = vld [vmem:[%s4 + $0x2c] sm:$0xf]
      %v1472 = vld [vmem:[%s4 + $0x30] sm:$0xf]
      %v1473 = vld [vmem:[%s4 + $0x34] sm:$0xf]
      %v1474 = vld [vmem:[%s4 + $0x38] sm:$0xf]
      %v1475 = vld [vmem:[%s4 + $0x3c] sm:$0xf]
      %v1476 = vld [vmem:[%s5] sm:$0x1]
      %v1478 = vlaneseq
      %v1479 = vshrl.u32 %v1478, 7
      %v1480 = vsub.s32 0, %v1479
      %v1481 = vrot.slane %v1476, %v1480
      %v1499 = vunpack.c.l.b16 %v1460
      %v1500 = vunpack.c.l.b16 %v1461
      %v1501 = vunpack.c.l.b16 %v1462
      %v1502 = vunpack.c.l.b16 %v1463
      %v1503 = vunpack.c.l.b16 %v1464
      %v1504 = vunpack.c.l.b16 %v1465
      %v1505 = vunpack.c.l.b16 %v1466
      %v1506 = vunpack.c.l.b16 %v1467
      %v1507 = vunpack.c.l.b16 %v1468
      %v1508 = vunpack.c.l.b16 %v1469
      %v1509 = vunpack.c.l.b16 %v1470
      %v1510 = vunpack.c.l.b16 %v1471
      %v1511 = vunpack.c.l.b16 %v1472
      %v1512 = vunpack.c.l.b16 %v1473
      %v1513 = vunpack.c.l.b16 %v1474
      %v1514 = vunpack.c.l.b16 %v1475
      %v1515 = vpack.c.b16 %v1500, %v1499
      %v1516 = vpack.c.b16 %v1502, %v1501
      %v1517 = vpack.c.b16 %v1504, %v1503
      %v1518 = vpack.c.b16 %v1506, %v1505
      %v1519 = vpack.c.b16 %v1508, %v1507
      %v1520 = vpack.c.b16 %v1510, %v1509
      %v1521 = vpack.c.b16 %v1512, %v1511
      %v1522 = vpack.c.b16 %v1514, %v1513
      %1531 = vmatprep.subr.bf16.mxu0 0
      %1532 = vmatpush1.bf16.msra.mxu0 %v1515
      %1533 = vmatprep.subr.bf16.mxu0 0
      %1534 = vmatpush1.bf16.msra.mxu0 %v1516
      %1535 = vmatprep.subr.bf16.mxu0 0
      %1536 = vmatpush1.bf16.msra.mxu0 %v1517
      %1537 = vmatprep.subr.bf16.mxu0 0
      %1538 = vmatpush1.bf16.msra.mxu0 %v1518
      %1539 = vmatprep.subr.bf16.mxu0 0
      %1540 = vmatpush1.bf16.msra.mxu0 %v1519
      %1541 = vmatprep.subr.bf16.mxu0 0
      %1542 = vmatpush1.bf16.msra.mxu0 %v1520
      %1543 = vmatprep.subr.bf16.mxu0 0
      %1544 = vmatpush1.bf16.msra.mxu0 %v1521
      %1545 = vmatprep.subr.bf16.mxu0 0
      %1546 = vmatpush1.bf16.msra.mxu0 %v1522
      %1547 = vmatprep.subr.bf16.mxu0 0
      %1548 = vmatpush1.bf16.msra.mxu0 0
      %1549 = vmatprep.subr.bf16.mxu0 0
      %1550 = vmatpush1.bf16.msra.mxu0 0
      %1551 = vmatprep.subr.bf16.mxu0 0
      %1552 = vmatpush1.bf16.msra.mxu0 0
      %1553 = vmatprep.subr.bf16.mxu0 0
      %1554 = vmatpush1.bf16.msra.mxu0 0
      %1555 = vmatprep.subr.bf16.mxu0 0
      %1556 = vmatpush1.bf16.msra.mxu0 0
      %1557 = vmatprep.subr.bf16.mxu0 0
      %1558 = vmatpush1.bf16.msra.mxu0 0
      %1559 = vmatprep.subr.bf16.mxu0 0
      %1560 = vmatpush1.bf16.msra.mxu0 0
      %1561 = vmatprep.subr.bf16.mxu0 0
      %1562 = vmatpush1.bf16.msra.mxu0 0
      %1563 = vmatprep.mubr.bf16.mxu0 0
      %1564 = vmatmul.mubr.bf16.gmra.mrb[0].mxu0 %v1456
      %v1565 = vpop.f32.mrb[0].mxu0
      %v1566 = vadd.f32 %v1481, %v1565
      %v1567 = vpop.f32.mrb[0].mxu0
      %v1568 = vpop.f32.mrb[0].mxu0
      %v1569 = vadd.f32 %v1481, %v1568
      %v1570 = vpop.f32.mrb[0].mxu0
      %1571 = vmatprep.mubr.bf16.mxu0 0
      %1572 = vmatmul.mubr.bf16.gmra.mrb[0].mxu0 %v1457
      %v1573 = vpop.f32.mrb[0].mxu0
      %v1574 = vadd.f32 %v1481, %v1573
      %v1575 = vpop.f32.mrb[0].mxu0
      %v1576 = vpop.f32.mrb[0].mxu0
      %v1577 = vadd.f32 %v1481, %v1576
      %v1578 = vpop.f32.mrb[0].mxu0
      %1579 = vmatprep.mubr.bf16.mxu0 0
      %1580 = vmatmul.mubr.bf16.gmra.mrb[0].mxu0 %v1458
      %v1581 = vpop.f32.mrb[0].mxu0
      %v1582 = vadd.f32 %v1481, %v1581
      %v1583 = vpop.f32.mrb[0].mxu0
      %v1584 = vpop.f32.mrb[0].mxu0
      %v1585 = vadd.f32 %v1481, %v1584
      %v1586 = vpop.f32.mrb[0].mxu0
      %1587 = vmatprep.mubr.bf16.mxu0 0
      %1588 = vmatmul.mubr.bf16.gmra.mrb[0].mxu0 %v1459
      %v1589 = vpop.f32.mrb[0].mxu0
      %v1590 = vadd.f32 %v1481, %v1589
      %v1591 = vpop.f32.mrb[0].mxu0
      %v1592 = vpop.f32.mrb[0].mxu0
      %v1593 = vadd.f32 %v1481, %v1592
      %v1594 = vpop.f32.mrb[0].mxu0
      %1595 = vdwg.mxu0
      %1596 = vst [vmem:[%s296] sm:$0xff] %v1566
      %1597 = vst [vmem:[%s296 + $0x8] sm:$0xff] %v1569
      %1598 = vst [vmem:[%s296 + $0x10] sm:$0xff] %v1574
      %1599 = vst [vmem:[%s296 + $0x18] sm:$0xff] %v1577
      %1600 = vst [vmem:[%s296 + $0x20] sm:$0xff] %v1582
      %1601 = vst [vmem:[%s296 + $0x28] sm:$0xff] %v1585
      %1602 = vst [vmem:[%s296 + $0x30] sm:$0xff] %v1590
      %1603 = vst [vmem:[%s296 + $0x38] sm:$0xff] %v1593
      %s1604 = smul.u32 4, %s22
      %s1605 = smul.u32 2, %s21
      %p1606 = scmp.lt.s32.totalorder %s1604, 7
      %s1607 = scalar_select %p1606, %s1604, 7
      %p1608 = scmp.lt.s32.totalorder %s1605, 1
      %s1609 = scalar_select %p1608, %s1605, 1
      %s1610 = smul.addr %s1607, 2
      %s1611 = sadd.s32 %s1609, %s1610
      %s1612 = smul.addr %s1611, 8
      %s1613 = scalar_lea.vmem %s6, %s1612
      // Predicated region
      $region49: #{finetuner_forward.3} parent=43 // pred_check
        %p1614 = pneg %p182
      $region50: #{finetuner_forward.3} parent=43 // pred_check_branch
        %1616 = sbr.rel (%p1614) target = $region52
      $region51: #{finetuner_forward.3} parent=43 // pred_region
        %s1617 = smul.u32 4, %s22
        %s1618 = smul.u32 2, %s21
      $region52: #{finetuner_forward.3} parent=43 // pred_fallthru
        _
    $region44: #{finetuner_forward.3} parent=5 // pred_fallthru
      _
    %p1619 = scmp.le.s32.totalorder 2, %s12
    // Predicated region
    $region53: #{finetuner_forward.3} parent=5 // pred_check
      %p1620 = pneg %p1619
    $region54: #{finetuner_forward.3} parent=5 // pred_check_branch
      %1622 = sbr.rel (%p1620) target = $region56
    $region55: #{finetuner_forward.3} parent=5 // pred_region
      %s1623 = ssub.s32 %s12, 2
      // Predicated region
      $region57: #{finetuner_forward.3} parent=55 // pred_check
        %p1624 = pneg %p188
      $region58: #{finetuner_forward.3} parent=55 // pred_check_branch
        %1626 = sbr.rel (%p1624) target = $region60
      $region59: #{finetuner_forward.3} parent=55 // pred_region
        %s1627 = smul.u32 4, %s24
        %s1628 = smul.u32 2, %s23
        %p1629 = scmp.lt.s32.totalorder %s1627, 7
        %s1630 = scalar_select %p1629, %s1627, 7
        %p1631 = scmp.lt.s32.totalorder %s1628, 1
        %s1632 = scalar_select %p1631, %s1628, 1
        %s1633 = smul.addr %s1630, 2
        %s1634 = sadd.s32 %s1632, %s1633
        %s1635 = smul.addr %s1634, 8
        %s1636 = scalar_lea.vmem %s6, %s1635
      $region60: #{finetuner_forward.3} parent=55 // pred_fallthru
        _
    $region56: #{finetuner_forward.3} parent=5 // pred_fallthru
      _
  $region6: #{finetuner_forward.3} parent=0 // loop_footer
    %s16 = sadd.s32 1, %s12
  $region7: #{finetuner_forward.3} parent=0 // loop_footer_branch
    %11 = sbr.rel target = $region3
  $region8: #{finetuner_forward.3} parent=0 // loop_exit
    _

</llo_original>
